<compile_context>
chip_gen: v7x
topology: tpu7x:2x2x1
jax: 0.10.0
libtpu: 0.0.40
codegen_flags: <defaults>
</compile_context>

<pallas_src>
import functools

import jax
import jax.numpy as jnp
from jax.experimental import pallas as pl

# ---- small BERT-like config (synthetic, deterministic init) ----
VOCAB = 100        # id 0 is the PAD token (mask = x > 0)
MAX_POS = 64
HIDDEN = 32
N_LAYERS = 2
N_HEADS = 4
HEAD_DIM = HIDDEN // N_HEADS
INTER = 64
LN_EPS = 1e-12


# ----------------------------- in-kernel helpers ----------------------------
def _layernorm(x, g, b):
    """LayerNorm over the last dim, f32 math. g/b are [1, H]."""
    mu = jnp.mean(x, axis=-1, keepdims=True)
    xc = x - mu
    var = jnp.mean(xc * xc, axis=-1, keepdims=True)
    return xc * jax.lax.rsqrt(var + LN_EPS) * g + b


def _gelu(x):
    # TODO(synk): pytorch_pretrained_bert uses erf-based gelu; tanh approximation
    # used here (stays on the EUP path, numerically very close).
    c = 0.7978845608028654  # sqrt(2/pi)
    return 0.5 * x * (1.0 + jnp.tanh(c * (x + 0.044715 * x * x * x)))


# ------------------------------- fused kernel -------------------------------
def _bert_kernel(B, S,
                 emb_ref, bias_ref, eg_ref, eb_ref,
                 wqkv_ref, bqkv_ref, wo_ref, bo_ref, g1_ref, b1_ref,
                 wi_ref, bi_ref, wo2_ref, bo2_ref, g2_ref, b2_ref,
                 out_ref):
    """Embedding LayerNorm + all N_LAYERS encoder layers, fully unrolled."""
    NH, HD = N_HEADS, HEAD_DIM
    BN = B * NH
    bf16 = jnp.bfloat16

    # Embedding LayerNorm initializes the hidden state as a value (no VMEM
    # store->load round trip).
    h = _layernorm(emb_ref[...], eg_ref[...], eb_ref[...])          # [B*S, H] f32

    # Additive pad bias, materialized once per call as [B*NH, 1, S].
    bias_n = jnp.broadcast_to(bias_ref[...][:, None, None, :],
                              (B, NH, 1, S)).reshape(BN, 1, S)

    for l in range(N_LAYERS):   # static unroll; weights indexed statically
        # ---- fused QKV projection (1/sqrt(d) pre-folded into wq/bq) ----
        qkv = jnp.dot(h.astype(bf16), wqkv_ref[l],
                      preferred_element_type=jnp.float32) + bqkv_ref[l]   # [B*S, 3H]

        # One head-major swap puts all of Q/K/V heads on a leading batch axis.
        # columns of wqkv are [Q heads | K heads | V heads], each head-major,
        # so group index g = col // HD gives Q:0..NH-1, K:NH..2NH-1, V:2NH..3NH-1.
        qkv = jnp.swapaxes(qkv.reshape(B, S, 3 * NH, HD), 1, 2)     # [B, 3NH, S, HD]
        q = qkv[:, 0:NH].reshape(BN, S, HD)
        k = qkv[:, NH:2 * NH].reshape(BN, S, HD)
        v = qkv[:, 2 * NH:3 * NH].reshape(BN, S, HD)

        # ---- all heads at once: batched score / softmax / context ----
        s = jnp.einsum("nqd,nkd->nqk", q.astype(bf16), k.astype(bf16),
                       preferred_element_type=jnp.float32)          # [BN, S, S]
        s = s + bias_n
        m = jnp.max(s, axis=-1, keepdims=True)
        p = jnp.exp(s - m)
        denom = jnp.sum(p, axis=-1, keepdims=True)                  # [BN, S, 1]
        ctx = jnp.einsum("nqk,nkd->nqd", p.astype(bf16), v.astype(bf16),
                         preferred_element_type=jnp.float32)        # [BN, S, HD]
        # deferred (flash-style) normalization: scale the context, not p.
        ctx = ctx * pl.reciprocal(denom, approx=True)
        ctx = jnp.swapaxes(ctx.reshape(B, NH, S, HD), 1, 2).reshape(B * S, HIDDEN)

        # ---- attention output projection + residual LayerNorm ----
        attn = jnp.dot(ctx.astype(bf16), wo_ref[l],
                       preferred_element_type=jnp.float32) + bo_ref[l]
        h1 = _layernorm(attn + h, g1_ref[l], b1_ref[l])

        # ---- feed-forward + residual LayerNorm ----
        inter = jnp.dot(h1.astype(bf16), wi_ref[l],
                        preferred_element_type=jnp.float32) + bi_ref[l]
        ffn = jnp.dot(_gelu(inter).astype(bf16), wo2_ref[l],
                      preferred_element_type=jnp.float32) + bo2_ref[l]
        h = _layernorm(ffn + h1, g2_ref[l], b2_ref[l])

    out_ref[...] = h            # single store at the very end


def _run_encoder(emb2d, bias, packed, B, S):
    # No grid: one kernel invocation, every operand whole-array resident in
    # VMEM (weights total ~20 KB here).  At production sizes reintroduce a
    # tiled grid + vmem_limit_bytes (see TODO at top of file).
    return pl.pallas_call(
        functools.partial(_bert_kernel, B, S),
        out_shape=jax.ShapeDtypeStruct((B * S, HIDDEN), jnp.float32),
    )(emb2d, bias,
      packed["emb_ln_g"], packed["emb_ln_b"],
      packed["wqkv"], packed["bqkv"],
      packed["wo"], packed["bo"], packed["ln1_g"], packed["ln1_b"],
      packed["wi"], packed["bi"],
      packed["wo2"], packed["bo2"], packed["ln2_g"], packed["ln2_b"])


# ----------------------------- parameter init ------------------------------
def init_params(key):
    def nrm(k, shape):
        return 0.02 * jax.random.normal(k, shape, dtype=jnp.float32)

    keys = jax.random.split(key, 3 + N_LAYERS)
    params = {
        "word_emb": nrm(keys[0], (VOCAB, HIDDEN)),
        "pos_emb": nrm(keys[1], (MAX_POS, HIDDEN)),
        "type_emb": nrm(keys[2], (2, HIDDEN)),
        "emb_ln_g": jnp.ones((HIDDEN,), jnp.float32),
        "emb_ln_b": jnp.zeros((HIDDEN,), jnp.float32),
        "layers": [],
    }
    for l in range(N_LAYERS):
        lk = jax.random.split(keys[3 + l], 6)
        params["layers"].append({
            "wq": nrm(lk[0], (HIDDEN, HIDDEN)), "bq": jnp.zeros((HIDDEN,), jnp.float32),
            "wk": nrm(lk[1], (HIDDEN, HIDDEN)), "bk": jnp.zeros((HIDDEN,), jnp.float32),
            "wv": nrm(lk[2], (HIDDEN, HIDDEN)), "bv": jnp.zeros((HIDDEN,), jnp.float32),
            "wo": nrm(lk[3], (HIDDEN, HIDDEN)), "bo": jnp.zeros((HIDDEN,), jnp.float32),
            "wi": nrm(lk[4], (HIDDEN, INTER)),  "bi": jnp.zeros((INTER,), jnp.float32),
            "wo2": nrm(lk[5], (INTER, HIDDEN)), "bo2": jnp.zeros((HIDDEN,), jnp.float32),
            "ln1_g": jnp.ones((HIDDEN,), jnp.float32), "ln1_b": jnp.zeros((HIDDEN,), jnp.float32),
            "ln2_g": jnp.ones((HIDDEN,), jnp.float32), "ln2_b": jnp.zeros((HIDDEN,), jnp.float32),
        })
    return params


def pack_params(params):
    """Stack per-layer weights, fuse QKV (head-major columns), fold 1/sqrt(d)
    into wq/bq, cast MXU weights to bf16 (f32 accumulation in-kernel)."""
    scale = 1.0 / (HEAD_DIM ** 0.5)
    layers = params["layers"]

    def stack(fn, dtype=jnp.float32):
        return jnp.stack([fn(p) for p in layers], axis=0).astype(dtype)

    return {
        "word_emb": params["word_emb"],
        "pos_emb": params["pos_emb"],
        "type_emb": params["type_emb"],
        "emb_ln_g": params["emb_ln_g"].reshape(1, HIDDEN),
        "emb_ln_b": params["emb_ln_b"].reshape(1, HIDDEN),
        "wqkv": stack(lambda p: jnp.concatenate(
            [p["wq"] * scale, p["wk"], p["wv"]], axis=1), jnp.bfloat16),
        "bqkv": stack(lambda p: jnp.concatenate(
            [p["bq"] * scale, p["bk"], p["bv"]], axis=0)[None, :]),
        "wo":  stack(lambda p: p["wo"], jnp.bfloat16),
        "bo":  stack(lambda p: p["bo"][None, :]),
        "ln1_g": stack(lambda p: p["ln1_g"][None, :]),
        "ln1_b": stack(lambda p: p["ln1_b"][None, :]),
        "wi":  stack(lambda p: p["wi"], jnp.bfloat16),
        "bi":  stack(lambda p: p["bi"][None, :]),
        "wo2": stack(lambda p: p["wo2"], jnp.bfloat16),
        "bo2": stack(lambda p: p["bo2"][None, :]),
        "ln2_g": stack(lambda p: p["ln2_g"][None, :]),
        "ln2_b": stack(lambda p: p["ln2_b"][None, :]),
    }


# ------------------------------- forward -----------------------------------
def wrapped_bert_forward(packed, x):
    """x: i32[Batch, Seq] -> (f32[Batch, Seq, Hidden], i32[Batch, Seq])."""
    B, S = x.shape
    assert S <= MAX_POS and HIDDEN % N_HEADS == 0

    mask = (x > 0).astype(jnp.int32)                        # WrappedBERT: mask = x > 0

    # Embedding gather (word + position + token_type 0) is plain-JAX glue.
    pos = jnp.arange(S)
    emb = (jnp.take(packed["word_emb"], x, axis=0)
           + packed["pos_emb"][pos][None, :, :]
           + packed["type_emb"][0][None, None, :])
    emb2d = emb.reshape(B * S, HIDDEN)

    # Additive attention bias (pytorch_pretrained_bert convention: -10000 on pad).
    bias = (1.0 - mask.astype(jnp.float32)) * -10000.0      # [B, S]

    out2d = _run_encoder(emb2d, bias, packed, B, S)
    return out2d.reshape(B, S, HIDDEN), mask


# --------------------------------- main -------------------------------------
if __name__ == "__main__":
    key = jax.random.PRNGKey(0)
    pkey, xkey = jax.random.split(key)
    packed = pack_params(init_params(pkey))

    B, S = 2, 8
    x = jax.random.randint(xkey, (B, S), minval=1, maxval=VOCAB, dtype=jnp.int32)
    x = x.at[:, 6:].set(0)  # trailing PAD tokens -> masked

    fwd = jax.jit(wrapped_bert_forward)
    emb, mask = fwd(packed, x)
    jax.block_until_ready(emb)
    jax.block_until_ready(mask)

    assert emb.shape == (B, S, HIDDEN) and emb.dtype == jnp.float32
    assert mask.shape == (B, S)
    assert bool(jnp.all(jnp.isfinite(emb)))
    assert bool(jnp.all(mask[:, 6:] == 0)) and bool(jnp.all(mask[:, :6] == 1))
    print("KERNEL_OK")
</pallas_src>

<mosaic_0001>
module attributes {stable_mosaic.version = 11 : i64} {
  func.func @_bert_kernel(%arg0: memref<16x32xf32, #tpu.memory_space<vmem>>, %arg1: memref<2x8xf32, #tpu.memory_space<vmem>>, %arg2: memref<1x32xf32, #tpu.memory_space<vmem>>, %arg3: memref<1x32xf32, #tpu.memory_space<vmem>>, %arg4: memref<2x32x96xbf16, #tpu.memory_space<vmem>>, %arg5: memref<2x1x96xf32, #tpu.memory_space<vmem>>, %arg6: memref<2x32x32xbf16, #tpu.memory_space<vmem>>, %arg7: memref<2x1x32xf32, #tpu.memory_space<vmem>>, %arg8: memref<2x1x32xf32, #tpu.memory_space<vmem>>, %arg9: memref<2x1x32xf32, #tpu.memory_space<vmem>>, %arg10: memref<2x32x64xbf16, #tpu.memory_space<vmem>>, %arg11: memref<2x1x64xf32, #tpu.memory_space<vmem>>, %arg12: memref<2x64x32xbf16, #tpu.memory_space<vmem>>, %arg13: memref<2x1x32xf32, #tpu.memory_space<vmem>>, %arg14: memref<2x1x32xf32, #tpu.memory_space<vmem>>, %arg15: memref<2x1x32xf32, #tpu.memory_space<vmem>>, %arg16: memref<16x32xf32, #tpu.memory_space<vmem>>) attributes {dimension_semantics = [], scalar_prefetch = 0 : i64, scratch_operands = 0 : i64, tpu.core_type = #tpu.core_type<tc>} {
    %c0 = arith.constant 0 : index
    %c0_0 = arith.constant 0 : index
    %0 = vector.load %arg0[%c0, %c0_0] : memref<16x32xf32, #tpu.memory_space<vmem>>, vector<16x32xf32>
    %c0_1 = arith.constant 0 : index
    %c0_2 = arith.constant 0 : index
    %1 = vector.load %arg2[%c0_1, %c0_2] : memref<1x32xf32, #tpu.memory_space<vmem>>, vector<1x32xf32>
    %c0_3 = arith.constant 0 : index
    %c0_4 = arith.constant 0 : index
    %2 = vector.load %arg3[%c0_3, %c0_4] : memref<1x32xf32, #tpu.memory_space<vmem>>, vector<1x32xf32>
    %cst = arith.constant dense<0.000000e+00> : vector<16xf32>
    %3 = vector.multi_reduction <add>, %0, %cst [1] : vector<16x32xf32> to vector<16xf32>
    %4 = vector.shape_cast %3 : vector<16xf32> to vector<16x1xf32>
    %cst_5 = arith.constant 3.200000e+01 : f32
    %5 = vector.broadcast %cst_5 : f32 to vector<16x1xf32>
    %6 = arith.divf %4, %5 : vector<16x1xf32>
    %7 = vector.broadcast %6 : vector<16x1xf32> to vector<16x32xf32>
    %8 = arith.subf %0, %7 : vector<16x32xf32>
    %9 = arith.mulf %8, %8 : vector<16x32xf32>
    %cst_6 = arith.constant dense<0.000000e+00> : vector<16xf32>
    %10 = vector.multi_reduction <add>, %9, %cst_6 [1] : vector<16x32xf32> to vector<16xf32>
    %11 = vector.shape_cast %10 : vector<16xf32> to vector<16x1xf32>
    %cst_7 = arith.constant 3.200000e+01 : f32
    %12 = vector.broadcast %cst_7 : f32 to vector<16x1xf32>
    %13 = arith.divf %11, %12 : vector<16x1xf32>
    %cst_8 = arith.constant 9.99999996E-13 : f32
    %14 = vector.broadcast %cst_8 : f32 to vector<16x1xf32>
    %15 = arith.addf %13, %14 : vector<16x1xf32>
    %16 = math.rsqrt %15 : vector<16x1xf32>
    %17 = vector.broadcast %16 : vector<16x1xf32> to vector<16x32xf32>
    %18 = arith.mulf %8, %17 : vector<16x32xf32>
    %19 = vector.broadcast %1 : vector<1x32xf32> to vector<16x32xf32>
    %20 = arith.mulf %18, %19 : vector<16x32xf32>
    %21 = vector.broadcast %2 : vector<1x32xf32> to vector<16x32xf32>
    %22 = arith.addf %20, %21 : vector<16x32xf32>
    %c0_9 = arith.constant 0 : index
    %c0_10 = arith.constant 0 : index
    %23 = vector.load %arg1[%c0_9, %c0_10] : memref<2x8xf32, #tpu.memory_space<vmem>>, vector<2x8xf32>
    %24 = vector.shape_cast %23 : vector<2x8xf32> to vector<2x1x1x8xf32>
    %25 = vector.shape_cast %24 : vector<2x1x1x8xf32> to vector<2x1x1x8xf32>
    %26 = vector.broadcast %25 : vector<2x1x1x8xf32> to vector<2x4x1x8xf32>
    %27 = vector.shape_cast %26 : vector<2x4x1x8xf32> to vector<8x1x8xf32>
    %28 = arith.truncf %22 : vector<16x32xf32> to vector<16x32xbf16>
    %c0_11 = arith.constant 0 : index
    %c0_12 = arith.constant 0 : index
    %c0_13 = arith.constant 0 : index
    %29 = vector.load %arg4[%c0_11, %c0_12, %c0_13] : memref<2x32x96xbf16, #tpu.memory_space<vmem>>, vector<1x32x96xbf16>
    %30 = vector.shape_cast %29 : vector<1x32x96xbf16> to vector<32x96xbf16>
    %cst_14 = arith.constant dense<0.000000e+00> : vector<16x96xf32>
    %31 = tpu.matmul %28, %30, %cst_14 {dimension_numbers = #tpu.dot_dimension_numbers<[1], [0], [0], [1], [0, 0, 1, 1], [], []>} : vector<16x32xbf16>, vector<32x96xbf16>, vector<16x96xf32> -> vector<16x96xf32>
    %c0_15 = arith.constant 0 : index
    %c0_16 = arith.constant 0 : index
    %c0_17 = arith.constant 0 : index
    %32 = vector.load %arg5[%c0_15, %c0_16, %c0_17] : memref<2x1x96xf32, #tpu.memory_space<vmem>>, vector<1x1x96xf32>
    %33 = vector.shape_cast %32 : vector<1x1x96xf32> to vector<1x96xf32>
    %34 = vector.broadcast %33 : vector<1x96xf32> to vector<16x96xf32>
    %35 = arith.addf %31, %34 : vector<16x96xf32>
    %36 = vector.shape_cast %35 : vector<16x96xf32> to vector<2x8x12x8xf32>
    %37 = tpu.transpose %36, [0, 2, 1, 3] : vector<2x8x12x8xf32> -> vector<2x12x8x8xf32>
    %38 = vector.extract_strided_slice %37 {offsets = [0, 0, 0, 0], sizes = [2, 4, 8, 8], strides = [1, 1, 1, 1]} : vector<2x12x8x8xf32> to vector<2x4x8x8xf32>
    %39 = vector.shape_cast %38 : vector<2x4x8x8xf32> to vector<8x8x8xf32>
    %40 = vector.extract_strided_slice %37 {offsets = [0, 4, 0, 0], sizes = [2, 4, 8, 8], strides = [1, 1, 1, 1]} : vector<2x12x8x8xf32> to vector<2x4x8x8xf32>
    %41 = vector.shape_cast %40 : vector<2x4x8x8xf32> to vector<8x8x8xf32>
    %42 = vector.extract_strided_slice %37 {offsets = [0, 8, 0, 0], sizes = [2, 4, 8, 8], strides = [1, 1, 1, 1]} : vector<2x12x8x8xf32> to vector<2x4x8x8xf32>
    %43 = vector.shape_cast %42 : vector<2x4x8x8xf32> to vector<8x8x8xf32>
    %44 = arith.truncf %39 : vector<8x8x8xf32> to vector<8x8x8xbf16>
    %45 = arith.truncf %41 : vector<8x8x8xf32> to vector<8x8x8xbf16>
    "tpu.trace_start"() <{level = 10 : i32, message = "nqd,nkd->nqk"}> : () -> ()
    %cst_18 = arith.constant dense<0.000000e+00> : vector<8x8x8xf32>
    %46 = tpu.matmul %44, %45, %cst_18 {dimension_numbers = #tpu.dot_dimension_numbers<[2], [2], [1], [1], [0, 0, 0, 1, 1, 1], [0], [0]>} : vector<8x8x8xbf16>, vector<8x8x8xbf16>, vector<8x8x8xf32> -> vector<8x8x8xf32>
    "tpu.trace_stop"() : () -> ()
    %47 = vector.broadcast %27 : vector<8x1x8xf32> to vector<8x8x8xf32>
    %48 = arith.addf %46, %47 : vector<8x8x8xf32>
    %cst_19 = arith.constant dense<0xFF800000> : vector<8x8xf32>
    %49 = vector.multi_reduction <maximumf>, %48, %cst_19 [2] : vector<8x8x8xf32> to vector<8x8xf32>
    %50 = vector.shape_cast %49 : vector<8x8xf32> to vector<8x8x1xf32>
    %51 = vector.broadcast %50 : vector<8x8x1xf32> to vector<8x8x8xf32>
    %52 = arith.subf %48, %51 : vector<8x8x8xf32>
    %53 = math.exp %52 : vector<8x8x8xf32>
    %cst_20 = arith.constant dense<0.000000e+00> : vector<8x8xf32>
    %54 = vector.multi_reduction <add>, %53, %cst_20 [2] : vector<8x8x8xf32> to vector<8x8xf32>
    %55 = vector.shape_cast %54 : vector<8x8xf32> to vector<8x8x1xf32>
    %56 = arith.truncf %53 : vector<8x8x8xf32> to vector<8x8x8xbf16>
    %57 = arith.truncf %43 : vector<8x8x8xf32> to vector<8x8x8xbf16>
    "tpu.trace_start"() <{level = 10 : i32, message = "nqk,nkd->nqd"}> : () -> ()
    %cst_21 = arith.constant dense<0.000000e+00> : vector<8x8x8xf32>
    %58 = tpu.matmul %56, %57, %cst_21 {dimension_numbers = #tpu.dot_dimension_numbers<[2], [1], [1], [2], [0, 0, 0, 1, 1, 2], [0], [0]>} : vector<8x8x8xbf16>, vector<8x8x8xbf16>, vector<8x8x8xf32> -> vector<8x8x8xf32>
    "tpu.trace_stop"() : () -> ()
    %59 = tpu.reciprocal %55 {approx = true} : vector<8x8x1xf32> -> vector<8x8x1xf32>
    %60 = vector.broadcast %59 : vector<8x8x1xf32> to vector<8x8x8xf32>
    %61 = arith.mulf %58, %60 : vector<8x8x8xf32>
    %62 = vector.shape_cast %61 : vector<8x8x8xf32> to vector<2x4x8x8xf32>
    %63 = tpu.transpose %62, [0, 2, 1, 3] : vector<2x4x8x8xf32> -> vector<2x8x4x8xf32>
    %64 = vector.shape_cast %63 : vector<2x8x4x8xf32> to vector<16x32xf32>
    %65 = arith.truncf %64 : vector<16x32xf32> to vector<16x32xbf16>
    %c0_22 = arith.constant 0 : index
    %c0_23 = arith.constant 0 : index
    %c0_24 = arith.constant 0 : index
    %66 = vector.load %arg6[%c0_22, %c0_23, %c0_24] : memref<2x32x32xbf16, #tpu.memory_space<vmem>>, vector<1x32x32xbf16>
    %67 = vector.shape_cast %66 : vector<1x32x32xbf16> to vector<32x32xbf16>
    %cst_25 = arith.constant dense<0.000000e+00> : vector<16x32xf32>
    %68 = tpu.matmul %65, %67, %cst_25 {dimension_numbers = #tpu.dot_dimension_numbers<[1], [0], [0], [1], [0, 0, 1, 1], [], []>} : vector<16x32xbf16>, vector<32x32xbf16>, vector<16x32xf32> -> vector<16x32xf32>
    %c0_26 = arith.constant 0 : index
    %c0_27 = arith.constant 0 : index
    %c0_28 = arith.constant 0 : index
    %69 = vector.load %arg7[%c0_26, %c0_27, %c0_28] : memref<2x1x32xf32, #tpu.memory_space<vmem>>, vector<1x1x32xf32>
    %70 = vector.shape_cast %69 : vector<1x1x32xf32> to vector<1x32xf32>
    %71 = vector.broadcast %70 : vector<1x32xf32> to vector<16x32xf32>
    %72 = arith.addf %68, %71 : vector<16x32xf32>
    %73 = arith.addf %72, %22 : vector<16x32xf32>
    %c0_29 = arith.constant 0 : index
    %c0_30 = arith.constant 0 : index
    %c0_31 = arith.constant 0 : index
    %74 = vector.load %arg8[%c0_29, %c0_30, %c0_31] : memref<2x1x32xf32, #tpu.memory_space<vmem>>, vector<1x1x32xf32>
    %75 = vector.shape_cast %74 : vector<1x1x32xf32> to vector<1x32xf32>
    %c0_32 = arith.constant 0 : index
    %c0_33 = arith.constant 0 : index
    %c0_34 = arith.constant 0 : index
    %76 = vector.load %arg9[%c0_32, %c0_33, %c0_34] : memref<2x1x32xf32, #tpu.memory_space<vmem>>, vector<1x1x32xf32>
    %77 = vector.shape_cast %76 : vector<1x1x32xf32> to vector<1x32xf32>
    %cst_35 = arith.constant dense<0.000000e+00> : vector<16xf32>
    %78 = vector.multi_reduction <add>, %73, %cst_35 [1] : vector<16x32xf32> to vector<16xf32>
    %79 = vector.shape_cast %78 : vector<16xf32> to vector<16x1xf32>
    %cst_36 = arith.constant 3.200000e+01 : f32
    %80 = vector.broadcast %cst_36 : f32 to vector<16x1xf32>
    %81 = arith.divf %79, %80 : vector<16x1xf32>
    %82 = vector.broadcast %81 : vector<16x1xf32> to vector<16x32xf32>
    %83 = arith.subf %73, %82 : vector<16x32xf32>
    %84 = arith.mulf %83, %83 : vector<16x32xf32>
    %cst_37 = arith.constant dense<0.000000e+00> : vector<16xf32>
    %85 = vector.multi_reduction <add>, %84, %cst_37 [1] : vector<16x32xf32> to vector<16xf32>
    %86 = vector.shape_cast %85 : vector<16xf32> to vector<16x1xf32>
    %cst_38 = arith.constant 3.200000e+01 : f32
    %87 = vector.broadcast %cst_38 : f32 to vector<16x1xf32>
    %88 = arith.divf %86, %87 : vector<16x1xf32>
    %cst_39 = arith.constant 9.99999996E-13 : f32
    %89 = vector.broadcast %cst_39 : f32 to vector<16x1xf32>
    %90 = arith.addf %88, %89 : vector<16x1xf32>
    %91 = math.rsqrt %90 : vector<16x1xf32>
    %92 = vector.broadcast %91 : vector<16x1xf32> to vector<16x32xf32>
    %93 = arith.mulf %83, %92 : vector<16x32xf32>
    %94 = vector.broadcast %75 : vector<1x32xf32> to vector<16x32xf32>
    %95 = arith.mulf %93, %94 : vector<16x32xf32>
    %96 = vector.broadcast %77 : vector<1x32xf32> to vector<16x32xf32>
    %97 = arith.addf %95, %96 : vector<16x32xf32>
    %98 = arith.truncf %97 : vector<16x32xf32> to vector<16x32xbf16>
    %c0_40 = arith.constant 0 : index
    %c0_41 = arith.constant 0 : index
    %c0_42 = arith.constant 0 : index
    %99 = vector.load %arg10[%c0_40, %c0_41, %c0_42] : memref<2x32x64xbf16, #tpu.memory_space<vmem>>, vector<1x32x64xbf16>
    %100 = vector.shape_cast %99 : vector<1x32x64xbf16> to vector<32x64xbf16>
    %cst_43 = arith.constant dense<0.000000e+00> : vector<16x64xf32>
    %101 = tpu.matmul %98, %100, %cst_43 {dimension_numbers = #tpu.dot_dimension_numbers<[1], [0], [0], [1], [0, 0, 1, 1], [], []>} : vector<16x32xbf16>, vector<32x64xbf16>, vector<16x64xf32> -> vector<16x64xf32>
    %c0_44 = arith.constant 0 : index
    %c0_45 = arith.constant 0 : index
    %c0_46 = arith.constant 0 : index
    %102 = vector.load %arg11[%c0_44, %c0_45, %c0_46] : memref<2x1x64xf32, #tpu.memory_space<vmem>>, vector<1x1x64xf32>
    %103 = vector.shape_cast %102 : vector<1x1x64xf32> to vector<1x64xf32>
    %104 = vector.broadcast %103 : vector<1x64xf32> to vector<16x64xf32>
    %105 = arith.addf %101, %104 : vector<16x64xf32>
    %cst_47 = arith.constant 5.000000e-01 : f32
    %106 = vector.broadcast %cst_47 : f32 to vector<16x64xf32>
    %107 = arith.mulf %106, %105 : vector<16x64xf32>
    %cst_48 = arith.constant 4.471500e-02 : f32
    %108 = vector.broadcast %cst_48 : f32 to vector<16x64xf32>
    %109 = arith.mulf %108, %105 : vector<16x64xf32>
    %110 = arith.mulf %109, %105 : vector<16x64xf32>
    %111 = arith.mulf %110, %105 : vector<16x64xf32>
    %112 = arith.addf %105, %111 : vector<16x64xf32>
    %cst_49 = arith.constant 0.797884583 : f32
    %113 = vector.broadcast %cst_49 : f32 to vector<16x64xf32>
    %114 = arith.mulf %113, %112 : vector<16x64xf32>
    %115 = math.tanh %114 : vector<16x64xf32>
    %cst_50 = arith.constant 1.000000e+00 : f32
    %116 = vector.broadcast %cst_50 : f32 to vector<16x64xf32>
    %117 = arith.addf %116, %115 : vector<16x64xf32>
    %118 = arith.mulf %107, %117 : vector<16x64xf32>
    %119 = arith.truncf %118 : vector<16x64xf32> to vector<16x64xbf16>
    %c0_51 = arith.constant 0 : index
    %c0_52 = arith.constant 0 : index
    %c0_53 = arith.constant 0 : index
    %120 = vector.load %arg12[%c0_51, %c0_52, %c0_53] : memref<2x64x32xbf16, #tpu.memory_space<vmem>>, vector<1x64x32xbf16>
    %121 = vector.shape_cast %120 : vector<1x64x32xbf16> to vector<64x32xbf16>
    %cst_54 = arith.constant dense<0.000000e+00> : vector<16x32xf32>
    %122 = tpu.matmul %119, %121, %cst_54 {dimension_numbers = #tpu.dot_dimension_numbers<[1], [0], [0], [1], [0, 0, 1, 1], [], []>} : vector<16x64xbf16>, vector<64x32xbf16>, vector<16x32xf32> -> vector<16x32xf32>
    %c0_55 = arith.constant 0 : index
    %c0_56 = arith.constant 0 : index
    %c0_57 = arith.constant 0 : index
    %123 = vector.load %arg13[%c0_55, %c0_56, %c0_57] : memref<2x1x32xf32, #tpu.memory_space<vmem>>, vector<1x1x32xf32>
    %124 = vector.shape_cast %123 : vector<1x1x32xf32> to vector<1x32xf32>
    %125 = vector.broadcast %124 : vector<1x32xf32> to vector<16x32xf32>
    %126 = arith.addf %122, %125 : vector<16x32xf32>
    %127 = arith.addf %126, %97 : vector<16x32xf32>
    %c0_58 = arith.constant 0 : index
    %c0_59 = arith.constant 0 : index
    %c0_60 = arith.constant 0 : index
    %128 = vector.load %arg14[%c0_58, %c0_59, %c0_60] : memref<2x1x32xf32, #tpu.memory_space<vmem>>, vector<1x1x32xf32>
    %129 = vector.shape_cast %128 : vector<1x1x32xf32> to vector<1x32xf32>
    %c0_61 = arith.constant 0 : index
    %c0_62 = arith.constant 0 : index
    %c0_63 = arith.constant 0 : index
    %130 = vector.load %arg15[%c0_61, %c0_62, %c0_63] : memref<2x1x32xf32, #tpu.memory_space<vmem>>, vector<1x1x32xf32>
    %131 = vector.shape_cast %130 : vector<1x1x32xf32> to vector<1x32xf32>
    %cst_64 = arith.constant dense<0.000000e+00> : vector<16xf32>
    %132 = vector.multi_reduction <add>, %127, %cst_64 [1] : vector<16x32xf32> to vector<16xf32>
    %133 = vector.shape_cast %132 : vector<16xf32> to vector<16x1xf32>
    %cst_65 = arith.constant 3.200000e+01 : f32
    %134 = vector.broadcast %cst_65 : f32 to vector<16x1xf32>
    %135 = arith.divf %133, %134 : vector<16x1xf32>
    %136 = vector.broadcast %135 : vector<16x1xf32> to vector<16x32xf32>
    %137 = arith.subf %127, %136 : vector<16x32xf32>
    %138 = arith.mulf %137, %137 : vector<16x32xf32>
    %cst_66 = arith.constant dense<0.000000e+00> : vector<16xf32>
    %139 = vector.multi_reduction <add>, %138, %cst_66 [1] : vector<16x32xf32> to vector<16xf32>
    %140 = vector.shape_cast %139 : vector<16xf32> to vector<16x1xf32>
    %cst_67 = arith.constant 3.200000e+01 : f32
    %141 = vector.broadcast %cst_67 : f32 to vector<16x1xf32>
    %142 = arith.divf %140, %141 : vector<16x1xf32>
    %cst_68 = arith.constant 9.99999996E-13 : f32
    %143 = vector.broadcast %cst_68 : f32 to vector<16x1xf32>
    %144 = arith.addf %142, %143 : vector<16x1xf32>
    %145 = math.rsqrt %144 : vector<16x1xf32>
    %146 = vector.broadcast %145 : vector<16x1xf32> to vector<16x32xf32>
    %147 = arith.mulf %137, %146 : vector<16x32xf32>
    %148 = vector.broadcast %129 : vector<1x32xf32> to vector<16x32xf32>
    %149 = arith.mulf %147, %148 : vector<16x32xf32>
    %150 = vector.broadcast %131 : vector<1x32xf32> to vector<16x32xf32>
    %151 = arith.addf %149, %150 : vector<16x32xf32>
    %152 = arith.truncf %151 : vector<16x32xf32> to vector<16x32xbf16>
    %c1 = arith.constant 1 : index
    %c0_69 = arith.constant 0 : index
    %c0_70 = arith.constant 0 : index
    %153 = vector.load %arg4[%c1, %c0_69, %c0_70] : memref<2x32x96xbf16, #tpu.memory_space<vmem>>, vector<1x32x96xbf16>
    %154 = vector.shape_cast %153 : vector<1x32x96xbf16> to vector<32x96xbf16>
    %cst_71 = arith.constant dense<0.000000e+00> : vector<16x96xf32>
    %155 = tpu.matmul %152, %154, %cst_71 {dimension_numbers = #tpu.dot_dimension_numbers<[1], [0], [0], [1], [0, 0, 1, 1], [], []>} : vector<16x32xbf16>, vector<32x96xbf16>, vector<16x96xf32> -> vector<16x96xf32>
    %c1_72 = arith.constant 1 : index
    %c0_73 = arith.constant 0 : index
    %c0_74 = arith.constant 0 : index
    %156 = vector.load %arg5[%c1_72, %c0_73, %c0_74] : memref<2x1x96xf32, #tpu.memory_space<vmem>>, vector<1x1x96xf32>
    %157 = vector.shape_cast %156 : vector<1x1x96xf32> to vector<1x96xf32>
    %158 = vector.broadcast %157 : vector<1x96xf32> to vector<16x96xf32>
    %159 = arith.addf %155, %158 : vector<16x96xf32>
    %160 = vector.shape_cast %159 : vector<16x96xf32> to vector<2x8x12x8xf32>
    %161 = tpu.transpose %160, [0, 2, 1, 3] : vector<2x8x12x8xf32> -> vector<2x12x8x8xf32>
    %162 = vector.extract_strided_slice %161 {offsets = [0, 0, 0, 0], sizes = [2, 4, 8, 8], strides = [1, 1, 1, 1]} : vector<2x12x8x8xf32> to vector<2x4x8x8xf32>
    %163 = vector.shape_cast %162 : vector<2x4x8x8xf32> to vector<8x8x8xf32>
    %164 = vector.extract_strided_slice %161 {offsets = [0, 4, 0, 0], sizes = [2, 4, 8, 8], strides = [1, 1, 1, 1]} : vector<2x12x8x8xf32> to vector<2x4x8x8xf32>
    %165 = vector.shape_cast %164 : vector<2x4x8x8xf32> to vector<8x8x8xf32>
    %166 = vector.extract_strided_slice %161 {offsets = [0, 8, 0, 0], sizes = [2, 4, 8, 8], strides = [1, 1, 1, 1]} : vector<2x12x8x8xf32> to vector<2x4x8x8xf32>
    %167 = vector.shape_cast %166 : vector<2x4x8x8xf32> to vector<8x8x8xf32>
    %168 = arith.truncf %163 : vector<8x8x8xf32> to vector<8x8x8xbf16>
    %169 = arith.truncf %165 : vector<8x8x8xf32> to vector<8x8x8xbf16>
    "tpu.trace_start"() <{level = 10 : i32, message = "nqd,nkd->nqk"}> : () -> ()
    %cst_75 = arith.constant dense<0.000000e+00> : vector<8x8x8xf32>
    %170 = tpu.matmul %168, %169, %cst_75 {dimension_numbers = #tpu.dot_dimension_numbers<[2], [2], [1], [1], [0, 0, 0, 1, 1, 1], [0], [0]>} : vector<8x8x8xbf16>, vector<8x8x8xbf16>, vector<8x8x8xf32> -> vector<8x8x8xf32>
    "tpu.trace_stop"() : () -> ()
    %171 = vector.broadcast %27 : vector<8x1x8xf32> to vector<8x8x8xf32>
    %172 = arith.addf %170, %171 : vector<8x8x8xf32>
    %cst_76 = arith.constant dense<0xFF800000> : vector<8x8xf32>
    %173 = vector.multi_reduction <maximumf>, %172, %cst_76 [2] : vector<8x8x8xf32> to vector<8x8xf32>
    %174 = vector.shape_cast %173 : vector<8x8xf32> to vector<8x8x1xf32>
    %175 = vector.broadcast %174 : vector<8x8x1xf32> to vector<8x8x8xf32>
    %176 = arith.subf %172, %175 : vector<8x8x8xf32>
    %177 = math.exp %176 : vector<8x8x8xf32>
    %cst_77 = arith.constant dense<0.000000e+00> : vector<8x8xf32>
    %178 = vector.multi_reduction <add>, %177, %cst_77 [2] : vector<8x8x8xf32> to vector<8x8xf32>
    %179 = vector.shape_cast %178 : vector<8x8xf32> to vector<8x8x1xf32>
    %180 = arith.truncf %177 : vector<8x8x8xf32> to vector<8x8x8xbf16>
    %181 = arith.truncf %167 : vector<8x8x8xf32> to vector<8x8x8xbf16>
    "tpu.trace_start"() <{level = 10 : i32, message = "nqk,nkd->nqd"}> : () -> ()
    %cst_78 = arith.constant dense<0.000000e+00> : vector<8x8x8xf32>
    %182 = tpu.matmul %180, %181, %cst_78 {dimension_numbers = #tpu.dot_dimension_numbers<[2], [1], [1], [2], [0, 0, 0, 1, 1, 2], [0], [0]>} : vector<8x8x8xbf16>, vector<8x8x8xbf16>, vector<8x8x8xf32> -> vector<8x8x8xf32>
    "tpu.trace_stop"() : () -> ()
    %183 = tpu.reciprocal %179 {approx = true} : vector<8x8x1xf32> -> vector<8x8x1xf32>
    %184 = vector.broadcast %183 : vector<8x8x1xf32> to vector<8x8x8xf32>
    %185 = arith.mulf %182, %184 : vector<8x8x8xf32>
    %186 = vector.shape_cast %185 : vector<8x8x8xf32> to vector<2x4x8x8xf32>
    %187 = tpu.transpose %186, [0, 2, 1, 3] : vector<2x4x8x8xf32> -> vector<2x8x4x8xf32>
    %188 = vector.shape_cast %187 : vector<2x8x4x8xf32> to vector<16x32xf32>
    %189 = arith.truncf %188 : vector<16x32xf32> to vector<16x32xbf16>
    %c1_79 = arith.constant 1 : index
    %c0_80 = arith.constant 0 : index
    %c0_81 = arith.constant 0 : index
    %190 = vector.load %arg6[%c1_79, %c0_80, %c0_81] : memref<2x32x32xbf16, #tpu.memory_space<vmem>>, vector<1x32x32xbf16>
    %191 = vector.shape_cast %190 : vector<1x32x32xbf16> to vector<32x32xbf16>
    %cst_82 = arith.constant dense<0.000000e+00> : vector<16x32xf32>
    %192 = tpu.matmul %189, %191, %cst_82 {dimension_numbers = #tpu.dot_dimension_numbers<[1], [0], [0], [1], [0, 0, 1, 1], [], []>} : vector<16x32xbf16>, vector<32x32xbf16>, vector<16x32xf32> -> vector<16x32xf32>
    %c1_83 = arith.constant 1 : index
    %c0_84 = arith.constant 0 : index
    %c0_85 = arith.constant 0 : index
    %193 = vector.load %arg7[%c1_83, %c0_84, %c0_85] : memref<2x1x32xf32, #tpu.memory_space<vmem>>, vector<1x1x32xf32>
    %194 = vector.shape_cast %193 : vector<1x1x32xf32> to vector<1x32xf32>
    %195 = vector.broadcast %194 : vector<1x32xf32> to vector<16x32xf32>
    %196 = arith.addf %192, %195 : vector<16x32xf32>
    %197 = arith.addf %196, %151 : vector<16x32xf32>
    %c1_86 = arith.constant 1 : index
    %c0_87 = arith.constant 0 : index
    %c0_88 = arith.constant 0 : index
    %198 = vector.load %arg8[%c1_86, %c0_87, %c0_88] : memref<2x1x32xf32, #tpu.memory_space<vmem>>, vector<1x1x32xf32>
    %199 = vector.shape_cast %198 : vector<1x1x32xf32> to vector<1x32xf32>
    %c1_89 = arith.constant 1 : index
    %c0_90 = arith.constant 0 : index
    %c0_91 = arith.constant 0 : index
    %200 = vector.load %arg9[%c1_89, %c0_90, %c0_91] : memref<2x1x32xf32, #tpu.memory_space<vmem>>, vector<1x1x32xf32>
    %201 = vector.shape_cast %200 : vector<1x1x32xf32> to vector<1x32xf32>
    %cst_92 = arith.constant dense<0.000000e+00> : vector<16xf32>
    %202 = vector.multi_reduction <add>, %197, %cst_92 [1] : vector<16x32xf32> to vector<16xf32>
    %203 = vector.shape_cast %202 : vector<16xf32> to vector<16x1xf32>
    %cst_93 = arith.constant 3.200000e+01 : f32
    %204 = vector.broadcast %cst_93 : f32 to vector<16x1xf32>
    %205 = arith.divf %203, %204 : vector<16x1xf32>
    %206 = vector.broadcast %205 : vector<16x1xf32> to vector<16x32xf32>
    %207 = arith.subf %197, %206 : vector<16x32xf32>
    %208 = arith.mulf %207, %207 : vector<16x32xf32>
    %cst_94 = arith.constant dense<0.000000e+00> : vector<16xf32>
    %209 = vector.multi_reduction <add>, %208, %cst_94 [1] : vector<16x32xf32> to vector<16xf32>
    %210 = vector.shape_cast %209 : vector<16xf32> to vector<16x1xf32>
    %cst_95 = arith.constant 3.200000e+01 : f32
    %211 = vector.broadcast %cst_95 : f32 to vector<16x1xf32>
    %212 = arith.divf %210, %211 : vector<16x1xf32>
    %cst_96 = arith.constant 9.99999996E-13 : f32
    %213 = vector.broadcast %cst_96 : f32 to vector<16x1xf32>
    %214 = arith.addf %212, %213 : vector<16x1xf32>
    %215 = math.rsqrt %214 : vector<16x1xf32>
    %216 = vector.broadcast %215 : vector<16x1xf32> to vector<16x32xf32>
    %217 = arith.mulf %207, %216 : vector<16x32xf32>
    %218 = vector.broadcast %199 : vector<1x32xf32> to vector<16x32xf32>
    %219 = arith.mulf %217, %218 : vector<16x32xf32>
    %220 = vector.broadcast %201 : vector<1x32xf32> to vector<16x32xf32>
    %221 = arith.addf %219, %220 : vector<16x32xf32>
    %222 = arith.truncf %221 : vector<16x32xf32> to vector<16x32xbf16>
    %c1_97 = arith.constant 1 : index
    %c0_98 = arith.constant 0 : index
    %c0_99 = arith.constant 0 : index
    %223 = vector.load %arg10[%c1_97, %c0_98, %c0_99] : memref<2x32x64xbf16, #tpu.memory_space<vmem>>, vector<1x32x64xbf16>
    %224 = vector.shape_cast %223 : vector<1x32x64xbf16> to vector<32x64xbf16>
    %cst_100 = arith.constant dense<0.000000e+00> : vector<16x64xf32>
    %225 = tpu.matmul %222, %224, %cst_100 {dimension_numbers = #tpu.dot_dimension_numbers<[1], [0], [0], [1], [0, 0, 1, 1], [], []>} : vector<16x32xbf16>, vector<32x64xbf16>, vector<16x64xf32> -> vector<16x64xf32>
    %c1_101 = arith.constant 1 : index
    %c0_102 = arith.constant 0 : index
    %c0_103 = arith.constant 0 : index
    %226 = vector.load %arg11[%c1_101, %c0_102, %c0_103] : memref<2x1x64xf32, #tpu.memory_space<vmem>>, vector<1x1x64xf32>
    %227 = vector.shape_cast %226 : vector<1x1x64xf32> to vector<1x64xf32>
    %228 = vector.broadcast %227 : vector<1x64xf32> to vector<16x64xf32>
    %229 = arith.addf %225, %228 : vector<16x64xf32>
    %cst_104 = arith.constant 5.000000e-01 : f32
    %230 = vector.broadcast %cst_104 : f32 to vector<16x64xf32>
    %231 = arith.mulf %230, %229 : vector<16x64xf32>
    %cst_105 = arith.constant 4.471500e-02 : f32
    %232 = vector.broadcast %cst_105 : f32 to vector<16x64xf32>
    %233 = arith.mulf %232, %229 : vector<16x64xf32>
    %234 = arith.mulf %233, %229 : vector<16x64xf32>
    %235 = arith.mulf %234, %229 : vector<16x64xf32>
    %236 = arith.addf %229, %235 : vector<16x64xf32>
    %cst_106 = arith.constant 0.797884583 : f32
    %237 = vector.broadcast %cst_106 : f32 to vector<16x64xf32>
    %238 = arith.mulf %237, %236 : vector<16x64xf32>
    %239 = math.tanh %238 : vector<16x64xf32>
    %cst_107 = arith.constant 1.000000e+00 : f32
    %240 = vector.broadcast %cst_107 : f32 to vector<16x64xf32>
    %241 = arith.addf %240, %239 : vector<16x64xf32>
    %242 = arith.mulf %231, %241 : vector<16x64xf32>
    %243 = arith.truncf %242 : vector<16x64xf32> to vector<16x64xbf16>
    %c1_108 = arith.constant 1 : index
    %c0_109 = arith.constant 0 : index
    %c0_110 = arith.constant 0 : index
    %244 = vector.load %arg12[%c1_108, %c0_109, %c0_110] : memref<2x64x32xbf16, #tpu.memory_space<vmem>>, vector<1x64x32xbf16>
    %245 = vector.shape_cast %244 : vector<1x64x32xbf16> to vector<64x32xbf16>
    %cst_111 = arith.constant dense<0.000000e+00> : vector<16x32xf32>
    %246 = tpu.matmul %243, %245, %cst_111 {dimension_numbers = #tpu.dot_dimension_numbers<[1], [0], [0], [1], [0, 0, 1, 1], [], []>} : vector<16x64xbf16>, vector<64x32xbf16>, vector<16x32xf32> -> vector<16x32xf32>
    %c1_112 = arith.constant 1 : index
    %c0_113 = arith.constant 0 : index
    %c0_114 = arith.constant 0 : index
    %247 = vector.load %arg13[%c1_112, %c0_113, %c0_114] : memref<2x1x32xf32, #tpu.memory_space<vmem>>, vector<1x1x32xf32>
    %248 = vector.shape_cast %247 : vector<1x1x32xf32> to vector<1x32xf32>
    %249 = vector.broadcast %248 : vector<1x32xf32> to vector<16x32xf32>
    %250 = arith.addf %246, %249 : vector<16x32xf32>
    %251 = arith.addf %250, %221 : vector<16x32xf32>
    %c1_115 = arith.constant 1 : index
    %c0_116 = arith.constant 0 : index
    %c0_117 = arith.constant 0 : index
    %252 = vector.load %arg14[%c1_115, %c0_116, %c0_117] : memref<2x1x32xf32, #tpu.memory_space<vmem>>, vector<1x1x32xf32>
    %253 = vector.shape_cast %252 : vector<1x1x32xf32> to vector<1x32xf32>
    %c1_118 = arith.constant 1 : index
    %c0_119 = arith.constant 0 : index
    %c0_120 = arith.constant 0 : index
    %254 = vector.load %arg15[%c1_118, %c0_119, %c0_120] : memref<2x1x32xf32, #tpu.memory_space<vmem>>, vector<1x1x32xf32>
    %255 = vector.shape_cast %254 : vector<1x1x32xf32> to vector<1x32xf32>
    %cst_121 = arith.constant dense<0.000000e+00> : vector<16xf32>
    %256 = vector.multi_reduction <add>, %251, %cst_121 [1] : vector<16x32xf32> to vector<16xf32>
    %257 = vector.shape_cast %256 : vector<16xf32> to vector<16x1xf32>
    %cst_122 = arith.constant 3.200000e+01 : f32
    %258 = vector.broadcast %cst_122 : f32 to vector<16x1xf32>
    %259 = arith.divf %257, %258 : vector<16x1xf32>
    %260 = vector.broadcast %259 : vector<16x1xf32> to vector<16x32xf32>
    %261 = arith.subf %251, %260 : vector<16x32xf32>
    %262 = arith.mulf %261, %261 : vector<16x32xf32>
    %cst_123 = arith.constant dense<0.000000e+00> : vector<16xf32>
    %263 = vector.multi_reduction <add>, %262, %cst_123 [1] : vector<16x32xf32> to vector<16xf32>
    %264 = vector.shape_cast %263 : vector<16xf32> to vector<16x1xf32>
    %cst_124 = arith.constant 3.200000e+01 : f32
    %265 = vector.broadcast %cst_124 : f32 to vector<16x1xf32>
    %266 = arith.divf %264, %265 : vector<16x1xf32>
    %cst_125 = arith.constant 9.99999996E-13 : f32
    %267 = vector.broadcast %cst_125 : f32 to vector<16x1xf32>
    %268 = arith.addf %266, %267 : vector<16x1xf32>
    %269 = math.rsqrt %268 : vector<16x1xf32>
    %270 = vector.broadcast %269 : vector<16x1xf32> to vector<16x32xf32>
    %271 = arith.mulf %261, %270 : vector<16x32xf32>
    %272 = vector.broadcast %253 : vector<1x32xf32> to vector<16x32xf32>
    %273 = arith.mulf %271, %272 : vector<16x32xf32>
    %274 = vector.broadcast %255 : vector<1x32xf32> to vector<16x32xf32>
    %275 = arith.addf %273, %274 : vector<16x32xf32>
    %c0_126 = arith.constant 0 : index
    %c0_127 = arith.constant 0 : index
    %276 = vector.load %arg16[%c0_126, %c0_127] : memref<16x32xf32, #tpu.memory_space<vmem>>, vector<16x32xf32>
    tpu.vector_store %arg16[%c0_126, %c0_127], %275 {strides = array<i32>} : memref<16x32xf32, #tpu.memory_space<vmem>>, vector<16x32xf32>,
    return
  }
}

</mosaic_0001>

<llo_original>
// kernel: wrapped_bert_forward.1
$region0: #{wrapped_bert_forward.1}
  #allocation0 [shape = 'u32[]', space=smem, size = 0x4, offset = 0x4, fixed_abs, tag = 'smem constant byte address 0x4 - core index']
  #allocation1 [shape = 'u32[144,128]{1,0:T(1,128)}', space=vmem, size = 0x12000, scoped, tag = 'internal scratch']
  %s0 = inlined_call_operand.vmem [shape: f32[16,32], index: 0, kind: input, shape index: {}]
  %s1 = inlined_call_operand.vmem [shape: f32[2,8], index: 1, kind: input, shape index: {}]
  %s2 = inlined_call_operand.vmem [shape: f32[1,32], index: 2, kind: input, shape index: {}]
  %s3 = inlined_call_operand.vmem [shape: f32[1,32], index: 3, kind: input, shape index: {}]
  %s4 = inlined_call_operand.vmem [shape: bf16[2,32,96], index: 4, kind: input, shape index: {}]
  %s5 = inlined_call_operand.vmem [shape: f32[2,1,96], index: 5, kind: input, shape index: {}]
  %s6 = inlined_call_operand.vmem [shape: bf16[2,32,32], index: 6, kind: input, shape index: {}]
  %s7 = inlined_call_operand.vmem [shape: f32[2,1,32], index: 7, kind: input, shape index: {}]
  %s8 = inlined_call_operand.vmem [shape: f32[2,1,32], index: 8, kind: input, shape index: {}]
  %s9 = inlined_call_operand.vmem [shape: f32[2,1,32], index: 9, kind: input, shape index: {}]
  %s10 = inlined_call_operand.vmem [shape: bf16[2,32,64], index: 10, kind: input, shape index: {}]
  %s11 = inlined_call_operand.vmem [shape: f32[2,1,64], index: 11, kind: input, shape index: {}]
  %s12 = inlined_call_operand.vmem [shape: bf16[2,64,32], index: 12, kind: input, shape index: {}]
  %s13 = inlined_call_operand.vmem [shape: f32[2,1,32], index: 13, kind: input, shape index: {}]
  %s14 = inlined_call_operand.vmem [shape: f32[2,1,32], index: 14, kind: input, shape index: {}]
  %s15 = inlined_call_operand.vmem [shape: f32[2,1,32], index: 15, kind: input, shape index: {}]
  %s16 = inlined_call_operand.hbm [shape: f32[16,32], index: 16, kind: output, shape index: {}]
  %s17 = sld [smem:[#allocation0]]
  $region74: #{wrapped_bert_forward.1} parent=0
    _
  %s19 = ssub.s32 1, %s17
  %s20 = scalar_select 0, %s19, %s17
  $region1: #{wrapped_bert_forward.1} parent=0
    #allocation2 [shape = 'u8[8192]{0}', space=vmem, size = 0x2000, scoped, tag = 'output window, operand 0, single buffered']
    #allocation3 [shape = 's32[1]{0}', space=sflag, size = 0x4, scoped, tag = 'scoped memory for wrapped_bert_forward.1']
    %21 = vsyncpa [#allocation3], 0
    // Predicated region
    $region2: #{wrapped_bert_forward.1} parent=1 // pred_check
      _
    $region3: #{wrapped_bert_forward.1} parent=1 // pred_check_branch
      %23 = sbr.rel (0) target = $region5
    $region4: #{wrapped_bert_forward.1} parent=1 // pred_region
      _
    $region5: #{wrapped_bert_forward.1} parent=1 // pred_fallthru
      _
    // Predicated region
    $region6: #{wrapped_bert_forward.1} parent=1 // pred_check
      _
    $region7: #{wrapped_bert_forward.1} parent=1 // pred_check_branch
      %25 = sbr.rel (0) target = $region9
    $region8: #{wrapped_bert_forward.1} parent=1 // pred_region
      _
    $region9: #{wrapped_bert_forward.1} parent=1 // pred_fallthru
      _
    // Predicated region
    $region10: #{wrapped_bert_forward.1} parent=1 // pred_check
      _
    $region11: #{wrapped_bert_forward.1} parent=1 // pred_check_branch
      %27 = sbr.rel (0) target = $region13
    $region12: #{wrapped_bert_forward.1} parent=1 // pred_region
      _
    $region13: #{wrapped_bert_forward.1} parent=1 // pred_fallthru
      _
    // Predicated region
    $region14: #{wrapped_bert_forward.1} parent=1 // pred_check
      _
    $region15: #{wrapped_bert_forward.1} parent=1 // pred_check_branch
      %29 = sbr.rel (0) target = $region17
    $region16: #{wrapped_bert_forward.1} parent=1 // pred_region
      _
    $region17: #{wrapped_bert_forward.1} parent=1 // pred_fallthru
      _
    // Predicated region
    $region18: #{wrapped_bert_forward.1} parent=1 // pred_check
      _
    $region19: #{wrapped_bert_forward.1} parent=1 // pred_check_branch
      %31 = sbr.rel (0) target = $region21
    $region20: #{wrapped_bert_forward.1} parent=1 // pred_region
      _
    $region21: #{wrapped_bert_forward.1} parent=1 // pred_fallthru
      _
    // Predicated region
    $region22: #{wrapped_bert_forward.1} parent=1 // pred_check
      _
    $region23: #{wrapped_bert_forward.1} parent=1 // pred_check_branch
      %33 = sbr.rel (0) target = $region25
    $region24: #{wrapped_bert_forward.1} parent=1 // pred_region
      _
    $region25: #{wrapped_bert_forward.1} parent=1 // pred_fallthru
      _
    // Predicated region
    $region26: #{wrapped_bert_forward.1} parent=1 // pred_check
      _
    $region27: #{wrapped_bert_forward.1} parent=1 // pred_check_branch
      %35 = sbr.rel (0) target = $region29
    $region28: #{wrapped_bert_forward.1} parent=1 // pred_region
      _
    $region29: #{wrapped_bert_forward.1} parent=1 // pred_fallthru
      _
    // Predicated region
    $region30: #{wrapped_bert_forward.1} parent=1 // pred_check
      _
    $region31: #{wrapped_bert_forward.1} parent=1 // pred_check_branch
      %37 = sbr.rel (0) target = $region33
    $region32: #{wrapped_bert_forward.1} parent=1 // pred_region
      _
    $region33: #{wrapped_bert_forward.1} parent=1 // pred_fallthru
      _
    // Predicated region
    $region34: #{wrapped_bert_forward.1} parent=1 // pred_check
      _
    $region35: #{wrapped_bert_forward.1} parent=1 // pred_check_branch
      %39 = sbr.rel (0) target = $region37
    $region36: #{wrapped_bert_forward.1} parent=1 // pred_region
      _
    $region37: #{wrapped_bert_forward.1} parent=1 // pred_fallthru
      _
    // Predicated region
    $region38: #{wrapped_bert_forward.1} parent=1 // pred_check
      _
    $region39: #{wrapped_bert_forward.1} parent=1 // pred_check_branch
      %41 = sbr.rel (0) target = $region41
    $region40: #{wrapped_bert_forward.1} parent=1 // pred_region
      _
    $region41: #{wrapped_bert_forward.1} parent=1 // pred_fallthru
      _
    // Predicated region
    $region42: #{wrapped_bert_forward.1} parent=1 // pred_check
      _
    $region43: #{wrapped_bert_forward.1} parent=1 // pred_check_branch
      %43 = sbr.rel (0) target = $region45
    $region44: #{wrapped_bert_forward.1} parent=1 // pred_region
      _
    $region45: #{wrapped_bert_forward.1} parent=1 // pred_fallthru
      _
    // Predicated region
    $region46: #{wrapped_bert_forward.1} parent=1 // pred_check
      _
    $region47: #{wrapped_bert_forward.1} parent=1 // pred_check_branch
      %45 = sbr.rel (0) target = $region49
    $region48: #{wrapped_bert_forward.1} parent=1 // pred_region
      _
    $region49: #{wrapped_bert_forward.1} parent=1 // pred_fallthru
      _
    // Predicated region
    $region50: #{wrapped_bert_forward.1} parent=1 // pred_check
      _
    $region51: #{wrapped_bert_forward.1} parent=1 // pred_check_branch
      %47 = sbr.rel (0) target = $region53
    $region52: #{wrapped_bert_forward.1} parent=1 // pred_region
      _
    $region53: #{wrapped_bert_forward.1} parent=1 // pred_fallthru
      _
    // Predicated region
    $region54: #{wrapped_bert_forward.1} parent=1 // pred_check
      _
    $region55: #{wrapped_bert_forward.1} parent=1 // pred_check_branch
      %49 = sbr.rel (0) target = $region57
    $region56: #{wrapped_bert_forward.1} parent=1 // pred_region
      _
    $region57: #{wrapped_bert_forward.1} parent=1 // pred_fallthru
      _
    // Predicated region
    $region58: #{wrapped_bert_forward.1} parent=1 // pred_check
      _
    $region59: #{wrapped_bert_forward.1} parent=1 // pred_check_branch
      %51 = sbr.rel (0) target = $region61
    $region60: #{wrapped_bert_forward.1} parent=1 // pred_region
      _
    $region61: #{wrapped_bert_forward.1} parent=1 // pred_fallthru
      _
    // Predicated region
    $region62: #{wrapped_bert_forward.1} parent=1 // pred_check
      _
    $region63: #{wrapped_bert_forward.1} parent=1 // pred_check_branch
      %53 = sbr.rel (0) target = $region65
    $region64: #{wrapped_bert_forward.1} parent=1 // pred_region
      _
    $region65: #{wrapped_bert_forward.1} parent=1 // pred_fallthru
      _
    %v55 = vld [vmem:[%s0] sm:$0xff]
    %v56 = vld [vmem:[%s0 + $0x8] sm:$0xff]
    %v57 = vld [vmem:[%s2] sm:$0x1]
    %v58 = vld [vmem:[%s3] sm:$0x1]
    %vm59 = vcmask 261120
    %v60 = vsel %vm59, %v55, 0.0
    %61 = vadd.xlane.f32.xlu0 %v60
    %v62 = vpop.xlane.xlu0 %61
    %v63 = vsel %vm59, %v56, 0.0
    %64 = vadd.xlane.f32.xlu0 %v63
    %v65 = vpop.xlane.xlu0 %64
    %v66 = vrcp.pop 32.0
    %v67 = vmul.f32 %v62, %v66
    %v68 = vmul.f32 %v65, %v66
    %v69 = vsub.f32 %v55, %v67
    %v70 = vsub.f32 %v56, %v68
    %v71 = vmul.f32 %v69, %v69
    %v72 = vmul.f32 %v70, %v70
    %v73 = vsel %vm59, %v71, 0.0
    %74 = vadd.xlane.f32.xlu0 %v73
    %v75 = vpop.xlane.xlu0 %74
    %v76 = vsel %vm59, %v72, 0.0
    %77 = vadd.xlane.f32.xlu0 %v76
    %v78 = vpop.xlane.xlu0 %77
    %v79 = vmul.f32 %v75, %v66
    %v80 = vmul.f32 %v78, %v66
    %v81 = vadd.f32 %v79, 1e-12
    %v82 = vadd.f32 %v80, 1e-12
    %v83 = vrsqrt.pop %v81
    %v84 = vrsqrt.pop %v82
    %v85 = vmul.f32 %v69, %v83
    %v86 = vmul.f32 %v70, %v84
    %v88 = vlaneseq
    %v89 = vshrl.u32 %v88, 7
    %v90 = vsub.s32 0, %v89
    %v91 = vrot.slane %v57, %v90
    %v93 = vmul.f32 %v85, %v91
    %v94 = vmul.f32 %v86, %v91
    %v96 = vlaneseq
    %v97 = vshrl.u32 %v96, 7
    %v98 = vsub.s32 0, %v97
    %v99 = vrot.slane %v58, %v98
    %v101 = vadd.f32 %v93, %v99
    %v102 = vadd.f32 %v94, %v99
    %v103 = vld [vmem:[%s1] sm:$0x3]
    %v106 = vunpack.c.l.s4 1966171168
    %v107 = vunpack.c.0.s8 %v106
    %v108 = vlaneseq
    %v109 = vshrl.u32 %v108, 7
    %v110 = vsub.s32 %v107, %v109
    %v111 = vrot.slane %v103, %v110
    %v112 = vcombine.high %v111, %v111
    %v114 = vunpack.c.l.s4 1966171168
    %v115 = vunpack.c.0.s8 %v114
    %v116 = vlaneseq
    %v117 = vshrl.u32 %v116, 7
    %v118 = vsub.s32 %v115, %v117
    %v119 = vrot.slane %v111, %v118
    %v121 = vunpack.c.l.s4 1966171168
    %v122 = vunpack.c.0.s8 %v121
    %v123 = vlaneseq
    %v124 = vshrl.u32 %v123, 7
    %v125 = vsub.s32 %v122, %v124
    %v126 = vrot.slane %v112, %v125
    %v127 = vpack.c.bf16 %v102, %v101
    %v128 = vld [vmem:[%s4] sm:$0xf]
    %v129 = vld [vmem:[%s4 + $0x4] sm:$0xf]
    %v130 = vld [vmem:[%s4 + $0x8] sm:$0xf]
    %v131 = vld [vmem:[%s4 + $0xc] sm:$0xf]
    %v132 = vld [vmem:[%s5] sm:$0x1]
    %v134 = vlaneseq
    %v135 = vshrl.u32 %v134, 7
    %v136 = vsub.s32 0, %v135
    %v137 = vrot.slane %v132, %v136
    %v143 = vunpack.c.l.b16 %v128
    %v144 = vunpack.c.l.b16 %v129
    %v145 = vunpack.c.l.b16 %v130
    %v146 = vunpack.c.l.b16 %v131
    %v147 = vpack.c.b16 %v144, %v143
    %v148 = vpack.c.b16 %v146, %v145
    %v152 = vsel %vm59, %v127, 0
    %154 = vmatprep.subr.bf16.mxu0 0
    %155 = vmatpush1.bf16.msra.mxu0 %v147
    %156 = vmatprep.subr.bf16.mxu0 0
    %157 = vmatpush1.bf16.msra.mxu0 %v148
    %158 = vmatprep.subr.bf16.mxu0 0
    %159 = vmatpush1.bf16.msra.mxu0 0
    %160 = vmatprep.subr.bf16.mxu0 0
    %161 = vmatpush1.bf16.msra.mxu0 0
    %162 = vmatprep.subr.bf16.mxu0 0
    %163 = vmatpush1.bf16.msra.mxu0 0
    %164 = vmatprep.subr.bf16.mxu0 0
    %165 = vmatpush1.bf16.msra.mxu0 0
    %166 = vmatprep.subr.bf16.mxu0 0
    %167 = vmatpush1.bf16.msra.mxu0 0
    %168 = vmatprep.subr.bf16.mxu0 0
    %169 = vmatpush1.bf16.msra.mxu0 0
    %170 = vmatprep.subr.bf16.mxu0 0
    %171 = vmatpush1.bf16.msra.mxu0 0
    %172 = vmatprep.subr.bf16.mxu0 0
    %173 = vmatpush1.bf16.msra.mxu0 0
    %174 = vmatprep.subr.bf16.mxu0 0
    %175 = vmatpush1.bf16.msra.mxu0 0
    %176 = vmatprep.subr.bf16.mxu0 0
    %177 = vmatpush1.bf16.msra.mxu0 0
    %178 = vmatprep.subr.bf16.mxu0 0
    %179 = vmatpush1.bf16.msra.mxu0 0
    %180 = vmatprep.subr.bf16.mxu0 0
    %181 = vmatpush1.bf16.msra.mxu0 0
    %182 = vmatprep.subr.bf16.mxu0 0
    %183 = vmatpush1.bf16.msra.mxu0 0
    %184 = vmatprep.subr.bf16.mxu0 0
    %185 = vmatpush1.bf16.msra.mxu0 0
    %186 = vmatprep.mubr.bf16.mxu0 0
    %187 = vmatmul.mubr.bf16.gmra.mrb[0].mxu0 %v152
    %v188 = vpop.f32.mrb[0].mxu0
    %v189 = vadd.f32 %v137, %v188
    %v190 = vpop.f32.mrb[0].mxu0
    %v191 = vpop.f32.mrb[0].mxu0
    %v192 = vadd.f32 %v137, %v191
    %v193 = vpop.f32.mrb[0].mxu0
    %194 = vdwg.mxu0
    %197 = vrot.lane.b32.xlu0 %v189, 120
    %v198 = vpop.permute.xlu0 %197
    %199 = vrot.lane.b32.xlu0 %v192, 120
    %v200 = vpop.permute.xlu0 %199
    %203 = vrot.lane.b32.xlu0 %v189, 112
    %v204 = vpop.permute.xlu0 %203
    %205 = vrot.lane.b32.xlu0 %v192, 112
    %v206 = vpop.permute.xlu0 %205
    %209 = vrot.lane.b32.xlu0 %v189, 104
    %v210 = vpop.permute.xlu0 %209
    %211 = vrot.lane.b32.xlu0 %v192, 104
    %v212 = vpop.permute.xlu0 %211
    %215 = vrot.lane.b32.xlu0 %v189, 96
    %v216 = vpop.permute.xlu0 %215
    %217 = vrot.lane.b32.xlu0 %v192, 96
    %v218 = vpop.permute.xlu0 %217
    %221 = vrot.lane.b32.xlu0 %v189, 88
    %v222 = vpop.permute.xlu0 %221
    %223 = vrot.lane.b32.xlu0 %v192, 88
    %v224 = vpop.permute.xlu0 %223
    %227 = vrot.lane.b32.xlu0 %v189, 80
    %v228 = vpop.permute.xlu0 %227
    %229 = vrot.lane.b32.xlu0 %v192, 80
    %v230 = vpop.permute.xlu0 %229
    %233 = vrot.lane.b32.xlu0 %v189, 72
    %v234 = vpop.permute.xlu0 %233
    %235 = vrot.lane.b32.xlu0 %v192, 72
    %v236 = vpop.permute.xlu0 %235
    %239 = vrot.lane.b32.xlu0 %v189, 64
    %v240 = vpop.permute.xlu0 %239
    %241 = vrot.lane.b32.xlu0 %v192, 64
    %v242 = vpop.permute.xlu0 %241
    %245 = vrot.lane.b32.xlu0 %v189, 56
    %v246 = vpop.permute.xlu0 %245
    %247 = vrot.lane.b32.xlu0 %v192, 56
    %v248 = vpop.permute.xlu0 %247
    %251 = vrot.lane.b32.xlu0 %v189, 48
    %v252 = vpop.permute.xlu0 %251
    %253 = vrot.lane.b32.xlu0 %v192, 48
    %v254 = vpop.permute.xlu0 %253
    %257 = vrot.lane.b32.xlu0 %v189, 40
    %v258 = vpop.permute.xlu0 %257
    %259 = vrot.lane.b32.xlu0 %v192, 40
    %v260 = vpop.permute.xlu0 %259
    %v263 = vcombine.low %v189, %v204
    %v264 = vcombine.high %v189, %v204
    %v266 = vunpack.c.l.s4 1983009808
    %v267 = vunpack.c.0.s8 %v266
    %v268 = vlaneseq
    %v269 = vshrl.u32 %v268, 7
    %v270 = vsub.s32 %v267, %v269
    %v271 = vrot.slane %v263, %v270
    %v273 = vunpack.c.l.s4 1983009808
    %v274 = vunpack.c.0.s8 %v273
    %v275 = vlaneseq
    %v276 = vshrl.u32 %v275, 7
    %v277 = vsub.s32 %v274, %v276
    %v278 = vrot.slane %v264, %v277
    %v279 = vcombine.low %v198, %v210
    %v280 = vcombine.high %v198, %v210
    %v282 = vunpack.c.l.s4 1983009808
    %v283 = vunpack.c.0.s8 %v282
    %v284 = vlaneseq
    %v285 = vshrl.u32 %v284, 7
    %v286 = vsub.s32 %v283, %v285
    %v287 = vrot.slane %v279, %v286
    %v289 = vunpack.c.l.s4 1983009808
    %v290 = vunpack.c.0.s8 %v289
    %v291 = vlaneseq
    %v292 = vshrl.u32 %v291, 7
    %v293 = vsub.s32 %v290, %v292
    %v294 = vrot.slane %v280, %v293
    %v295 = vcombine.low %v216, %v228
    %v296 = vcombine.high %v216, %v228
    %v298 = vunpack.c.l.s4 1983009808
    %v299 = vunpack.c.0.s8 %v298
    %v300 = vlaneseq
    %v301 = vshrl.u32 %v300, 7
    %v302 = vsub.s32 %v299, %v301
    %v303 = vrot.slane %v295, %v302
    %v305 = vunpack.c.l.s4 1983009808
    %v306 = vunpack.c.0.s8 %v305
    %v307 = vlaneseq
    %v308 = vshrl.u32 %v307, 7
    %v309 = vsub.s32 %v306, %v308
    %v310 = vrot.slane %v296, %v309
    %v311 = vcombine.low %v222, %v234
    %v312 = vcombine.high %v222, %v234
    %v314 = vunpack.c.l.s4 1983009808
    %v315 = vunpack.c.0.s8 %v314
    %v316 = vlaneseq
    %v317 = vshrl.u32 %v316, 7
    %v318 = vsub.s32 %v315, %v317
    %v319 = vrot.slane %v311, %v318
    %v321 = vunpack.c.l.s4 1983009808
    %v322 = vunpack.c.0.s8 %v321
    %v323 = vlaneseq
    %v324 = vshrl.u32 %v323, 7
    %v325 = vsub.s32 %v322, %v324
    %v326 = vrot.slane %v312, %v325
    %v327 = vcombine.low %v271, %v287
    %v328 = vcombine.high %v271, %v287
    %v330 = vunpack.c.l.s4 1934713408
    %v331 = vunpack.c.0.s8 %v330
    %v332 = vlaneseq
    %v333 = vshrl.u32 %v332, 7
    %v334 = vsub.s32 %v331, %v333
    %v335 = vrot.slane %v327, %v334
    %v337 = vunpack.c.l.s4 1934713408
    %v338 = vunpack.c.0.s8 %v337
    %v339 = vlaneseq
    %v340 = vshrl.u32 %v339, 7
    %v341 = vsub.s32 %v338, %v340
    %v342 = vrot.slane %v328, %v341
    %v343 = vcombine.low %v278, %v294
    %v344 = vcombine.high %v278, %v294
    %v346 = vunpack.c.l.s4 1934713408
    %v347 = vunpack.c.0.s8 %v346
    %v348 = vlaneseq
    %v349 = vshrl.u32 %v348, 7
    %v350 = vsub.s32 %v347, %v349
    %v351 = vrot.slane %v343, %v350
    %v353 = vunpack.c.l.s4 1934713408
    %v354 = vunpack.c.0.s8 %v353
    %v355 = vlaneseq
    %v356 = vshrl.u32 %v355, 7
    %v357 = vsub.s32 %v354, %v356
    %v358 = vrot.slane %v344, %v357
    %v359 = vcombine.low %v303, %v319
    %v360 = vcombine.high %v303, %v319
    %v362 = vunpack.c.l.s4 1934713408
    %v363 = vunpack.c.0.s8 %v362
    %v364 = vlaneseq
    %v365 = vshrl.u32 %v364, 7
    %v366 = vsub.s32 %v363, %v365
    %v367 = vrot.slane %v359, %v366
    %v369 = vunpack.c.l.s4 1934713408
    %v370 = vunpack.c.0.s8 %v369
    %v371 = vlaneseq
    %v372 = vshrl.u32 %v371, 7
    %v373 = vsub.s32 %v370, %v372
    %v374 = vrot.slane %v360, %v373
    %v375 = vcombine.low %v310, %v326
    %v376 = vcombine.high %v310, %v326
    %v378 = vunpack.c.l.s4 1934713408
    %v379 = vunpack.c.0.s8 %v378
    %v380 = vlaneseq
    %v381 = vshrl.u32 %v380, 7
    %v382 = vsub.s32 %v379, %v381
    %v383 = vrot.slane %v375, %v382
    %v385 = vunpack.c.l.s4 1934713408
    %v386 = vunpack.c.0.s8 %v385
    %v387 = vlaneseq
    %v388 = vshrl.u32 %v387, 7
    %v389 = vsub.s32 %v386, %v388
    %v390 = vrot.slane %v376, %v389
    %v391 = vcombine.low %v335, %v367
    %v392 = vcombine.high %v335, %v367
    %v393 = vcombine.low %v342, %v374
    %v394 = vcombine.high %v342, %v374
    %v395 = vcombine.low %v351, %v383
    %v396 = vcombine.high %v351, %v383
    %v397 = vcombine.low %v358, %v390
    %v398 = vcombine.high %v358, %v390
    %v399 = vcombine.low %v240, %v252
    %v400 = vcombine.high %v240, %v252
    %v402 = vunpack.c.l.s4 1983009808
    %v403 = vunpack.c.0.s8 %v402
    %v404 = vlaneseq
    %v405 = vshrl.u32 %v404, 7
    %v406 = vsub.s32 %v403, %v405
    %v407 = vrot.slane %v399, %v406
    %v409 = vunpack.c.l.s4 1983009808
    %v410 = vunpack.c.0.s8 %v409
    %v411 = vlaneseq
    %v412 = vshrl.u32 %v411, 7
    %v413 = vsub.s32 %v410, %v412
    %v414 = vrot.slane %v400, %v413
    %v415 = vcombine.low %v246, %v258
    %v416 = vcombine.high %v246, %v258
    %v418 = vunpack.c.l.s4 1983009808
    %v419 = vunpack.c.0.s8 %v418
    %v420 = vlaneseq
    %v421 = vshrl.u32 %v420, 7
    %v422 = vsub.s32 %v419, %v421
    %v423 = vrot.slane %v415, %v422
    %v425 = vunpack.c.l.s4 1983009808
    %v426 = vunpack.c.0.s8 %v425
    %v427 = vlaneseq
    %v428 = vshrl.u32 %v427, 7
    %v429 = vsub.s32 %v426, %v428
    %v430 = vrot.slane %v416, %v429
    %v431 = vcombine.low %v407, %v423
    %v432 = vcombine.high %v407, %v423
    %v434 = vunpack.c.l.s4 1934713408
    %v435 = vunpack.c.0.s8 %v434
    %v436 = vlaneseq
    %v437 = vshrl.u32 %v436, 7
    %v438 = vsub.s32 %v435, %v437
    %v439 = vrot.slane %v431, %v438
    %v441 = vunpack.c.l.s4 1934713408
    %v442 = vunpack.c.0.s8 %v441
    %v443 = vlaneseq
    %v444 = vshrl.u32 %v443, 7
    %v445 = vsub.s32 %v442, %v444
    %v446 = vrot.slane %v432, %v445
    %v447 = vcombine.low %v414, %v430
    %v448 = vcombine.high %v414, %v430
    %v450 = vunpack.c.l.s4 1934713408
    %v451 = vunpack.c.0.s8 %v450
    %v452 = vlaneseq
    %v453 = vshrl.u32 %v452, 7
    %v454 = vsub.s32 %v451, %v453
    %v455 = vrot.slane %v447, %v454
    %v457 = vunpack.c.l.s4 1934713408
    %v458 = vunpack.c.0.s8 %v457
    %v459 = vlaneseq
    %v460 = vshrl.u32 %v459, 7
    %v461 = vsub.s32 %v458, %v460
    %v462 = vrot.slane %v448, %v461
    %v463 = vcombine.high %v439, 0.0
    %v464 = vcombine.high %v446, 0.0
    %v465 = vcombine.high %v455, 0.0
    %v466 = vcombine.high %v462, 0.0
    %v467 = vcombine.low %v192, %v206
    %v468 = vcombine.high %v192, %v206
    %v470 = vunpack.c.l.s4 1983009808
    %v471 = vunpack.c.0.s8 %v470
    %v472 = vlaneseq
    %v473 = vshrl.u32 %v472, 7
    %v474 = vsub.s32 %v471, %v473
    %v475 = vrot.slane %v467, %v474
    %v477 = vunpack.c.l.s4 1983009808
    %v478 = vunpack.c.0.s8 %v477
    %v479 = vlaneseq
    %v480 = vshrl.u32 %v479, 7
    %v481 = vsub.s32 %v478, %v480
    %v482 = vrot.slane %v468, %v481
    %v483 = vcombine.low %v200, %v212
    %v484 = vcombine.high %v200, %v212
    %v486 = vunpack.c.l.s4 1983009808
    %v487 = vunpack.c.0.s8 %v486
    %v488 = vlaneseq
    %v489 = vshrl.u32 %v488, 7
    %v490 = vsub.s32 %v487, %v489
    %v491 = vrot.slane %v483, %v490
    %v493 = vunpack.c.l.s4 1983009808
    %v494 = vunpack.c.0.s8 %v493
    %v495 = vlaneseq
    %v496 = vshrl.u32 %v495, 7
    %v497 = vsub.s32 %v494, %v496
    %v498 = vrot.slane %v484, %v497
    %v499 = vcombine.low %v218, %v230
    %v500 = vcombine.high %v218, %v230
    %v502 = vunpack.c.l.s4 1983009808
    %v503 = vunpack.c.0.s8 %v502
    %v504 = vlaneseq
    %v505 = vshrl.u32 %v504, 7
    %v506 = vsub.s32 %v503, %v505
    %v507 = vrot.slane %v499, %v506
    %v509 = vunpack.c.l.s4 1983009808
    %v510 = vunpack.c.0.s8 %v509
    %v511 = vlaneseq
    %v512 = vshrl.u32 %v511, 7
    %v513 = vsub.s32 %v510, %v512
    %v514 = vrot.slane %v500, %v513
    %v515 = vcombine.low %v224, %v236
    %v516 = vcombine.high %v224, %v236
    %v518 = vunpack.c.l.s4 1983009808
    %v519 = vunpack.c.0.s8 %v518
    %v520 = vlaneseq
    %v521 = vshrl.u32 %v520, 7
    %v522 = vsub.s32 %v519, %v521
    %v523 = vrot.slane %v515, %v522
    %v525 = vunpack.c.l.s4 1983009808
    %v526 = vunpack.c.0.s8 %v525
    %v527 = vlaneseq
    %v528 = vshrl.u32 %v527, 7
    %v529 = vsub.s32 %v526, %v528
    %v530 = vrot.slane %v516, %v529
    %v531 = vcombine.low %v475, %v491
    %v532 = vcombine.high %v475, %v491
    %v534 = vunpack.c.l.s4 1934713408
    %v535 = vunpack.c.0.s8 %v534
    %v536 = vlaneseq
    %v537 = vshrl.u32 %v536, 7
    %v538 = vsub.s32 %v535, %v537
    %v539 = vrot.slane %v531, %v538
    %v541 = vunpack.c.l.s4 1934713408
    %v542 = vunpack.c.0.s8 %v541
    %v543 = vlaneseq
    %v544 = vshrl.u32 %v543, 7
    %v545 = vsub.s32 %v542, %v544
    %v546 = vrot.slane %v532, %v545
    %v547 = vcombine.low %v482, %v498
    %v548 = vcombine.high %v482, %v498
    %v550 = vunpack.c.l.s4 1934713408
    %v551 = vunpack.c.0.s8 %v550
    %v552 = vlaneseq
    %v553 = vshrl.u32 %v552, 7
    %v554 = vsub.s32 %v551, %v553
    %v555 = vrot.slane %v547, %v554
    %v557 = vunpack.c.l.s4 1934713408
    %v558 = vunpack.c.0.s8 %v557
    %v559 = vlaneseq
    %v560 = vshrl.u32 %v559, 7
    %v561 = vsub.s32 %v558, %v560
    %v562 = vrot.slane %v548, %v561
    %v563 = vcombine.low %v507, %v523
    %v564 = vcombine.high %v507, %v523
    %v566 = vunpack.c.l.s4 1934713408
    %v567 = vunpack.c.0.s8 %v566
    %v568 = vlaneseq
    %v569 = vshrl.u32 %v568, 7
    %v570 = vsub.s32 %v567, %v569
    %v571 = vrot.slane %v563, %v570
    %v573 = vunpack.c.l.s4 1934713408
    %v574 = vunpack.c.0.s8 %v573
    %v575 = vlaneseq
    %v576 = vshrl.u32 %v575, 7
    %v577 = vsub.s32 %v574, %v576
    %v578 = vrot.slane %v564, %v577
    %v579 = vcombine.low %v514, %v530
    %v580 = vcombine.high %v514, %v530
    %v582 = vunpack.c.l.s4 1934713408
    %v583 = vunpack.c.0.s8 %v582
    %v584 = vlaneseq
    %v585 = vshrl.u32 %v584, 7
    %v586 = vsub.s32 %v583, %v585
    %v587 = vrot.slane %v579, %v586
    %v589 = vunpack.c.l.s4 1934713408
    %v590 = vunpack.c.0.s8 %v589
    %v591 = vlaneseq
    %v592 = vshrl.u32 %v591, 7
    %v593 = vsub.s32 %v590, %v592
    %v594 = vrot.slane %v580, %v593
    %v595 = vcombine.low %v539, %v571
    %v596 = vcombine.high %v539, %v571
    %v597 = vcombine.low %v546, %v578
    %v598 = vcombine.high %v546, %v578
    %v599 = vcombine.low %v555, %v587
    %v600 = vcombine.high %v555, %v587
    %v601 = vcombine.low %v562, %v594
    %v602 = vcombine.high %v562, %v594
    %v603 = vcombine.low %v242, %v254
    %v604 = vcombine.high %v242, %v254
    %v606 = vunpack.c.l.s4 1983009808
    %v607 = vunpack.c.0.s8 %v606
    %v608 = vlaneseq
    %v609 = vshrl.u32 %v608, 7
    %v610 = vsub.s32 %v607, %v609
    %v611 = vrot.slane %v603, %v610
    %v613 = vunpack.c.l.s4 1983009808
    %v614 = vunpack.c.0.s8 %v613
    %v615 = vlaneseq
    %v616 = vshrl.u32 %v615, 7
    %v617 = vsub.s32 %v614, %v616
    %v618 = vrot.slane %v604, %v617
    %v619 = vcombine.low %v248, %v260
    %v620 = vcombine.high %v248, %v260
    %v622 = vunpack.c.l.s4 1983009808
    %v623 = vunpack.c.0.s8 %v622
    %v624 = vlaneseq
    %v625 = vshrl.u32 %v624, 7
    %v626 = vsub.s32 %v623, %v625
    %v627 = vrot.slane %v619, %v626
    %v629 = vunpack.c.l.s4 1983009808
    %v630 = vunpack.c.0.s8 %v629
    %v631 = vlaneseq
    %v632 = vshrl.u32 %v631, 7
    %v633 = vsub.s32 %v630, %v632
    %v634 = vrot.slane %v620, %v633
    %v635 = vcombine.low %v611, %v627
    %v636 = vcombine.high %v611, %v627
    %v638 = vunpack.c.l.s4 1934713408
    %v639 = vunpack.c.0.s8 %v638
    %v640 = vlaneseq
    %v641 = vshrl.u32 %v640, 7
    %v642 = vsub.s32 %v639, %v641
    %v643 = vrot.slane %v635, %v642
    %v645 = vunpack.c.l.s4 1934713408
    %v646 = vunpack.c.0.s8 %v645
    %v647 = vlaneseq
    %v648 = vshrl.u32 %v647, 7
    %v649 = vsub.s32 %v646, %v648
    %v650 = vrot.slane %v636, %v649
    %v651 = vcombine.low %v618, %v634
    %v652 = vcombine.high %v618, %v634
    %v654 = vunpack.c.l.s4 1934713408
    %v655 = vunpack.c.0.s8 %v654
    %v656 = vlaneseq
    %v657 = vshrl.u32 %v656, 7
    %v658 = vsub.s32 %v655, %v657
    %v659 = vrot.slane %v651, %v658
    %v661 = vunpack.c.l.s4 1934713408
    %v662 = vunpack.c.0.s8 %v661
    %v663 = vlaneseq
    %v664 = vshrl.u32 %v663, 7
    %v665 = vsub.s32 %v662, %v664
    %v666 = vrot.slane %v652, %v665
    %v667 = vcombine.high %v643, 0.0
    %v668 = vcombine.high %v650, 0.0
    %v669 = vcombine.high %v659, 0.0
    %v670 = vcombine.high %v666, 0.0
    %v671 = vcombine.low %v391, %v393
    %v672 = vcombine.high %v391, %v393
    %v674 = vunpack.c.l.s4 1983009808
    %v675 = vunpack.c.0.s8 %v674
    %v676 = vlaneseq
    %v677 = vshrl.u32 %v676, 7
    %v678 = vsub.s32 %v675, %v677
    %v679 = vrot.slane %v671, %v678
    %v681 = vunpack.c.l.s4 1983009808
    %v682 = vunpack.c.0.s8 %v681
    %v683 = vlaneseq
    %v684 = vshrl.u32 %v683, 7
    %v685 = vsub.s32 %v682, %v684
    %v686 = vrot.slane %v672, %v685
    %v687 = vcombine.low %v392, %v394
    %v688 = vcombine.high %v392, %v394
    %v690 = vunpack.c.l.s4 1983009808
    %v691 = vunpack.c.0.s8 %v690
    %v692 = vlaneseq
    %v693 = vshrl.u32 %v692, 7
    %v694 = vsub.s32 %v691, %v693
    %v695 = vrot.slane %v687, %v694
    %v697 = vunpack.c.l.s4 1983009808
    %v698 = vunpack.c.0.s8 %v697
    %v699 = vlaneseq
    %v700 = vshrl.u32 %v699, 7
    %v701 = vsub.s32 %v698, %v700
    %v702 = vrot.slane %v688, %v701
    %v703 = vcombine.low %v395, %v397
    %v704 = vcombine.high %v395, %v397
    %v706 = vunpack.c.l.s4 1983009808
    %v707 = vunpack.c.0.s8 %v706
    %v708 = vlaneseq
    %v709 = vshrl.u32 %v708, 7
    %v710 = vsub.s32 %v707, %v709
    %v711 = vrot.slane %v703, %v710
    %v713 = vunpack.c.l.s4 1983009808
    %v714 = vunpack.c.0.s8 %v713
    %v715 = vlaneseq
    %v716 = vshrl.u32 %v715, 7
    %v717 = vsub.s32 %v714, %v716
    %v718 = vrot.slane %v704, %v717
    %v719 = vcombine.low %v396, %v398
    %v720 = vcombine.high %v396, %v398
    %v722 = vunpack.c.l.s4 1983009808
    %v723 = vunpack.c.0.s8 %v722
    %v724 = vlaneseq
    %v725 = vshrl.u32 %v724, 7
    %v726 = vsub.s32 %v723, %v725
    %v727 = vrot.slane %v719, %v726
    %v729 = vunpack.c.l.s4 1983009808
    %v730 = vunpack.c.0.s8 %v729
    %v731 = vlaneseq
    %v732 = vshrl.u32 %v731, 7
    %v733 = vsub.s32 %v730, %v732
    %v734 = vrot.slane %v720, %v733
    %v735 = vcombine.low %v679, %v695
    %v736 = vcombine.high %v679, %v695
    %v738 = vunpack.c.l.s4 1934713408
    %v739 = vunpack.c.0.s8 %v738
    %v740 = vlaneseq
    %v741 = vshrl.u32 %v740, 7
    %v742 = vsub.s32 %v739, %v741
    %v743 = vrot.slane %v735, %v742
    %v745 = vunpack.c.l.s4 1934713408
    %v746 = vunpack.c.0.s8 %v745
    %v747 = vlaneseq
    %v748 = vshrl.u32 %v747, 7
    %v749 = vsub.s32 %v746, %v748
    %v750 = vrot.slane %v736, %v749
    %v751 = vcombine.low %v686, %v702
    %v752 = vcombine.high %v686, %v702
    %v754 = vunpack.c.l.s4 1934713408
    %v755 = vunpack.c.0.s8 %v754
    %v756 = vlaneseq
    %v757 = vshrl.u32 %v756, 7
    %v758 = vsub.s32 %v755, %v757
    %v759 = vrot.slane %v751, %v758
    %v761 = vunpack.c.l.s4 1934713408
    %v762 = vunpack.c.0.s8 %v761
    %v763 = vlaneseq
    %v764 = vshrl.u32 %v763, 7
    %v765 = vsub.s32 %v762, %v764
    %v766 = vrot.slane %v752, %v765
    %v767 = vcombine.low %v711, %v727
    %v768 = vcombine.high %v711, %v727
    %v770 = vunpack.c.l.s4 1934713408
    %v771 = vunpack.c.0.s8 %v770
    %v772 = vlaneseq
    %v773 = vshrl.u32 %v772, 7
    %v774 = vsub.s32 %v771, %v773
    %v775 = vrot.slane %v767, %v774
    %v777 = vunpack.c.l.s4 1934713408
    %v778 = vunpack.c.0.s8 %v777
    %v779 = vlaneseq
    %v780 = vshrl.u32 %v779, 7
    %v781 = vsub.s32 %v778, %v780
    %v782 = vrot.slane %v768, %v781
    %v783 = vcombine.low %v718, %v734
    %v784 = vcombine.high %v718, %v734
    %v786 = vunpack.c.l.s4 1934713408
    %v787 = vunpack.c.0.s8 %v786
    %v788 = vlaneseq
    %v789 = vshrl.u32 %v788, 7
    %v790 = vsub.s32 %v787, %v789
    %v791 = vrot.slane %v783, %v790
    %v793 = vunpack.c.l.s4 1934713408
    %v794 = vunpack.c.0.s8 %v793
    %v795 = vlaneseq
    %v796 = vshrl.u32 %v795, 7
    %v797 = vsub.s32 %v794, %v796
    %v798 = vrot.slane %v784, %v797
    %v799 = vcombine.low %v743, %v775
    %v800 = vcombine.high %v743, %v775
    %v801 = vcombine.low %v750, %v782
    %v802 = vcombine.high %v750, %v782
    %v803 = vcombine.low %v759, %v791
    %v804 = vcombine.high %v759, %v791
    %v805 = vcombine.low %v766, %v798
    %v806 = vcombine.high %v766, %v798
    %v807 = vcombine.low %v439, %v446
    %v809 = vunpack.c.l.s4 1983009808
    %v810 = vunpack.c.0.s8 %v809
    %v811 = vlaneseq
    %v812 = vshrl.u32 %v811, 7
    %v813 = vsub.s32 %v810, %v812
    %v814 = vrot.slane %v807, %v813
    %v815 = vcombine.low %v463, %v464
    %v817 = vunpack.c.l.s4 1983009808
    %v818 = vunpack.c.0.s8 %v817
    %v819 = vlaneseq
    %v820 = vshrl.u32 %v819, 7
    %v821 = vsub.s32 %v818, %v820
    %v822 = vrot.slane %v815, %v821
    %v823 = vcombine.low %v455, %v462
    %v825 = vunpack.c.l.s4 1983009808
    %v826 = vunpack.c.0.s8 %v825
    %v827 = vlaneseq
    %v828 = vshrl.u32 %v827, 7
    %v829 = vsub.s32 %v826, %v828
    %v830 = vrot.slane %v823, %v829
    %v831 = vcombine.low %v465, %v466
    %v833 = vunpack.c.l.s4 1983009808
    %v834 = vunpack.c.0.s8 %v833
    %v835 = vlaneseq
    %v836 = vshrl.u32 %v835, 7
    %v837 = vsub.s32 %v834, %v836
    %v838 = vrot.slane %v831, %v837
    %v839 = vcombine.low %v814, %v822
    %v840 = vcombine.high %v814, %v822
    %v842 = vunpack.c.l.s4 1934713408
    %v843 = vunpack.c.0.s8 %v842
    %v844 = vlaneseq
    %v845 = vshrl.u32 %v844, 7
    %v846 = vsub.s32 %v843, %v845
    %v847 = vrot.slane %v839, %v846
    %v849 = vunpack.c.l.s4 1934713408
    %v850 = vunpack.c.0.s8 %v849
    %v851 = vlaneseq
    %v852 = vshrl.u32 %v851, 7
    %v853 = vsub.s32 %v850, %v852
    %v854 = vrot.slane %v840, %v853
    %v855 = vcombine.low %v830, %v838
    %v856 = vcombine.high %v830, %v838
    %v858 = vunpack.c.l.s4 1934713408
    %v859 = vunpack.c.0.s8 %v858
    %v860 = vlaneseq
    %v861 = vshrl.u32 %v860, 7
    %v862 = vsub.s32 %v859, %v861
    %v863 = vrot.slane %v855, %v862
    %v865 = vunpack.c.l.s4 1934713408
    %v866 = vunpack.c.0.s8 %v865
    %v867 = vlaneseq
    %v868 = vshrl.u32 %v867, 7
    %v869 = vsub.s32 %v866, %v868
    %v870 = vrot.slane %v856, %v869
    %v871 = vcombine.low %v847, %v863
    %v872 = vcombine.high %v847, %v863
    %v873 = vcombine.low %v854, %v870
    %v874 = vcombine.high %v854, %v870
    %v875 = vcombine.low %v595, %v597
    %v876 = vcombine.high %v595, %v597
    %v878 = vunpack.c.l.s4 1983009808
    %v879 = vunpack.c.0.s8 %v878
    %v880 = vlaneseq
    %v881 = vshrl.u32 %v880, 7
    %v882 = vsub.s32 %v879, %v881
    %v883 = vrot.slane %v875, %v882
    %v885 = vunpack.c.l.s4 1983009808
    %v886 = vunpack.c.0.s8 %v885
    %v887 = vlaneseq
    %v888 = vshrl.u32 %v887, 7
    %v889 = vsub.s32 %v886, %v888
    %v890 = vrot.slane %v876, %v889
    %v891 = vcombine.low %v596, %v598
    %v892 = vcombine.high %v596, %v598
    %v894 = vunpack.c.l.s4 1983009808
    %v895 = vunpack.c.0.s8 %v894
    %v896 = vlaneseq
    %v897 = vshrl.u32 %v896, 7
    %v898 = vsub.s32 %v895, %v897
    %v899 = vrot.slane %v891, %v898
    %v901 = vunpack.c.l.s4 1983009808
    %v902 = vunpack.c.0.s8 %v901
    %v903 = vlaneseq
    %v904 = vshrl.u32 %v903, 7
    %v905 = vsub.s32 %v902, %v904
    %v906 = vrot.slane %v892, %v905
    %v907 = vcombine.low %v599, %v601
    %v908 = vcombine.high %v599, %v601
    %v910 = vunpack.c.l.s4 1983009808
    %v911 = vunpack.c.0.s8 %v910
    %v912 = vlaneseq
    %v913 = vshrl.u32 %v912, 7
    %v914 = vsub.s32 %v911, %v913
    %v915 = vrot.slane %v907, %v914
    %v917 = vunpack.c.l.s4 1983009808
    %v918 = vunpack.c.0.s8 %v917
    %v919 = vlaneseq
    %v920 = vshrl.u32 %v919, 7
    %v921 = vsub.s32 %v918, %v920
    %v922 = vrot.slane %v908, %v921
    %v923 = vcombine.low %v600, %v602
    %v924 = vcombine.high %v600, %v602
    %v926 = vunpack.c.l.s4 1983009808
    %v927 = vunpack.c.0.s8 %v926
    %v928 = vlaneseq
    %v929 = vshrl.u32 %v928, 7
    %v930 = vsub.s32 %v927, %v929
    %v931 = vrot.slane %v923, %v930
    %v933 = vunpack.c.l.s4 1983009808
    %v934 = vunpack.c.0.s8 %v933
    %v935 = vlaneseq
    %v936 = vshrl.u32 %v935, 7
    %v937 = vsub.s32 %v934, %v936
    %v938 = vrot.slane %v924, %v937
    %v939 = vcombine.low %v883, %v899
    %v940 = vcombine.high %v883, %v899
    %v942 = vunpack.c.l.s4 1934713408
    %v943 = vunpack.c.0.s8 %v942
    %v944 = vlaneseq
    %v945 = vshrl.u32 %v944, 7
    %v946 = vsub.s32 %v943, %v945
    %v947 = vrot.slane %v939, %v946
    %v949 = vunpack.c.l.s4 1934713408
    %v950 = vunpack.c.0.s8 %v949
    %v951 = vlaneseq
    %v952 = vshrl.u32 %v951, 7
    %v953 = vsub.s32 %v950, %v952
    %v954 = vrot.slane %v940, %v953
    %v955 = vcombine.low %v890, %v906
    %v956 = vcombine.high %v890, %v906
    %v958 = vunpack.c.l.s4 1934713408
    %v959 = vunpack.c.0.s8 %v958
    %v960 = vlaneseq
    %v961 = vshrl.u32 %v960, 7
    %v962 = vsub.s32 %v959, %v961
    %v963 = vrot.slane %v955, %v962
    %v965 = vunpack.c.l.s4 1934713408
    %v966 = vunpack.c.0.s8 %v965
    %v967 = vlaneseq
    %v968 = vshrl.u32 %v967, 7
    %v969 = vsub.s32 %v966, %v968
    %v970 = vrot.slane %v956, %v969
    %v971 = vcombine.low %v915, %v931
    %v972 = vcombine.high %v915, %v931
    %v974 = vunpack.c.l.s4 1934713408
    %v975 = vunpack.c.0.s8 %v974
    %v976 = vlaneseq
    %v977 = vshrl.u32 %v976, 7
    %v978 = vsub.s32 %v975, %v977
    %v979 = vrot.slane %v971, %v978
    %v981 = vunpack.c.l.s4 1934713408
    %v982 = vunpack.c.0.s8 %v981
    %v983 = vlaneseq
    %v984 = vshrl.u32 %v983, 7
    %v985 = vsub.s32 %v982, %v984
    %v986 = vrot.slane %v972, %v985
    %v987 = vcombine.low %v922, %v938
    %v988 = vcombine.high %v922, %v938
    %v990 = vunpack.c.l.s4 1934713408
    %v991 = vunpack.c.0.s8 %v990
    %v992 = vlaneseq
    %v993 = vshrl.u32 %v992, 7
    %v994 = vsub.s32 %v991, %v993
    %v995 = vrot.slane %v987, %v994
    %v997 = vunpack.c.l.s4 1934713408
    %v998 = vunpack.c.0.s8 %v997
    %v999 = vlaneseq
    %v1000 = vshrl.u32 %v999, 7
    %v1001 = vsub.s32 %v998, %v1000
    %v1002 = vrot.slane %v988, %v1001
    %v1003 = vcombine.low %v947, %v979
    %v1004 = vcombine.high %v947, %v979
    %v1005 = vcombine.low %v954, %v986
    %v1006 = vcombine.high %v954, %v986
    %v1007 = vcombine.low %v963, %v995
    %v1008 = vcombine.high %v963, %v995
    %v1009 = vcombine.low %v970, %v1002
    %v1010 = vcombine.high %v970, %v1002
    %v1011 = vcombine.low %v643, %v650
    %v1013 = vunpack.c.l.s4 1983009808
    %v1014 = vunpack.c.0.s8 %v1013
    %v1015 = vlaneseq
    %v1016 = vshrl.u32 %v1015, 7
    %v1017 = vsub.s32 %v1014, %v1016
    %v1018 = vrot.slane %v1011, %v1017
    %v1019 = vcombine.low %v667, %v668
    %v1021 = vunpack.c.l.s4 1983009808
    %v1022 = vunpack.c.0.s8 %v1021
    %v1023 = vlaneseq
    %v1024 = vshrl.u32 %v1023, 7
    %v1025 = vsub.s32 %v1022, %v1024
    %v1026 = vrot.slane %v1019, %v1025
    %v1027 = vcombine.low %v659, %v666
    %v1029 = vunpack.c.l.s4 1983009808
    %v1030 = vunpack.c.0.s8 %v1029
    %v1031 = vlaneseq
    %v1032 = vshrl.u32 %v1031, 7
    %v1033 = vsub.s32 %v1030, %v1032
    %v1034 = vrot.slane %v1027, %v1033
    %v1035 = vcombine.low %v669, %v670
    %v1037 = vunpack.c.l.s4 1983009808
    %v1038 = vunpack.c.0.s8 %v1037
    %v1039 = vlaneseq
    %v1040 = vshrl.u32 %v1039, 7
    %v1041 = vsub.s32 %v1038, %v1040
    %v1042 = vrot.slane %v1035, %v1041
    %v1043 = vcombine.low %v1018, %v1026
    %v1044 = vcombine.high %v1018, %v1026
    %v1046 = vunpack.c.l.s4 1934713408
    %v1047 = vunpack.c.0.s8 %v1046
    %v1048 = vlaneseq
    %v1049 = vshrl.u32 %v1048, 7
    %v1050 = vsub.s32 %v1047, %v1049
    %v1051 = vrot.slane %v1043, %v1050
    %v1053 = vunpack.c.l.s4 1934713408
    %v1054 = vunpack.c.0.s8 %v1053
    %v1055 = vlaneseq
    %v1056 = vshrl.u32 %v1055, 7
    %v1057 = vsub.s32 %v1054, %v1056
    %v1058 = vrot.slane %v1044, %v1057
    %v1059 = vcombine.low %v1034, %v1042
    %v1060 = vcombine.high %v1034, %v1042
    %v1062 = vunpack.c.l.s4 1934713408
    %v1063 = vunpack.c.0.s8 %v1062
    %v1064 = vlaneseq
    %v1065 = vshrl.u32 %v1064, 7
    %v1066 = vsub.s32 %v1063, %v1065
    %v1067 = vrot.slane %v1059, %v1066
    %v1069 = vunpack.c.l.s4 1934713408
    %v1070 = vunpack.c.0.s8 %v1069
    %v1071 = vlaneseq
    %v1072 = vshrl.u32 %v1071, 7
    %v1073 = vsub.s32 %v1070, %v1072
    %v1074 = vrot.slane %v1060, %v1073
    %v1075 = vcombine.low %v1051, %v1067
    %v1076 = vcombine.high %v1051, %v1067
    %v1077 = vcombine.low %v1058, %v1074
    %v1078 = vcombine.high %v1058, %v1074
    %v1079 = vpack.c.bf16 %v799, %v799
    %v1080 = vpack.c.bf16 %v800, %v800
    %v1081 = vpack.c.bf16 %v801, %v801
    %v1082 = vpack.c.bf16 %v802, %v802
    %v1083 = vpack.c.bf16 %v1003, %v1003
    %v1084 = vpack.c.bf16 %v1004, %v1004
    %v1085 = vpack.c.bf16 %v1005, %v1005
    %v1086 = vpack.c.bf16 %v1006, %v1006
    %v1087 = vpack.c.bf16 %v803, %v803
    %v1088 = vpack.c.bf16 %v804, %v804
    %v1089 = vpack.c.bf16 %v805, %v805
    %v1090 = vpack.c.bf16 %v806, %v806
    %v1091 = vpack.c.bf16 %v1007, %v1007
    %v1092 = vpack.c.bf16 %v1008, %v1008
    %v1093 = vpack.c.bf16 %v1009, %v1009
    %v1094 = vpack.c.bf16 %v1010, %v1010
    %v1095 = vlaneseq
    %v1096 = vshrl.u32 %v1095, 7
    %v1097 = vsub.s32 0, %v1096
    %v1098 = vrot.slane %v119, %v1097
    %v1099 = vlaneseq
    %v1100 = vshrl.u32 %v1099, 7
    %v1101 = vsub.s32 0, %v1100
    %v1102 = vrot.slane %v126, %v1101
    %vm1105 = vcmask 64512
    %v1107 = vsel %vm1105, %v1079, 0
    %v1110 = vsel %vm1105, %v1087, 0
    %1112 = vmatprep.subr.bf16.mxu0 0
    %1113 = vmatpush1.bf16.xpose.msra.mxu0 %v1110
    %1114 = vmatprep.subr.bf16.mxu0 0
    %1115 = vmatpush1.bf16.xpose.msra.mxu0 0
    %1116 = vmatprep.subr.bf16.mxu0 0
    %1117 = vmatpush1.bf16.xpose.msra.mxu0 0
    %1118 = vmatprep.subr.bf16.mxu0 0
    %1119 = vmatpush1.bf16.xpose.msra.mxu0 0
    %1120 = vmatprep.subr.bf16.mxu0 0
    %1121 = vmatpush1.bf16.xpose.msra.mxu0 0
    %1122 = vmatprep.subr.bf16.mxu0 0
    %1123 = vmatpush1.bf16.xpose.msra.mxu0 0
    %1124 = vmatprep.subr.bf16.mxu0 0
    %1125 = vmatpush1.bf16.xpose.msra.mxu0 0
    %1126 = vmatprep.subr.bf16.mxu0 0
    %1127 = vmatpush1.bf16.xpose.msra.mxu0 0
    %1128 = vmatprep.subr.bf16.mxu0 0
    %1129 = vmatpush1.bf16.xpose.msra.mxu0 0
    %1130 = vmatprep.subr.bf16.mxu0 0
    %1131 = vmatpush1.bf16.xpose.msra.mxu0 0
    %1132 = vmatprep.subr.bf16.mxu0 0
    %1133 = vmatpush1.bf16.xpose.msra.mxu0 0
    %1134 = vmatprep.subr.bf16.mxu0 0
    %1135 = vmatpush1.bf16.xpose.msra.mxu0 0
    %1136 = vmatprep.subr.bf16.mxu0 0
    %1137 = vmatpush1.bf16.xpose.msra.mxu0 0
    %1138 = vmatprep.subr.bf16.mxu0 0
    %1139 = vmatpush1.bf16.xpose.msra.mxu0 0
    %1140 = vmatprep.subr.bf16.mxu0 0
    %1141 = vmatpush1.bf16.xpose.msra.mxu0 0
    %1142 = vmatprep.subr.bf16.mxu0 0
    %1143 = vmatpush1.bf16.xpose.msra.mxu0 0
    %1144 = vmatprep.mubr.bf16.mxu0 0
    %1145 = vmatmul.mubr.bf16.gmra.mrb[0].mxu0 %v1107
    %v1146 = vpop.f32.mrb[0].mxu0
    %v1147 = vadd.f32 %v1098, %v1146
    %v1148 = vpop.f32.mrb[0].mxu0
    %v1149 = vpop.f32.mrb[0].mxu0
    %v1150 = vpop.f32.mrb[0].mxu0
    %1151 = vdwg.mxu0
    %v1153 = vsel %vm1105, %v1080, 0
    %v1156 = vsel %vm1105, %v1088, 0
    %1158 = vmatprep.subr.bf16.mxu0 0
    %1159 = vmatpush1.bf16.xpose.msra.mxu0 %v1156
    %1160 = vmatprep.subr.bf16.mxu0 0
    %1161 = vmatpush1.bf16.xpose.msra.mxu0 0
    %1162 = vmatprep.subr.bf16.mxu0 0
    %1163 = vmatpush1.bf16.xpose.msra.mxu0 0
    %1164 = vmatprep.subr.bf16.mxu0 0
    %1165 = vmatpush1.bf16.xpose.msra.mxu0 0
    %1166 = vmatprep.subr.bf16.mxu0 0
    %1167 = vmatpush1.bf16.xpose.msra.mxu0 0
    %1168 = vmatprep.subr.bf16.mxu0 0
    %1169 = vmatpush1.bf16.xpose.msra.mxu0 0
    %1170 = vmatprep.subr.bf16.mxu0 0
    %1171 = vmatpush1.bf16.xpose.msra.mxu0 0
    %1172 = vmatprep.subr.bf16.mxu0 0
    %1173 = vmatpush1.bf16.xpose.msra.mxu0 0
    %1174 = vmatprep.subr.bf16.mxu0 0
    %1175 = vmatpush1.bf16.xpose.msra.mxu0 0
    %1176 = vmatprep.subr.bf16.mxu0 0
    %1177 = vmatpush1.bf16.xpose.msra.mxu0 0
    %1178 = vmatprep.subr.bf16.mxu0 0
    %1179 = vmatpush1.bf16.xpose.msra.mxu0 0
    %1180 = vmatprep.subr.bf16.mxu0 0
    %1181 = vmatpush1.bf16.xpose.msra.mxu0 0
    %1182 = vmatprep.subr.bf16.mxu0 0
    %1183 = vmatpush1.bf16.xpose.msra.mxu0 0
    %1184 = vmatprep.subr.bf16.mxu0 0
    %1185 = vmatpush1.bf16.xpose.msra.mxu0 0
    %1186 = vmatprep.subr.bf16.mxu0 0
    %1187 = vmatpush1.bf16.xpose.msra.mxu0 0
    %1188 = vmatprep.subr.bf16.mxu0 0
    %1189 = vmatpush1.bf16.xpose.msra.mxu0 0
    %1190 = vmatprep.mubr.bf16.mxu0 0
    %1191 = vmatmul.mubr.bf16.gmra.mrb[0].mxu0 %v1153
    %v1192 = vpop.f32.mrb[0].mxu0
    %v1193 = vadd.f32 %v1098, %v1192
    %v1194 = vpop.f32.mrb[0].mxu0
    %v1195 = vpop.f32.mrb[0].mxu0
    %v1196 = vpop.f32.mrb[0].mxu0
    %1197 = vdwg.mxu0
    %v1199 = vsel %vm1105, %v1081, 0
    %v1202 = vsel %vm1105, %v1089, 0
    %1204 = vmatprep.subr.bf16.mxu0 0
    %1205 = vmatpush1.bf16.xpose.msra.mxu0 %v1202
    %1206 = vmatprep.subr.bf16.mxu0 0
    %1207 = vmatpush1.bf16.xpose.msra.mxu0 0
    %1208 = vmatprep.subr.bf16.mxu0 0
    %1209 = vmatpush1.bf16.xpose.msra.mxu0 0
    %1210 = vmatprep.subr.bf16.mxu0 0
    %1211 = vmatpush1.bf16.xpose.msra.mxu0 0
    %1212 = vmatprep.subr.bf16.mxu0 0
    %1213 = vmatpush1.bf16.xpose.msra.mxu0 0
    %1214 = vmatprep.subr.bf16.mxu0 0
    %1215 = vmatpush1.bf16.xpose.msra.mxu0 0
    %1216 = vmatprep.subr.bf16.mxu0 0
    %1217 = vmatpush1.bf16.xpose.msra.mxu0 0
    %1218 = vmatprep.subr.bf16.mxu0 0
    %1219 = vmatpush1.bf16.xpose.msra.mxu0 0
    %1220 = vmatprep.subr.bf16.mxu0 0
    %1221 = vmatpush1.bf16.xpose.msra.mxu0 0
    %1222 = vmatprep.subr.bf16.mxu0 0
    %1223 = vmatpush1.bf16.xpose.msra.mxu0 0
    %1224 = vmatprep.subr.bf16.mxu0 0
    %1225 = vmatpush1.bf16.xpose.msra.mxu0 0
    %1226 = vmatprep.subr.bf16.mxu0 0
    %1227 = vmatpush1.bf16.xpose.msra.mxu0 0
    %1228 = vmatprep.subr.bf16.mxu0 0
    %1229 = vmatpush1.bf16.xpose.msra.mxu0 0
    %1230 = vmatprep.subr.bf16.mxu0 0
    %1231 = vmatpush1.bf16.xpose.msra.mxu0 0
    %1232 = vmatprep.subr.bf16.mxu0 0
    %1233 = vmatpush1.bf16.xpose.msra.mxu0 0
    %1234 = vmatprep.subr.bf16.mxu0 0
    %1235 = vmatpush1.bf16.xpose.msra.mxu0 0
    %1236 = vmatprep.mubr.bf16.mxu0 0
    %1237 = vmatmul.mubr.bf16.gmra.mrb[0].mxu0 %v1199
    %v1238 = vpop.f32.mrb[0].mxu0
    %v1239 = vadd.f32 %v1098, %v1238
    %v1240 = vpop.f32.mrb[0].mxu0
    %v1241 = vpop.f32.mrb[0].mxu0
    %v1242 = vpop.f32.mrb[0].mxu0
    %1243 = vdwg.mxu0
    %v1245 = vsel %vm1105, %v1082, 0
    %v1248 = vsel %vm1105, %v1090, 0
    %1250 = vmatprep.subr.bf16.mxu0 0
    %1251 = vmatpush1.bf16.xpose.msra.mxu0 %v1248
    %1252 = vmatprep.subr.bf16.mxu0 0
    %1253 = vmatpush1.bf16.xpose.msra.mxu0 0
    %1254 = vmatprep.subr.bf16.mxu0 0
    %1255 = vmatpush1.bf16.xpose.msra.mxu0 0
    %1256 = vmatprep.subr.bf16.mxu0 0
    %1257 = vmatpush1.bf16.xpose.msra.mxu0 0
    %1258 = vmatprep.subr.bf16.mxu0 0
    %1259 = vmatpush1.bf16.xpose.msra.mxu0 0
    %1260 = vmatprep.subr.bf16.mxu0 0
    %1261 = vmatpush1.bf16.xpose.msra.mxu0 0
    %1262 = vmatprep.subr.bf16.mxu0 0
    %1263 = vmatpush1.bf16.xpose.msra.mxu0 0
    %1264 = vmatprep.subr.bf16.mxu0 0
    %1265 = vmatpush1.bf16.xpose.msra.mxu0 0
    %1266 = vmatprep.subr.bf16.mxu0 0
    %1267 = vmatpush1.bf16.xpose.msra.mxu0 0
    %1268 = vmatprep.subr.bf16.mxu0 0
    %1269 = vmatpush1.bf16.xpose.msra.mxu0 0
    %1270 = vmatprep.subr.bf16.mxu0 0
    %1271 = vmatpush1.bf16.xpose.msra.mxu0 0
    %1272 = vmatprep.subr.bf16.mxu0 0
    %1273 = vmatpush1.bf16.xpose.msra.mxu0 0
    %1274 = vmatprep.subr.bf16.mxu0 0
    %1275 = vmatpush1.bf16.xpose.msra.mxu0 0
    %1276 = vmatprep.subr.bf16.mxu0 0
    %1277 = vmatpush1.bf16.xpose.msra.mxu0 0
    %1278 = vmatprep.subr.bf16.mxu0 0
    %1279 = vmatpush1.bf16.xpose.msra.mxu0 0
    %1280 = vmatprep.subr.bf16.mxu0 0
    %1281 = vmatpush1.bf16.xpose.msra.mxu0 0
    %1282 = vmatprep.mubr.bf16.mxu0 0
    %1283 = vmatmul.mubr.bf16.gmra.mrb[0].mxu0 %v1245
    %v1284 = vpop.f32.mrb[0].mxu0
    %v1285 = vadd.f32 %v1098, %v1284
    %v1286 = vpop.f32.mrb[0].mxu0
    %v1287 = vpop.f32.mrb[0].mxu0
    %v1288 = vpop.f32.mrb[0].mxu0
    %1289 = vdwg.mxu0
    %v1291 = vsel %vm1105, %v1083, 0
    %v1294 = vsel %vm1105, %v1091, 0
    %1296 = vmatprep.subr.bf16.mxu0 0
    %1297 = vmatpush1.bf16.xpose.msra.mxu0 %v1294
    %1298 = vmatprep.subr.bf16.mxu0 0
    %1299 = vmatpush1.bf16.xpose.msra.mxu0 0
    %1300 = vmatprep.subr.bf16.mxu0 0
    %1301 = vmatpush1.bf16.xpose.msra.mxu0 0
    %1302 = vmatprep.subr.bf16.mxu0 0
    %1303 = vmatpush1.bf16.xpose.msra.mxu0 0
    %1304 = vmatprep.subr.bf16.mxu0 0
    %1305 = vmatpush1.bf16.xpose.msra.mxu0 0
    %1306 = vmatprep.subr.bf16.mxu0 0
    %1307 = vmatpush1.bf16.xpose.msra.mxu0 0
    %1308 = vmatprep.subr.bf16.mxu0 0
    %1309 = vmatpush1.bf16.xpose.msra.mxu0 0
    %1310 = vmatprep.subr.bf16.mxu0 0
    %1311 = vmatpush1.bf16.xpose.msra.mxu0 0
    %1312 = vmatprep.subr.bf16.mxu0 0
    %1313 = vmatpush1.bf16.xpose.msra.mxu0 0
    %1314 = vmatprep.subr.bf16.mxu0 0
    %1315 = vmatpush1.bf16.xpose.msra.mxu0 0
    %1316 = vmatprep.subr.bf16.mxu0 0
    %1317 = vmatpush1.bf16.xpose.msra.mxu0 0
    %1318 = vmatprep.subr.bf16.mxu0 0
    %1319 = vmatpush1.bf16.xpose.msra.mxu0 0
    %1320 = vmatprep.subr.bf16.mxu0 0
    %1321 = vmatpush1.bf16.xpose.msra.mxu0 0
    %1322 = vmatprep.subr.bf16.mxu0 0
    %1323 = vmatpush1.bf16.xpose.msra.mxu0 0
    %1324 = vmatprep.subr.bf16.mxu0 0
    %1325 = vmatpush1.bf16.xpose.msra.mxu0 0
    %1326 = vmatprep.subr.bf16.mxu0 0
    %1327 = vmatpush1.bf16.xpose.msra.mxu0 0
    %1328 = vmatprep.mubr.bf16.mxu0 0
    %1329 = vmatmul.mubr.bf16.gmra.mrb[0].mxu0 %v1291
    %v1330 = vpop.f32.mrb[0].mxu0
    %v1331 = vadd.f32 %v1102, %v1330
    %v1332 = vpop.f32.mrb[0].mxu0
    %v1333 = vpop.f32.mrb[0].mxu0
    %v1334 = vpop.f32.mrb[0].mxu0
    %1335 = vdwg.mxu0
    %v1337 = vsel %vm1105, %v1084, 0
    %v1340 = vsel %vm1105, %v1092, 0
    %1342 = vmatprep.subr.bf16.mxu0 0
    %1343 = vmatpush1.bf16.xpose.msra.mxu0 %v1340
    %1344 = vmatprep.subr.bf16.mxu0 0
    %1345 = vmatpush1.bf16.xpose.msra.mxu0 0
    %1346 = vmatprep.subr.bf16.mxu0 0
    %1347 = vmatpush1.bf16.xpose.msra.mxu0 0
    %1348 = vmatprep.subr.bf16.mxu0 0
    %1349 = vmatpush1.bf16.xpose.msra.mxu0 0
    %1350 = vmatprep.subr.bf16.mxu0 0
    %1351 = vmatpush1.bf16.xpose.msra.mxu0 0
    %1352 = vmatprep.subr.bf16.mxu0 0
    %1353 = vmatpush1.bf16.xpose.msra.mxu0 0
    %1354 = vmatprep.subr.bf16.mxu0 0
    %1355 = vmatpush1.bf16.xpose.msra.mxu0 0
    %1356 = vmatprep.subr.bf16.mxu0 0
    %1357 = vmatpush1.bf16.xpose.msra.mxu0 0
    %1358 = vmatprep.subr.bf16.mxu0 0
    %1359 = vmatpush1.bf16.xpose.msra.mxu0 0
    %1360 = vmatprep.subr.bf16.mxu0 0
    %1361 = vmatpush1.bf16.xpose.msra.mxu0 0
    %1362 = vmatprep.subr.bf16.mxu0 0
    %1363 = vmatpush1.bf16.xpose.msra.mxu0 0
    %1364 = vmatprep.subr.bf16.mxu0 0
    %1365 = vmatpush1.bf16.xpose.msra.mxu0 0
    %1366 = vmatprep.subr.bf16.mxu0 0
    %1367 = vmatpush1.bf16.xpose.msra.mxu0 0
    %1368 = vmatprep.subr.bf16.mxu0 0
    %1369 = vmatpush1.bf16.xpose.msra.mxu0 0
    %1370 = vmatprep.subr.bf16.mxu0 0
    %1371 = vmatpush1.bf16.xpose.msra.mxu0 0
    %1372 = vmatprep.subr.bf16.mxu0 0
    %1373 = vmatpush1.bf16.xpose.msra.mxu0 0
    %1374 = vmatprep.mubr.bf16.mxu0 0
    %1375 = vmatmul.mubr.bf16.gmra.mrb[0].mxu0 %v1337
    %v1376 = vpop.f32.mrb[0].mxu0
    %v1377 = vadd.f32 %v1102, %v1376
    %v1378 = vpop.f32.mrb[0].mxu0
    %v1379 = vpop.f32.mrb[0].mxu0
    %v1380 = vpop.f32.mrb[0].mxu0
    %1381 = vdwg.mxu0
    %v1383 = vsel %vm1105, %v1085, 0
    %v1386 = vsel %vm1105, %v1093, 0
    %1388 = vmatprep.subr.bf16.mxu0 0
    %1389 = vmatpush1.bf16.xpose.msra.mxu0 %v1386
    %1390 = vmatprep.subr.bf16.mxu0 0
    %1391 = vmatpush1.bf16.xpose.msra.mxu0 0
    %1392 = vmatprep.subr.bf16.mxu0 0
    %1393 = vmatpush1.bf16.xpose.msra.mxu0 0
    %1394 = vmatprep.subr.bf16.mxu0 0
    %1395 = vmatpush1.bf16.xpose.msra.mxu0 0
    %1396 = vmatprep.subr.bf16.mxu0 0
    %1397 = vmatpush1.bf16.xpose.msra.mxu0 0
    %1398 = vmatprep.subr.bf16.mxu0 0
    %1399 = vmatpush1.bf16.xpose.msra.mxu0 0
    %1400 = vmatprep.subr.bf16.mxu0 0
    %1401 = vmatpush1.bf16.xpose.msra.mxu0 0
    %1402 = vmatprep.subr.bf16.mxu0 0
    %1403 = vmatpush1.bf16.xpose.msra.mxu0 0
    %1404 = vmatprep.subr.bf16.mxu0 0
    %1405 = vmatpush1.bf16.xpose.msra.mxu0 0
    %1406 = vmatprep.subr.bf16.mxu0 0
    %1407 = vmatpush1.bf16.xpose.msra.mxu0 0
    %1408 = vmatprep.subr.bf16.mxu0 0
    %1409 = vmatpush1.bf16.xpose.msra.mxu0 0
    %1410 = vmatprep.subr.bf16.mxu0 0
    %1411 = vmatpush1.bf16.xpose.msra.mxu0 0
    %1412 = vmatprep.subr.bf16.mxu0 0
    %1413 = vmatpush1.bf16.xpose.msra.mxu0 0
    %1414 = vmatprep.subr.bf16.mxu0 0
    %1415 = vmatpush1.bf16.xpose.msra.mxu0 0
    %1416 = vmatprep.subr.bf16.mxu0 0
    %1417 = vmatpush1.bf16.xpose.msra.mxu0 0
    %1418 = vmatprep.subr.bf16.mxu0 0
    %1419 = vmatpush1.bf16.xpose.msra.mxu0 0
    %1420 = vmatprep.mubr.bf16.mxu0 0
    %1421 = vmatmul.mubr.bf16.gmra.mrb[0].mxu0 %v1383
    %v1422 = vpop.f32.mrb[0].mxu0
    %v1423 = vadd.f32 %v1102, %v1422
    %v1424 = vpop.f32.mrb[0].mxu0
    %v1425 = vpop.f32.mrb[0].mxu0
    %v1426 = vpop.f32.mrb[0].mxu0
    %1427 = vdwg.mxu0
    %v1429 = vsel %vm1105, %v1086, 0
    %v1432 = vsel %vm1105, %v1094, 0
    %1434 = vmatprep.subr.bf16.mxu0 0
    %1435 = vmatpush1.bf16.xpose.msra.mxu0 %v1432
    %1436 = vmatprep.subr.bf16.mxu0 0
    %1437 = vmatpush1.bf16.xpose.msra.mxu0 0
    %1438 = vmatprep.subr.bf16.mxu0 0
    %1439 = vmatpush1.bf16.xpose.msra.mxu0 0
    %1440 = vmatprep.subr.bf16.mxu0 0
    %1441 = vmatpush1.bf16.xpose.msra.mxu0 0
    %1442 = vmatprep.subr.bf16.mxu0 0
    %1443 = vmatpush1.bf16.xpose.msra.mxu0 0
    %1444 = vmatprep.subr.bf16.mxu0 0
    %1445 = vmatpush1.bf16.xpose.msra.mxu0 0
    %1446 = vmatprep.subr.bf16.mxu0 0
    %1447 = vmatpush1.bf16.xpose.msra.mxu0 0
    %1448 = vmatprep.subr.bf16.mxu0 0
    %1449 = vmatpush1.bf16.xpose.msra.mxu0 0
    %1450 = vmatprep.subr.bf16.mxu0 0
    %1451 = vmatpush1.bf16.xpose.msra.mxu0 0
    %1452 = vmatprep.subr.bf16.mxu0 0
    %1453 = vmatpush1.bf16.xpose.msra.mxu0 0
    %1454 = vmatprep.subr.bf16.mxu0 0
    %1455 = vmatpush1.bf16.xpose.msra.mxu0 0
    %1456 = vmatprep.subr.bf16.mxu0 0
    %1457 = vmatpush1.bf16.xpose.msra.mxu0 0
    %1458 = vmatprep.subr.bf16.mxu0 0
    %1459 = vmatpush1.bf16.xpose.msra.mxu0 0
    %1460 = vmatprep.subr.bf16.mxu0 0
    %1461 = vmatpush1.bf16.xpose.msra.mxu0 0
    %1462 = vmatprep.subr.bf16.mxu0 0
    %1463 = vmatpush1.bf16.xpose.msra.mxu0 0
    %1464 = vmatprep.subr.bf16.mxu0 0
    %1465 = vmatpush1.bf16.xpose.msra.mxu0 0
    %1466 = vmatprep.mubr.bf16.mxu0 0
    %1467 = vmatmul.mubr.bf16.gmra.mrb[0].mxu0 %v1429
    %v1468 = vpop.f32.mrb[0].mxu0
    %v1469 = vadd.f32 %v1102, %v1468
    %v1470 = vpop.f32.mrb[0].mxu0
    %v1471 = vpop.f32.mrb[0].mxu0
    %v1472 = vpop.f32.mrb[0].mxu0
    %1473 = vdwg.mxu0
    %v1474 = vsel %vm1105, %v1147, -inf
    %1475 = vmax.xlane.f32.xlu0 %v1474
    %v1476 = vpop.xlane.xlu0 %1475
    %v1477 = vsel %vm1105, %v1193, -inf
    %1478 = vmax.xlane.f32.xlu0 %v1477
    %v1479 = vpop.xlane.xlu0 %1478
    %v1480 = vsel %vm1105, %v1239, -inf
    %1481 = vmax.xlane.f32.xlu0 %v1480
    %v1482 = vpop.xlane.xlu0 %1481
    %v1483 = vsel %vm1105, %v1285, -inf
    %1484 = vmax.xlane.f32.xlu0 %v1483
    %v1485 = vpop.xlane.xlu0 %1484
    %v1486 = vsel %vm1105, %v1331, -inf
    %1487 = vmax.xlane.f32.xlu0 %v1486
    %v1488 = vpop.xlane.xlu0 %1487
    %v1489 = vsel %vm1105, %v1377, -inf
    %1490 = vmax.xlane.f32.xlu0 %v1489
    %v1491 = vpop.xlane.xlu0 %1490
    %v1492 = vsel %vm1105, %v1423, -inf
    %1493 = vmax.xlane.f32.xlu0 %v1492
    %v1494 = vpop.xlane.xlu0 %1493
    %v1495 = vsel %vm1105, %v1469, -inf
    %1496 = vmax.xlane.f32.xlu0 %v1495
    %v1497 = vpop.xlane.xlu0 %1496
    %v1498 = vsub.f32 %v1147, %v1476
    %v1499 = vsub.f32 %v1193, %v1479
    %v1500 = vsub.f32 %v1239, %v1482
    %v1501 = vsub.f32 %v1285, %v1485
    %v1502 = vsub.f32 %v1331, %v1488
    %v1503 = vsub.f32 %v1377, %v1491
    %v1504 = vsub.f32 %v1423, %v1494
    %v1505 = vsub.f32 %v1469, %v1497
    %v1506 = vmul.f32 %v1498, 1.442695
    %v1507 = vpow.pop %v1506
    %v1508 = vmul.f32 %v1499, 1.442695
    %v1509 = vpow.pop %v1508
    %v1510 = vmul.f32 %v1500, 1.442695
    %v1511 = vpow.pop %v1510
    %v1512 = vmul.f32 %v1501, 1.442695
    %v1513 = vpow.pop %v1512
    %v1514 = vmul.f32 %v1502, 1.442695
    %v1515 = vpow.pop %v1514
    %v1516 = vmul.f32 %v1503, 1.442695
    %v1517 = vpow.pop %v1516
    %v1518 = vmul.f32 %v1504, 1.442695
    %v1519 = vpow.pop %v1518
    %v1520 = vmul.f32 %v1505, 1.442695
    %v1521 = vpow.pop %v1520
    %v1522 = vsel %vm1105, %v1507, 0.0
    %1523 = vadd.xlane.f32.xlu0 %v1522
    %v1524 = vpop.xlane.xlu0 %1523
    %v1525 = vsel %vm1105, %v1509, 0.0
    %1526 = vadd.xlane.f32.xlu0 %v1525
    %v1527 = vpop.xlane.xlu0 %1526
    %v1528 = vsel %vm1105, %v1511, 0.0
    %1529 = vadd.xlane.f32.xlu0 %v1528
    %v1530 = vpop.xlane.xlu0 %1529
    %v1531 = vsel %vm1105, %v1513, 0.0
    %1532 = vadd.xlane.f32.xlu0 %v1531
    %v1533 = vpop.xlane.xlu0 %1532
    %v1534 = vsel %vm1105, %v1515, 0.0
    %1535 = vadd.xlane.f32.xlu0 %v1534
    %v1536 = vpop.xlane.xlu0 %1535
    %v1537 = vsel %vm1105, %v1517, 0.0
    %1538 = vadd.xlane.f32.xlu0 %v1537
    %v1539 = vpop.xlane.xlu0 %1538
    %v1540 = vsel %vm1105, %v1519, 0.0
    %1541 = vadd.xlane.f32.xlu0 %v1540
    %v1542 = vpop.xlane.xlu0 %1541
    %v1543 = vsel %vm1105, %v1521, 0.0
    %1544 = vadd.xlane.f32.xlu0 %v1543
    %v1545 = vpop.xlane.xlu0 %1544
    %v1546 = vpack.c.bf16 %v1507, %v1507
    %v1547 = vpack.c.bf16 %v1509, %v1509
    %v1548 = vpack.c.bf16 %v1511, %v1511
    %v1549 = vpack.c.bf16 %v1513, %v1513
    %v1550 = vpack.c.bf16 %v1515, %v1515
    %v1551 = vpack.c.bf16 %v1517, %v1517
    %v1552 = vpack.c.bf16 %v1519, %v1519
    %v1553 = vpack.c.bf16 %v1521, %v1521
    %v1554 = vpack.c.bf16 %v871, %v871
    %v1555 = vpack.c.bf16 %v872, %v872
    %v1556 = vpack.c.bf16 %v873, %v873
    %v1557 = vpack.c.bf16 %v874, %v874
    %v1558 = vpack.c.bf16 %v1075, %v1075
    %v1559 = vpack.c.bf16 %v1076, %v1076
    %v1560 = vpack.c.bf16 %v1077, %v1077
    %v1561 = vpack.c.bf16 %v1078, %v1078
    %v1563 = vsel %vm1105, %v1546, 0
    %vm1565 = vcmask 1043456
    %v1567 = vsel %vm1565, %v1554, 0
    %1569 = vmatprep.subr.bf16.mxu0 0
    %1570 = vmatpush1.bf16.msra.mxu0 %v1567
    %1571 = vmatprep.subr.bf16.mxu0 0
    %1572 = vmatpush1.bf16.msra.mxu0 0
    %1573 = vmatprep.subr.bf16.mxu0 0
    %1574 = vmatpush1.bf16.msra.mxu0 0
    %1575 = vmatprep.subr.bf16.mxu0 0
    %1576 = vmatpush1.bf16.msra.mxu0 0
    %1577 = vmatprep.subr.bf16.mxu0 0
    %1578 = vmatpush1.bf16.msra.mxu0 0
    %1579 = vmatprep.subr.bf16.mxu0 0
    %1580 = vmatpush1.bf16.msra.mxu0 0
    %1581 = vmatprep.subr.bf16.mxu0 0
    %1582 = vmatpush1.bf16.msra.mxu0 0
    %1583 = vmatprep.subr.bf16.mxu0 0
    %1584 = vmatpush1.bf16.msra.mxu0 0
    %1585 = vmatprep.subr.bf16.mxu0 0
    %1586 = vmatpush1.bf16.msra.mxu0 0
    %1587 = vmatprep.subr.bf16.mxu0 0
    %1588 = vmatpush1.bf16.msra.mxu0 0
    %1589 = vmatprep.subr.bf16.mxu0 0
    %1590 = vmatpush1.bf16.msra.mxu0 0
    %1591 = vmatprep.subr.bf16.mxu0 0
    %1592 = vmatpush1.bf16.msra.mxu0 0
    %1593 = vmatprep.subr.bf16.mxu0 0
    %1594 = vmatpush1.bf16.msra.mxu0 0
    %1595 = vmatprep.subr.bf16.mxu0 0
    %1596 = vmatpush1.bf16.msra.mxu0 0
    %1597 = vmatprep.subr.bf16.mxu0 0
    %1598 = vmatpush1.bf16.msra.mxu0 0
    %1599 = vmatprep.subr.bf16.mxu0 0
    %1600 = vmatpush1.bf16.msra.mxu0 0
    %1601 = vmatprep.mubr.bf16.mxu0 0
    %1602 = vmatmul.mubr.bf16.gmra.mrb[0].mxu0 %v1563
    %v1603 = vpop.f32.mrb[0].mxu0
    %v1604 = vadd.f32 0.0, %v1603
    %v1605 = vpop.f32.mrb[0].mxu0
    %v1606 = vpop.f32.mrb[0].mxu0
    %v1607 = vpop.f32.mrb[0].mxu0
    %1608 = vdwg.mxu0
    %v1610 = vsel %vm1105, %v1547, 0
    %v1613 = vsel %vm1565, %v1555, 0
    %1615 = vmatprep.subr.bf16.mxu0 0
    %1616 = vmatpush1.bf16.msra.mxu0 %v1613
    %1617 = vmatprep.subr.bf16.mxu0 0
    %1618 = vmatpush1.bf16.msra.mxu0 0
    %1619 = vmatprep.subr.bf16.mxu0 0
    %1620 = vmatpush1.bf16.msra.mxu0 0
    %1621 = vmatprep.subr.bf16.mxu0 0
    %1622 = vmatpush1.bf16.msra.mxu0 0
    %1623 = vmatprep.subr.bf16.mxu0 0
    %1624 = vmatpush1.bf16.msra.mxu0 0
    %1625 = vmatprep.subr.bf16.mxu0 0
    %1626 = vmatpush1.bf16.msra.mxu0 0
    %1627 = vmatprep.subr.bf16.mxu0 0
    %1628 = vmatpush1.bf16.msra.mxu0 0
    %1629 = vmatprep.subr.bf16.mxu0 0
    %1630 = vmatpush1.bf16.msra.mxu0 0
    %1631 = vmatprep.subr.bf16.mxu0 0
    %1632 = vmatpush1.bf16.msra.mxu0 0
    %1633 = vmatprep.subr.bf16.mxu0 0
    %1634 = vmatpush1.bf16.msra.mxu0 0
    %1635 = vmatprep.subr.bf16.mxu0 0
    %1636 = vmatpush1.bf16.msra.mxu0 0
    %1637 = vmatprep.subr.bf16.mxu0 0
    %1638 = vmatpush1.bf16.msra.mxu0 0
    %1639 = vmatprep.subr.bf16.mxu0 0
    %1640 = vmatpush1.bf16.msra.mxu0 0
    %1641 = vmatprep.subr.bf16.mxu0 0
    %1642 = vmatpush1.bf16.msra.mxu0 0
    %1643 = vmatprep.subr.bf16.mxu0 0
    %1644 = vmatpush1.bf16.msra.mxu0 0
    %1645 = vmatprep.subr.bf16.mxu0 0
    %1646 = vmatpush1.bf16.msra.mxu0 0
    %1647 = vmatprep.mubr.bf16.mxu0 0
    %1648 = vmatmul.mubr.bf16.gmra.mrb[0].mxu0 %v1610
    %v1649 = vpop.f32.mrb[0].mxu0
    %v1650 = vadd.f32 0.0, %v1649
    %v1651 = vpop.f32.mrb[0].mxu0
    %v1652 = vpop.f32.mrb[0].mxu0
    %v1653 = vpop.f32.mrb[0].mxu0
    %1654 = vdwg.mxu0
    %v1656 = vsel %vm1105, %v1548, 0
    %v1659 = vsel %vm1565, %v1556, 0
    %1661 = vmatprep.subr.bf16.mxu0 0
    %1662 = vmatpush1.bf16.msra.mxu0 %v1659
    %1663 = vmatprep.subr.bf16.mxu0 0
    %1664 = vmatpush1.bf16.msra.mxu0 0
    %1665 = vmatprep.subr.bf16.mxu0 0
    %1666 = vmatpush1.bf16.msra.mxu0 0
    %1667 = vmatprep.subr.bf16.mxu0 0
    %1668 = vmatpush1.bf16.msra.mxu0 0
    %1669 = vmatprep.subr.bf16.mxu0 0
    %1670 = vmatpush1.bf16.msra.mxu0 0
    %1671 = vmatprep.subr.bf16.mxu0 0
    %1672 = vmatpush1.bf16.msra.mxu0 0
    %1673 = vmatprep.subr.bf16.mxu0 0
    %1674 = vmatpush1.bf16.msra.mxu0 0
    %1675 = vmatprep.subr.bf16.mxu0 0
    %1676 = vmatpush1.bf16.msra.mxu0 0
    %1677 = vmatprep.subr.bf16.mxu0 0
    %1678 = vmatpush1.bf16.msra.mxu0 0
    %1679 = vmatprep.subr.bf16.mxu0 0
    %1680 = vmatpush1.bf16.msra.mxu0 0
    %1681 = vmatprep.subr.bf16.mxu0 0
    %1682 = vmatpush1.bf16.msra.mxu0 0
    %1683 = vmatprep.subr.bf16.mxu0 0
    %1684 = vmatpush1.bf16.msra.mxu0 0
    %1685 = vmatprep.subr.bf16.mxu0 0
    %1686 = vmatpush1.bf16.msra.mxu0 0
    %1687 = vmatprep.subr.bf16.mxu0 0
    %1688 = vmatpush1.bf16.msra.mxu0 0
    %1689 = vmatprep.subr.bf16.mxu0 0
    %1690 = vmatpush1.bf16.msra.mxu0 0
    %1691 = vmatprep.subr.bf16.mxu0 0
    %1692 = vmatpush1.bf16.msra.mxu0 0
    %1693 = vmatprep.mubr.bf16.mxu0 0
    %1694 = vmatmul.mubr.bf16.gmra.mrb[0].mxu0 %v1656
    %v1695 = vpop.f32.mrb[0].mxu0
    %v1696 = vadd.f32 0.0, %v1695
    %v1697 = vpop.f32.mrb[0].mxu0
    %v1698 = vpop.f32.mrb[0].mxu0
    %v1699 = vpop.f32.mrb[0].mxu0
    %1700 = vdwg.mxu0
    %v1702 = vsel %vm1105, %v1549, 0
    %v1705 = vsel %vm1565, %v1557, 0
    %1707 = vmatprep.subr.bf16.mxu0 0
    %1708 = vmatpush1.bf16.msra.mxu0 %v1705
    %1709 = vmatprep.subr.bf16.mxu0 0
    %1710 = vmatpush1.bf16.msra.mxu0 0
    %1711 = vmatprep.subr.bf16.mxu0 0
    %1712 = vmatpush1.bf16.msra.mxu0 0
    %1713 = vmatprep.subr.bf16.mxu0 0
    %1714 = vmatpush1.bf16.msra.mxu0 0
    %1715 = vmatprep.subr.bf16.mxu0 0
    %1716 = vmatpush1.bf16.msra.mxu0 0
    %1717 = vmatprep.subr.bf16.mxu0 0
    %1718 = vmatpush1.bf16.msra.mxu0 0
    %1719 = vmatprep.subr.bf16.mxu0 0
    %1720 = vmatpush1.bf16.msra.mxu0 0
    %1721 = vmatprep.subr.bf16.mxu0 0
    %1722 = vmatpush1.bf16.msra.mxu0 0
    %1723 = vmatprep.subr.bf16.mxu0 0
    %1724 = vmatpush1.bf16.msra.mxu0 0
    %1725 = vmatprep.subr.bf16.mxu0 0
    %1726 = vmatpush1.bf16.msra.mxu0 0
    %1727 = vmatprep.subr.bf16.mxu0 0
    %1728 = vmatpush1.bf16.msra.mxu0 0
    %1729 = vmatprep.subr.bf16.mxu0 0
    %1730 = vmatpush1.bf16.msra.mxu0 0
    %1731 = vmatprep.subr.bf16.mxu0 0
    %1732 = vmatpush1.bf16.msra.mxu0 0
    %1733 = vmatprep.subr.bf16.mxu0 0
    %1734 = vmatpush1.bf16.msra.mxu0 0
    %1735 = vmatprep.subr.bf16.mxu0 0
    %1736 = vmatpush1.bf16.msra.mxu0 0
    %1737 = vmatprep.subr.bf16.mxu0 0
    %1738 = vmatpush1.bf16.msra.mxu0 0
    %1739 = vmatprep.mubr.bf16.mxu0 0
    %1740 = vmatmul.mubr.bf16.gmra.mrb[0].mxu0 %v1702
    %v1741 = vpop.f32.mrb[0].mxu0
    %v1742 = vadd.f32 0.0, %v1741
    %v1743 = vpop.f32.mrb[0].mxu0
    %v1744 = vpop.f32.mrb[0].mxu0
    %v1745 = vpop.f32.mrb[0].mxu0
    %1746 = vdwg.mxu0
    %v1748 = vsel %vm1105, %v1550, 0
    %v1751 = vsel %vm1565, %v1558, 0
    %1753 = vmatprep.subr.bf16.mxu0 0
    %1754 = vmatpush1.bf16.msra.mxu0 %v1751
    %1755 = vmatprep.subr.bf16.mxu0 0
    %1756 = vmatpush1.bf16.msra.mxu0 0
    %1757 = vmatprep.subr.bf16.mxu0 0
    %1758 = vmatpush1.bf16.msra.mxu0 0
    %1759 = vmatprep.subr.bf16.mxu0 0
    %1760 = vmatpush1.bf16.msra.mxu0 0
    %1761 = vmatprep.subr.bf16.mxu0 0
    %1762 = vmatpush1.bf16.msra.mxu0 0
    %1763 = vmatprep.subr.bf16.mxu0 0
    %1764 = vmatpush1.bf16.msra.mxu0 0
    %1765 = vmatprep.subr.bf16.mxu0 0
    %1766 = vmatpush1.bf16.msra.mxu0 0
    %1767 = vmatprep.subr.bf16.mxu0 0
    %1768 = vmatpush1.bf16.msra.mxu0 0
    %1769 = vmatprep.subr.bf16.mxu0 0
    %1770 = vmatpush1.bf16.msra.mxu0 0
    %1771 = vmatprep.subr.bf16.mxu0 0
    %1772 = vmatpush1.bf16.msra.mxu0 0
    %1773 = vmatprep.subr.bf16.mxu0 0
    %1774 = vmatpush1.bf16.msra.mxu0 0
    %1775 = vmatprep.subr.bf16.mxu0 0
    %1776 = vmatpush1.bf16.msra.mxu0 0
    %1777 = vmatprep.subr.bf16.mxu0 0
    %1778 = vmatpush1.bf16.msra.mxu0 0
    %1779 = vmatprep.subr.bf16.mxu0 0
    %1780 = vmatpush1.bf16.msra.mxu0 0
    %1781 = vmatprep.subr.bf16.mxu0 0
    %1782 = vmatpush1.bf16.msra.mxu0 0
    %1783 = vmatprep.subr.bf16.mxu0 0
    %1784 = vmatpush1.bf16.msra.mxu0 0
    %1785 = vmatprep.mubr.bf16.mxu0 0
    %1786 = vmatmul.mubr.bf16.gmra.mrb[0].mxu0 %v1748
    %v1787 = vpop.f32.mrb[0].mxu0
    %v1788 = vadd.f32 0.0, %v1787
    %v1789 = vpop.f32.mrb[0].mxu0
    %v1790 = vpop.f32.mrb[0].mxu0
    %v1791 = vpop.f32.mrb[0].mxu0
    %1792 = vdwg.mxu0
    %v1794 = vsel %vm1105, %v1551, 0
    %v1797 = vsel %vm1565, %v1559, 0
    %1799 = vmatprep.subr.bf16.mxu0 0
    %1800 = vmatpush1.bf16.msra.mxu0 %v1797
    %1801 = vmatprep.subr.bf16.mxu0 0
    %1802 = vmatpush1.bf16.msra.mxu0 0
    %1803 = vmatprep.subr.bf16.mxu0 0
    %1804 = vmatpush1.bf16.msra.mxu0 0
    %1805 = vmatprep.subr.bf16.mxu0 0
    %1806 = vmatpush1.bf16.msra.mxu0 0
    %1807 = vmatprep.subr.bf16.mxu0 0
    %1808 = vmatpush1.bf16.msra.mxu0 0
    %1809 = vmatprep.subr.bf16.mxu0 0
    %1810 = vmatpush1.bf16.msra.mxu0 0
    %1811 = vmatprep.subr.bf16.mxu0 0
    %1812 = vmatpush1.bf16.msra.mxu0 0
    %1813 = vmatprep.subr.bf16.mxu0 0
    %1814 = vmatpush1.bf16.msra.mxu0 0
    %1815 = vmatprep.subr.bf16.mxu0 0
    %1816 = vmatpush1.bf16.msra.mxu0 0
    %1817 = vmatprep.subr.bf16.mxu0 0
    %1818 = vmatpush1.bf16.msra.mxu0 0
    %1819 = vmatprep.subr.bf16.mxu0 0
    %1820 = vmatpush1.bf16.msra.mxu0 0
    %1821 = vmatprep.subr.bf16.mxu0 0
    %1822 = vmatpush1.bf16.msra.mxu0 0
    %1823 = vmatprep.subr.bf16.mxu0 0
    %1824 = vmatpush1.bf16.msra.mxu0 0
    %1825 = vmatprep.subr.bf16.mxu0 0
    %1826 = vmatpush1.bf16.msra.mxu0 0
    %1827 = vmatprep.subr.bf16.mxu0 0
    %1828 = vmatpush1.bf16.msra.mxu0 0
    %1829 = vmatprep.subr.bf16.mxu0 0
    %1830 = vmatpush1.bf16.msra.mxu0 0
    %1831 = vmatprep.mubr.bf16.mxu0 0
    %1832 = vmatmul.mubr.bf16.gmra.mrb[0].mxu0 %v1794
    %v1833 = vpop.f32.mrb[0].mxu0
    %v1834 = vadd.f32 0.0, %v1833
    %v1835 = vpop.f32.mrb[0].mxu0
    %v1836 = vpop.f32.mrb[0].mxu0
    %v1837 = vpop.f32.mrb[0].mxu0
    %1838 = vdwg.mxu0
    %v1840 = vsel %vm1105, %v1552, 0
    %v1843 = vsel %vm1565, %v1560, 0
    %1845 = vmatprep.subr.bf16.mxu0 0
    %1846 = vmatpush1.bf16.msra.mxu0 %v1843
    %1847 = vmatprep.subr.bf16.mxu0 0
    %1848 = vmatpush1.bf16.msra.mxu0 0
    %1849 = vmatprep.subr.bf16.mxu0 0
    %1850 = vmatpush1.bf16.msra.mxu0 0
    %1851 = vmatprep.subr.bf16.mxu0 0
    %1852 = vmatpush1.bf16.msra.mxu0 0
    %1853 = vmatprep.subr.bf16.mxu0 0
    %1854 = vmatpush1.bf16.msra.mxu0 0
    %1855 = vmatprep.subr.bf16.mxu0 0
    %1856 = vmatpush1.bf16.msra.mxu0 0
    %1857 = vmatprep.subr.bf16.mxu0 0
    %1858 = vmatpush1.bf16.msra.mxu0 0
    %1859 = vmatprep.subr.bf16.mxu0 0
    %1860 = vmatpush1.bf16.msra.mxu0 0
    %1861 = vmatprep.subr.bf16.mxu0 0
    %1862 = vmatpush1.bf16.msra.mxu0 0
    %1863 = vmatprep.subr.bf16.mxu0 0
    %1864 = vmatpush1.bf16.msra.mxu0 0
    %1865 = vmatprep.subr.bf16.mxu0 0
    %1866 = vmatpush1.bf16.msra.mxu0 0
    %1867 = vmatprep.subr.bf16.mxu0 0
    %1868 = vmatpush1.bf16.msra.mxu0 0
    %1869 = vmatprep.subr.bf16.mxu0 0
    %1870 = vmatpush1.bf16.msra.mxu0 0
    %1871 = vmatprep.subr.bf16.mxu0 0
    %1872 = vmatpush1.bf16.msra.mxu0 0
    %1873 = vmatprep.subr.bf16.mxu0 0
    %1874 = vmatpush1.bf16.msra.mxu0 0
    %1875 = vmatprep.subr.bf16.mxu0 0
    %1876 = vmatpush1.bf16.msra.mxu0 0
    %1877 = vmatprep.mubr.bf16.mxu0 0
    %1878 = vmatmul.mubr.bf16.gmra.mrb[0].mxu0 %v1840
    %v1879 = vpop.f32.mrb[0].mxu0
    %v1880 = vadd.f32 0.0, %v1879
    %v1881 = vpop.f32.mrb[0].mxu0
    %v1882 = vpop.f32.mrb[0].mxu0
    %v1883 = vpop.f32.mrb[0].mxu0
    %1884 = vdwg.mxu0
    %v1886 = vsel %vm1105, %v1553, 0
    %v1889 = vsel %vm1565, %v1561, 0
    %1891 = vmatprep.subr.bf16.mxu0 0
    %1892 = vmatpush1.bf16.msra.mxu0 %v1889
    %1893 = vmatprep.subr.bf16.mxu0 0
    %1894 = vmatpush1.bf16.msra.mxu0 0
    %1895 = vmatprep.subr.bf16.mxu0 0
    %1896 = vmatpush1.bf16.msra.mxu0 0
    %1897 = vmatprep.subr.bf16.mxu0 0
    %1898 = vmatpush1.bf16.msra.mxu0 0
    %1899 = vmatprep.subr.bf16.mxu0 0
    %1900 = vmatpush1.bf16.msra.mxu0 0
    %1901 = vmatprep.subr.bf16.mxu0 0
    %1902 = vmatpush1.bf16.msra.mxu0 0
    %1903 = vmatprep.subr.bf16.mxu0 0
    %1904 = vmatpush1.bf16.msra.mxu0 0
    %1905 = vmatprep.subr.bf16.mxu0 0
    %1906 = vmatpush1.bf16.msra.mxu0 0
    %1907 = vmatprep.subr.bf16.mxu0 0
    %1908 = vmatpush1.bf16.msra.mxu0 0
    %1909 = vmatprep.subr.bf16.mxu0 0
    %1910 = vmatpush1.bf16.msra.mxu0 0
    %1911 = vmatprep.subr.bf16.mxu0 0
    %1912 = vmatpush1.bf16.msra.mxu0 0
    %1913 = vmatprep.subr.bf16.mxu0 0
    %1914 = vmatpush1.bf16.msra.mxu0 0
    %1915 = vmatprep.subr.bf16.mxu0 0
    %1916 = vmatpush1.bf16.msra.mxu0 0
    %1917 = vmatprep.subr.bf16.mxu0 0
    %1918 = vmatpush1.bf16.msra.mxu0 0
    %1919 = vmatprep.subr.bf16.mxu0 0
    %1920 = vmatpush1.bf16.msra.mxu0 0
    %1921 = vmatprep.subr.bf16.mxu0 0
    %1922 = vmatpush1.bf16.msra.mxu0 0
    %1923 = vmatprep.mubr.bf16.mxu0 0
    %1924 = vmatmul.mubr.bf16.gmra.mrb[0].mxu0 %v1886
    %v1925 = vpop.f32.mrb[0].mxu0
    %v1926 = vadd.f32 0.0, %v1925
    %v1927 = vpop.f32.mrb[0].mxu0
    %v1928 = vpop.f32.mrb[0].mxu0
    %v1929 = vpop.f32.mrb[0].mxu0
    %1930 = vdwg.mxu0
    %v1931 = vrcp.pop %v1524
    %v1932 = vrcp.pop %v1527
    %v1933 = vrcp.pop %v1530
    %v1934 = vrcp.pop %v1533
    %v1935 = vrcp.pop %v1536
    %v1936 = vrcp.pop %v1539
    %v1937 = vrcp.pop %v1542
    %v1938 = vrcp.pop %v1545
    %v1939 = vmul.f32 %v1604, %v1931
    %v1940 = vmul.f32 %v1650, %v1932
    %v1941 = vmul.f32 %v1696, %v1933
    %v1942 = vmul.f32 %v1742, %v1934
    %v1943 = vmul.f32 %v1788, %v1935
    %v1944 = vmul.f32 %v1834, %v1936
    %v1945 = vmul.f32 %v1880, %v1937
    %v1946 = vmul.f32 %v1926, %v1938
    %v1947 = vcombine.low %v1939, %v1941
    %v1948 = vcombine.high %v1939, %v1941
    %v1950 = vunpack.c.l.s4 1983009808
    %v1951 = vunpack.c.0.s8 %v1950
    %v1952 = vlaneseq
    %v1953 = vshrl.u32 %v1952, 7
    %v1954 = vsub.s32 %v1951, %v1953
    %v1955 = vrot.slane %v1947, %v1954
    %v1957 = vunpack.c.l.s4 1983009808
    %v1958 = vunpack.c.0.s8 %v1957
    %v1959 = vlaneseq
    %v1960 = vshrl.u32 %v1959, 7
    %v1961 = vsub.s32 %v1958, %v1960
    %v1962 = vrot.slane %v1948, %v1961
    %v1963 = vcombine.low %v1940, %v1942
    %v1964 = vcombine.high %v1940, %v1942
    %v1966 = vunpack.c.l.s4 1983009808
    %v1967 = vunpack.c.0.s8 %v1966
    %v1968 = vlaneseq
    %v1969 = vshrl.u32 %v1968, 7
    %v1970 = vsub.s32 %v1967, %v1969
    %v1971 = vrot.slane %v1963, %v1970
    %v1973 = vunpack.c.l.s4 1983009808
    %v1974 = vunpack.c.0.s8 %v1973
    %v1975 = vlaneseq
    %v1976 = vshrl.u32 %v1975, 7
    %v1977 = vsub.s32 %v1974, %v1976
    %v1978 = vrot.slane %v1964, %v1977
    %v1979 = vcombine.low %v1955, %v1971
    %v1980 = vcombine.high %v1955, %v1971
    %v1982 = vunpack.c.l.s4 1934713408
    %v1983 = vunpack.c.0.s8 %v1982
    %v1984 = vlaneseq
    %v1985 = vshrl.u32 %v1984, 7
    %v1986 = vsub.s32 %v1983, %v1985
    %v1987 = vrot.slane %v1979, %v1986
    %v1989 = vunpack.c.l.s4 1934713408
    %v1990 = vunpack.c.0.s8 %v1989
    %v1991 = vlaneseq
    %v1992 = vshrl.u32 %v1991, 7
    %v1993 = vsub.s32 %v1990, %v1992
    %v1994 = vrot.slane %v1980, %v1993
    %v1995 = vcombine.low %v1962, %v1978
    %v1996 = vcombine.high %v1962, %v1978
    %v1998 = vunpack.c.l.s4 1934713408
    %v1999 = vunpack.c.0.s8 %v1998
    %v2000 = vlaneseq
    %v2001 = vshrl.u32 %v2000, 7
    %v2002 = vsub.s32 %v1999, %v2001
    %v2003 = vrot.slane %v1995, %v2002
    %v2005 = vunpack.c.l.s4 1934713408
    %v2006 = vunpack.c.0.s8 %v2005
    %v2007 = vlaneseq
    %v2008 = vshrl.u32 %v2007, 7
    %v2009 = vsub.s32 %v2006, %v2008
    %v2010 = vrot.slane %v1996, %v2009
    %v2011 = vcombine.high %v1987, 0.0
    %v2012 = vcombine.high %v1994, 0.0
    %v2013 = vcombine.high %v2003, 0.0
    %v2014 = vcombine.high %v2010, 0.0
    %v2015 = vcombine.low %v1943, %v1945
    %v2016 = vcombine.high %v1943, %v1945
    %v2018 = vunpack.c.l.s4 1983009808
    %v2019 = vunpack.c.0.s8 %v2018
    %v2020 = vlaneseq
    %v2021 = vshrl.u32 %v2020, 7
    %v2022 = vsub.s32 %v2019, %v2021
    %v2023 = vrot.slane %v2015, %v2022
    %v2025 = vunpack.c.l.s4 1983009808
    %v2026 = vunpack.c.0.s8 %v2025
    %v2027 = vlaneseq
    %v2028 = vshrl.u32 %v2027, 7
    %v2029 = vsub.s32 %v2026, %v2028
    %v2030 = vrot.slane %v2016, %v2029
    %v2031 = vcombine.low %v1944, %v1946
    %v2032 = vcombine.high %v1944, %v1946
    %v2034 = vunpack.c.l.s4 1983009808
    %v2035 = vunpack.c.0.s8 %v2034
    %v2036 = vlaneseq
    %v2037 = vshrl.u32 %v2036, 7
    %v2038 = vsub.s32 %v2035, %v2037
    %v2039 = vrot.slane %v2031, %v2038
    %v2041 = vunpack.c.l.s4 1983009808
    %v2042 = vunpack.c.0.s8 %v2041
    %v2043 = vlaneseq
    %v2044 = vshrl.u32 %v2043, 7
    %v2045 = vsub.s32 %v2042, %v2044
    %v2046 = vrot.slane %v2032, %v2045
    %v2047 = vcombine.low %v2023, %v2039
    %v2048 = vcombine.high %v2023, %v2039
    %v2050 = vunpack.c.l.s4 1934713408
    %v2051 = vunpack.c.0.s8 %v2050
    %v2052 = vlaneseq
    %v2053 = vshrl.u32 %v2052, 7
    %v2054 = vsub.s32 %v2051, %v2053
    %v2055 = vrot.slane %v2047, %v2054
    %v2057 = vunpack.c.l.s4 1934713408
    %v2058 = vunpack.c.0.s8 %v2057
    %v2059 = vlaneseq
    %v2060 = vshrl.u32 %v2059, 7
    %v2061 = vsub.s32 %v2058, %v2060
    %v2062 = vrot.slane %v2048, %v2061
    %v2063 = vcombine.low %v2030, %v2046
    %v2064 = vcombine.high %v2030, %v2046
    %v2066 = vunpack.c.l.s4 1934713408
    %v2067 = vunpack.c.0.s8 %v2066
    %v2068 = vlaneseq
    %v2069 = vshrl.u32 %v2068, 7
    %v2070 = vsub.s32 %v2067, %v2069
    %v2071 = vrot.slane %v2063, %v2070
    %v2073 = vunpack.c.l.s4 1934713408
    %v2074 = vunpack.c.0.s8 %v2073
    %v2075 = vlaneseq
    %v2076 = vshrl.u32 %v2075, 7
    %v2077 = vsub.s32 %v2074, %v2076
    %v2078 = vrot.slane %v2064, %v2077
    %v2079 = vcombine.high %v2055, 0.0
    %v2080 = vcombine.high %v2062, 0.0
    %v2081 = vcombine.high %v2071, 0.0
    %v2082 = vcombine.high %v2078, 0.0
    %v2083 = vcombine.low %v1987, %v1994
    %v2085 = vunpack.c.l.s4 1983009808
    %v2086 = vunpack.c.0.s8 %v2085
    %v2087 = vlaneseq
    %v2088 = vshrl.u32 %v2087, 7
    %v2089 = vsub.s32 %v2086, %v2088
    %v2090 = vrot.slane %v2083, %v2089
    %v2091 = vcombine.low %v2011, %v2012
    %v2093 = vunpack.c.l.s4 1983009808
    %v2094 = vunpack.c.0.s8 %v2093
    %v2095 = vlaneseq
    %v2096 = vshrl.u32 %v2095, 7
    %v2097 = vsub.s32 %v2094, %v2096
    %v2098 = vrot.slane %v2091, %v2097
    %v2099 = vcombine.low %v2003, %v2010
    %v2101 = vunpack.c.l.s4 1983009808
    %v2102 = vunpack.c.0.s8 %v2101
    %v2103 = vlaneseq
    %v2104 = vshrl.u32 %v2103, 7
    %v2105 = vsub.s32 %v2102, %v2104
    %v2106 = vrot.slane %v2099, %v2105
    %v2107 = vcombine.low %v2013, %v2014
    %v2109 = vunpack.c.l.s4 1983009808
    %v2110 = vunpack.c.0.s8 %v2109
    %v2111 = vlaneseq
    %v2112 = vshrl.u32 %v2111, 7
    %v2113 = vsub.s32 %v2110, %v2112
    %v2114 = vrot.slane %v2107, %v2113
    %v2115 = vcombine.low %v2090, %v2098
    %v2116 = vcombine.high %v2090, %v2098
    %v2118 = vunpack.c.l.s4 1934713408
    %v2119 = vunpack.c.0.s8 %v2118
    %v2120 = vlaneseq
    %v2121 = vshrl.u32 %v2120, 7
    %v2122 = vsub.s32 %v2119, %v2121
    %v2123 = vrot.slane %v2115, %v2122
    %v2125 = vunpack.c.l.s4 1934713408
    %v2126 = vunpack.c.0.s8 %v2125
    %v2127 = vlaneseq
    %v2128 = vshrl.u32 %v2127, 7
    %v2129 = vsub.s32 %v2126, %v2128
    %v2130 = vrot.slane %v2116, %v2129
    %v2131 = vcombine.low %v2106, %v2114
    %v2132 = vcombine.high %v2106, %v2114
    %v2134 = vunpack.c.l.s4 1934713408
    %v2135 = vunpack.c.0.s8 %v2134
    %v2136 = vlaneseq
    %v2137 = vshrl.u32 %v2136, 7
    %v2138 = vsub.s32 %v2135, %v2137
    %v2139 = vrot.slane %v2131, %v2138
    %v2141 = vunpack.c.l.s4 1934713408
    %v2142 = vunpack.c.0.s8 %v2141
    %v2143 = vlaneseq
    %v2144 = vshrl.u32 %v2143, 7
    %v2145 = vsub.s32 %v2142, %v2144
    %v2146 = vrot.slane %v2132, %v2145
    %v2147 = vcombine.low %v2123, %v2139
    %v2148 = vcombine.high %v2123, %v2139
    %v2149 = vcombine.low %v2130, %v2146
    %v2150 = vcombine.high %v2130, %v2146
    %v2151 = vcombine.low %v2055, %v2062
    %v2153 = vunpack.c.l.s4 1983009808
    %v2154 = vunpack.c.0.s8 %v2153
    %v2155 = vlaneseq
    %v2156 = vshrl.u32 %v2155, 7
    %v2157 = vsub.s32 %v2154, %v2156
    %v2158 = vrot.slane %v2151, %v2157
    %v2159 = vcombine.low %v2079, %v2080
    %v2161 = vunpack.c.l.s4 1983009808
    %v2162 = vunpack.c.0.s8 %v2161
    %v2163 = vlaneseq
    %v2164 = vshrl.u32 %v2163, 7
    %v2165 = vsub.s32 %v2162, %v2164
    %v2166 = vrot.slane %v2159, %v2165
    %v2167 = vcombine.low %v2071, %v2078
    %v2169 = vunpack.c.l.s4 1983009808
    %v2170 = vunpack.c.0.s8 %v2169
    %v2171 = vlaneseq
    %v2172 = vshrl.u32 %v2171, 7
    %v2173 = vsub.s32 %v2170, %v2172
    %v2174 = vrot.slane %v2167, %v2173
    %v2175 = vcombine.low %v2081, %v2082
    %v2177 = vunpack.c.l.s4 1983009808
    %v2178 = vunpack.c.0.s8 %v2177
    %v2179 = vlaneseq
    %v2180 = vshrl.u32 %v2179, 7
    %v2181 = vsub.s32 %v2178, %v2180
    %v2182 = vrot.slane %v2175, %v2181
    %v2183 = vcombine.low %v2158, %v2166
    %v2184 = vcombine.high %v2158, %v2166
    %v2186 = vunpack.c.l.s4 1934713408
    %v2187 = vunpack.c.0.s8 %v2186
    %v2188 = vlaneseq
    %v2189 = vshrl.u32 %v2188, 7
    %v2190 = vsub.s32 %v2187, %v2189
    %v2191 = vrot.slane %v2183, %v2190
    %v2193 = vunpack.c.l.s4 1934713408
    %v2194 = vunpack.c.0.s8 %v2193
    %v2195 = vlaneseq
    %v2196 = vshrl.u32 %v2195, 7
    %v2197 = vsub.s32 %v2194, %v2196
    %v2198 = vrot.slane %v2184, %v2197
    %v2199 = vcombine.low %v2174, %v2182
    %v2200 = vcombine.high %v2174, %v2182
    %v2202 = vunpack.c.l.s4 1934713408
    %v2203 = vunpack.c.0.s8 %v2202
    %v2204 = vlaneseq
    %v2205 = vshrl.u32 %v2204, 7
    %v2206 = vsub.s32 %v2203, %v2205
    %v2207 = vrot.slane %v2199, %v2206
    %v2209 = vunpack.c.l.s4 1934713408
    %v2210 = vunpack.c.0.s8 %v2209
    %v2211 = vlaneseq
    %v2212 = vshrl.u32 %v2211, 7
    %v2213 = vsub.s32 %v2210, %v2212
    %v2214 = vrot.slane %v2200, %v2213
    %v2215 = vcombine.low %v2191, %v2207
    %v2216 = vcombine.high %v2191, %v2207
    %v2217 = vcombine.low %v2198, %v2214
    %v2218 = vcombine.high %v2198, %v2214
    %2221 = vrot.lane.b32.xlu0 %v2148, 8
    %v2222 = vpop.permute.xlu0 %2221
    %2223 = vrot.lane.b32.xlu0 %v2216, 8
    %v2224 = vpop.permute.xlu0 %2223
    %2229 = vrot.lane.b32.xlu0 %v2149, 16
    %v2230 = vpop.permute.xlu0 %2229
    %2231 = vrot.lane.b32.xlu0 %v2217, 16
    %v2232 = vpop.permute.xlu0 %2231
    %2237 = vrot.lane.b32.xlu0 %v2150, 24
    %v2238 = vpop.permute.xlu0 %2237
    %2239 = vrot.lane.b32.xlu0 %v2218, 24
    %v2240 = vpop.permute.xlu0 %2239
    %v2243 = vsel %vm1105, %v2147, %v2222
    %v2244 = vsel %vm1105, %v2215, %v2224
    %vm2245 = vcmask 130048
    %v2246 = vsel %vm2245, %v2243, %v2230
    %v2247 = vsel %vm2245, %v2244, %v2232
    %vm2248 = vcmask 195584
    %v2249 = vsel %vm2248, %v2246, %v2238
    %v2250 = vsel %vm2248, %v2247, %v2240
    %v2251 = vpack.c.bf16 %v2250, %v2249
    %v2252 = vld [vmem:[%s6] sm:$0xf]
    %v2253 = vld [vmem:[%s6 + $0x4] sm:$0xf]
    %v2254 = vld [vmem:[%s6 + $0x8] sm:$0xf]
    %v2255 = vld [vmem:[%s6 + $0xc] sm:$0xf]
    %v2256 = vld [vmem:[%s7] sm:$0x1]
    %v2258 = vlaneseq
    %v2259 = vshrl.u32 %v2258, 7
    %v2260 = vsub.s32 0, %v2259
    %v2261 = vrot.slane %v2256, %v2260
    %v2267 = vunpack.c.l.b16 %v2252
    %v2268 = vunpack.c.l.b16 %v2253
    %v2269 = vunpack.c.l.b16 %v2254
    %v2270 = vunpack.c.l.b16 %v2255
    %v2271 = vpack.c.b16 %v2268, %v2267
    %v2272 = vpack.c.b16 %v2270, %v2269
    %v2276 = vsel %vm59, %v2251, 0
    %2278 = vmatprep.subr.bf16.mxu0 0
    %2279 = vmatpush1.bf16.msra.mxu0 %v2271
    %2280 = vmatprep.subr.bf16.mxu0 0
    %2281 = vmatpush1.bf16.msra.mxu0 %v2272
    %2282 = vmatprep.subr.bf16.mxu0 0
    %2283 = vmatpush1.bf16.msra.mxu0 0
    %2284 = vmatprep.subr.bf16.mxu0 0
    %2285 = vmatpush1.bf16.msra.mxu0 0
    %2286 = vmatprep.subr.bf16.mxu0 0
    %2287 = vmatpush1.bf16.msra.mxu0 0
    %2288 = vmatprep.subr.bf16.mxu0 0
    %2289 = vmatpush1.bf16.msra.mxu0 0
    %2290 = vmatprep.subr.bf16.mxu0 0
    %2291 = vmatpush1.bf16.msra.mxu0 0
    %2292 = vmatprep.subr.bf16.mxu0 0
    %2293 = vmatpush1.bf16.msra.mxu0 0
    %2294 = vmatprep.subr.bf16.mxu0 0
    %2295 = vmatpush1.bf16.msra.mxu0 0
    %2296 = vmatprep.subr.bf16.mxu0 0
    %2297 = vmatpush1.bf16.msra.mxu0 0
    %2298 = vmatprep.subr.bf16.mxu0 0
    %2299 = vmatpush1.bf16.msra.mxu0 0
    %2300 = vmatprep.subr.bf16.mxu0 0
    %2301 = vmatpush1.bf16.msra.mxu0 0
    %2302 = vmatprep.subr.bf16.mxu0 0
    %2303 = vmatpush1.bf16.msra.mxu0 0
    %2304 = vmatprep.subr.bf16.mxu0 0
    %2305 = vmatpush1.bf16.msra.mxu0 0
    %2306 = vmatprep.subr.bf16.mxu0 0
    %2307 = vmatpush1.bf16.msra.mxu0 0
    %2308 = vmatprep.subr.bf16.mxu0 0
    %2309 = vmatpush1.bf16.msra.mxu0 0
    %2310 = vmatprep.mubr.bf16.mxu0 0
    %2311 = vmatmul.mubr.bf16.gmra.mrb[0].mxu0 %v2276
    %v2312 = vpop.f32.mrb[0].mxu0
    %v2313 = vadd.f32 %v2261, %v2312
    %v2314 = vpop.f32.mrb[0].mxu0
    %v2315 = vpop.f32.mrb[0].mxu0
    %v2316 = vadd.f32 %v2261, %v2315
    %v2317 = vpop.f32.mrb[0].mxu0
    %2318 = vdwg.mxu0
    %v2319 = vadd.f32 %v2313, %v101
    %v2320 = vadd.f32 %v2316, %v102
    %v2321 = vld [vmem:[%s8] sm:$0x1]
    %v2322 = vld [vmem:[%s9] sm:$0x1]
    %v2323 = vsel %vm59, %v2319, 0.0
    %2324 = vadd.xlane.f32.xlu0 %v2323
    %v2325 = vpop.xlane.xlu0 %2324
    %v2326 = vsel %vm59, %v2320, 0.0
    %2327 = vadd.xlane.f32.xlu0 %v2326
    %v2328 = vpop.xlane.xlu0 %2327
    %v2329 = vmul.f32 %v2325, %v66
    %v2330 = vmul.f32 %v2328, %v66
    %v2331 = vsub.f32 %v2319, %v2329
    %v2332 = vsub.f32 %v2320, %v2330
    %v2333 = vmul.f32 %v2331, %v2331
    %v2334 = vmul.f32 %v2332, %v2332
    %v2335 = vsel %vm59, %v2333, 0.0
    %2336 = vadd.xlane.f32.xlu0 %v2335
    %v2337 = vpop.xlane.xlu0 %2336
    %v2338 = vsel %vm59, %v2334, 0.0
    %2339 = vadd.xlane.f32.xlu0 %v2338
    %v2340 = vpop.xlane.xlu0 %2339
    %v2341 = vmul.f32 %v2337, %v66
    %v2342 = vmul.f32 %v2340, %v66
    %v2343 = vadd.f32 %v2341, 1e-12
    %v2344 = vadd.f32 %v2342, 1e-12
    %v2345 = vrsqrt.pop %v2343
    %v2346 = vrsqrt.pop %v2344
    %v2347 = vmul.f32 %v2331, %v2345
    %v2348 = vmul.f32 %v2332, %v2346
    %v2350 = vlaneseq
    %v2351 = vshrl.u32 %v2350, 7
    %v2352 = vsub.s32 0, %v2351
    %v2353 = vrot.slane %v2321, %v2352
    %v2355 = vmul.f32 %v2347, %v2353
    %v2356 = vmul.f32 %v2348, %v2353
    %v2358 = vlaneseq
    %v2359 = vshrl.u32 %v2358, 7
    %v2360 = vsub.s32 0, %v2359
    %v2361 = vrot.slane %v2322, %v2360
    %v2363 = vadd.f32 %v2355, %v2361
    %v2364 = vadd.f32 %v2356, %v2361
    %v2365 = vpack.c.bf16 %v2364, %v2363
    %v2366 = vld [vmem:[%s10] sm:$0xf]
    %v2367 = vld [vmem:[%s10 + $0x4] sm:$0xf]
    %v2368 = vld [vmem:[%s10 + $0x8] sm:$0xf]
    %v2369 = vld [vmem:[%s10 + $0xc] sm:$0xf]
    %v2370 = vld [vmem:[%s11] sm:$0x1]
    %v2372 = vlaneseq
    %v2373 = vshrl.u32 %v2372, 7
    %v2374 = vsub.s32 0, %v2373
    %v2375 = vrot.slane %v2370, %v2374
    %v2381 = vunpack.c.l.b16 %v2366
    %v2382 = vunpack.c.l.b16 %v2367
    %v2383 = vunpack.c.l.b16 %v2368
    %v2384 = vunpack.c.l.b16 %v2369
    %v2385 = vpack.c.b16 %v2382, %v2381
    %v2386 = vpack.c.b16 %v2384, %v2383
    %v2390 = vsel %vm59, %v2365, 0
    %2392 = vmatprep.subr.bf16.mxu0 0
    %2393 = vmatpush1.bf16.msra.mxu0 %v2385
    %2394 = vmatprep.subr.bf16.mxu0 0
    %2395 = vmatpush1.bf16.msra.mxu0 %v2386
    %2396 = vmatprep.subr.bf16.mxu0 0
    %2397 = vmatpush1.bf16.msra.mxu0 0
    %2398 = vmatprep.subr.bf16.mxu0 0
    %2399 = vmatpush1.bf16.msra.mxu0 0
    %2400 = vmatprep.subr.bf16.mxu0 0
    %2401 = vmatpush1.bf16.msra.mxu0 0
    %2402 = vmatprep.subr.bf16.mxu0 0
    %2403 = vmatpush1.bf16.msra.mxu0 0
    %2404 = vmatprep.subr.bf16.mxu0 0
    %2405 = vmatpush1.bf16.msra.mxu0 0
    %2406 = vmatprep.subr.bf16.mxu0 0
    %2407 = vmatpush1.bf16.msra.mxu0 0
    %2408 = vmatprep.subr.bf16.mxu0 0
    %2409 = vmatpush1.bf16.msra.mxu0 0
    %2410 = vmatprep.subr.bf16.mxu0 0
    %2411 = vmatpush1.bf16.msra.mxu0 0
    %2412 = vmatprep.subr.bf16.mxu0 0
    %2413 = vmatpush1.bf16.msra.mxu0 0
    %2414 = vmatprep.subr.bf16.mxu0 0
    %2415 = vmatpush1.bf16.msra.mxu0 0
    %2416 = vmatprep.subr.bf16.mxu0 0
    %2417 = vmatpush1.bf16.msra.mxu0 0
    %2418 = vmatprep.subr.bf16.mxu0 0
    %2419 = vmatpush1.bf16.msra.mxu0 0
    %2420 = vmatprep.subr.bf16.mxu0 0
    %2421 = vmatpush1.bf16.msra.mxu0 0
    %2422 = vmatprep.subr.bf16.mxu0 0
    %2423 = vmatpush1.bf16.msra.mxu0 0
    %2424 = vmatprep.mubr.bf16.mxu0 0
    %2425 = vmatmul.mubr.bf16.gmra.mrb[0].mxu0 %v2390
    %v2426 = vpop.f32.mrb[0].mxu0
    %v2427 = vadd.f32 %v2375, %v2426
    %v2428 = vpop.f32.mrb[0].mxu0
    %v2429 = vpop.f32.mrb[0].mxu0
    %v2430 = vadd.f32 %v2375, %v2429
    %v2431 = vpop.f32.mrb[0].mxu0
    %2432 = vdwg.mxu0
    %v2433 = vmul.f32 %v2427, 0.5
    %v2434 = vmul.f32 %v2430, 0.5
    %v2435 = vmul.f32 %v2427, 0.044715
    %v2436 = vmul.f32 %v2430, 0.044715
    %v2437 = vmul.f32 %v2435, %v2427
    %v2438 = vmul.f32 %v2436, %v2430
    %v2439 = vmul.f32 %v2437, %v2427
    %v2440 = vmul.f32 %v2438, %v2430
    %v2441 = vadd.f32 %v2427, %v2439
    %v2442 = vadd.f32 %v2430, %v2440
    %v2443 = vmul.f32 %v2441, 0.7978846
    %v2444 = vmul.f32 %v2442, 0.7978846
    %v2445 = vtanh.pop %v2443
    %v2446 = vtanh.pop %v2444
    %v2447 = vadd.f32 %v2445, 1.0
    %v2448 = vadd.f32 %v2446, 1.0
    %v2449 = vmul.f32 %v2433, %v2447
    %v2450 = vmul.f32 %v2434, %v2448
    %v2451 = vpack.c.bf16 %v2450, %v2449
    %v2452 = vld [vmem:[%s12] sm:$0xf]
    %v2453 = vld [vmem:[%s12 + $0x4] sm:$0xf]
    %v2454 = vld [vmem:[%s12 + $0x8] sm:$0xf]
    %v2455 = vld [vmem:[%s12 + $0xc] sm:$0xf]
    %v2456 = vld [vmem:[%s12 + $0x10] sm:$0xf]
    %v2457 = vld [vmem:[%s12 + $0x14] sm:$0xf]
    %v2458 = vld [vmem:[%s12 + $0x18] sm:$0xf]
    %v2459 = vld [vmem:[%s12 + $0x1c] sm:$0xf]
    %v2460 = vld [vmem:[%s13] sm:$0x1]
    %v2462 = vlaneseq
    %v2463 = vshrl.u32 %v2462, 7
    %v2464 = vsub.s32 0, %v2463
    %v2465 = vrot.slane %v2460, %v2464
    %v2475 = vunpack.c.l.b16 %v2452
    %v2476 = vunpack.c.l.b16 %v2453
    %v2477 = vunpack.c.l.b16 %v2454
    %v2478 = vunpack.c.l.b16 %v2455
    %v2479 = vunpack.c.l.b16 %v2456
    %v2480 = vunpack.c.l.b16 %v2457
    %v2481 = vunpack.c.l.b16 %v2458
    %v2482 = vunpack.c.l.b16 %v2459
    %v2483 = vpack.c.b16 %v2476, %v2475
    %v2484 = vpack.c.b16 %v2478, %v2477
    %v2485 = vpack.c.b16 %v2480, %v2479
    %v2486 = vpack.c.b16 %v2482, %v2481
    %vm2491 = vcmask 523264
    %v2493 = vsel %vm2491, %v2451, 0
    %2495 = vmatprep.subr.bf16.mxu0 0
    %2496 = vmatpush1.bf16.msra.mxu0 %v2483
    %2497 = vmatprep.subr.bf16.mxu0 0
    %2498 = vmatpush1.bf16.msra.mxu0 %v2484
    %2499 = vmatprep.subr.bf16.mxu0 0
    %2500 = vmatpush1.bf16.msra.mxu0 %v2485
    %2501 = vmatprep.subr.bf16.mxu0 0
    %2502 = vmatpush1.bf16.msra.mxu0 %v2486
    %2503 = vmatprep.subr.bf16.mxu0 0
    %2504 = vmatpush1.bf16.msra.mxu0 0
    %2505 = vmatprep.subr.bf16.mxu0 0
    %2506 = vmatpush1.bf16.msra.mxu0 0
    %2507 = vmatprep.subr.bf16.mxu0 0
    %2508 = vmatpush1.bf16.msra.mxu0 0
    %2509 = vmatprep.subr.bf16.mxu0 0
    %2510 = vmatpush1.bf16.msra.mxu0 0
    %2511 = vmatprep.subr.bf16.mxu0 0
    %2512 = vmatpush1.bf16.msra.mxu0 0
    %2513 = vmatprep.subr.bf16.mxu0 0
    %2514 = vmatpush1.bf16.msra.mxu0 0
    %2515 = vmatprep.subr.bf16.mxu0 0
    %2516 = vmatpush1.bf16.msra.mxu0 0
    %2517 = vmatprep.subr.bf16.mxu0 0
    %2518 = vmatpush1.bf16.msra.mxu0 0
    %2519 = vmatprep.subr.bf16.mxu0 0
    %2520 = vmatpush1.bf16.msra.mxu0 0
    %2521 = vmatprep.subr.bf16.mxu0 0
    %2522 = vmatpush1.bf16.msra.mxu0 0
    %2523 = vmatprep.subr.bf16.mxu0 0
    %2524 = vmatpush1.bf16.msra.mxu0 0
    %2525 = vmatprep.subr.bf16.mxu0 0
    %2526 = vmatpush1.bf16.msra.mxu0 0
    %2527 = vmatprep.mubr.bf16.mxu0 0
    %2528 = vmatmul.mubr.bf16.gmra.mrb[0].mxu0 %v2493
    %v2529 = vpop.f32.mrb[0].mxu0
    %v2530 = vadd.f32 %v2465, %v2529
    %v2531 = vpop.f32.mrb[0].mxu0
    %v2532 = vpop.f32.mrb[0].mxu0
    %v2533 = vadd.f32 %v2465, %v2532
    %v2534 = vpop.f32.mrb[0].mxu0
    %2535 = vdwg.mxu0
    %v2536 = vadd.f32 %v2530, %v2363
    %v2537 = vadd.f32 %v2533, %v2364
    %v2538 = vld [vmem:[%s14] sm:$0x1]
    %v2539 = vld [vmem:[%s15] sm:$0x1]
    %v2540 = vsel %vm59, %v2536, 0.0
    %2541 = vadd.xlane.f32.xlu0 %v2540
    %v2542 = vpop.xlane.xlu0 %2541
    %v2543 = vsel %vm59, %v2537, 0.0
    %2544 = vadd.xlane.f32.xlu0 %v2543
    %v2545 = vpop.xlane.xlu0 %2544
    %v2546 = vmul.f32 %v2542, %v66
    %v2547 = vmul.f32 %v2545, %v66
    %v2548 = vsub.f32 %v2536, %v2546
    %v2549 = vsub.f32 %v2537, %v2547
    %v2550 = vmul.f32 %v2548, %v2548
    %v2551 = vmul.f32 %v2549, %v2549
    %v2552 = vsel %vm59, %v2550, 0.0
    %2553 = vadd.xlane.f32.xlu0 %v2552
    %v2554 = vpop.xlane.xlu0 %2553
    %v2555 = vsel %vm59, %v2551, 0.0
    %2556 = vadd.xlane.f32.xlu0 %v2555
    %v2557 = vpop.xlane.xlu0 %2556
    %v2558 = vmul.f32 %v2554, %v66
    %v2559 = vmul.f32 %v2557, %v66
    %v2560 = vadd.f32 %v2558, 1e-12
    %v2561 = vadd.f32 %v2559, 1e-12
    %v2562 = vrsqrt.pop %v2560
    %v2563 = vrsqrt.pop %v2561
    %v2564 = vmul.f32 %v2548, %v2562
    %v2565 = vmul.f32 %v2549, %v2563
    %v2567 = vlaneseq
    %v2568 = vshrl.u32 %v2567, 7
    %v2569 = vsub.s32 0, %v2568
    %v2570 = vrot.slane %v2538, %v2569
    %v2572 = vmul.f32 %v2564, %v2570
    %v2573 = vmul.f32 %v2565, %v2570
    %v2575 = vlaneseq
    %v2576 = vshrl.u32 %v2575, 7
    %v2577 = vsub.s32 0, %v2576
    %v2578 = vrot.slane %v2539, %v2577
    %v2580 = vadd.f32 %v2572, %v2578
    %v2581 = vadd.f32 %v2573, %v2578
    %v2582 = vpack.c.bf16 %v2581, %v2580
    %s2583 = scalar_lea.vmem %s4, 16
    %v2584 = vld [vmem:[%s2583] sm:$0xf]
    %v2585 = vld [vmem:[%s2583 + $0x4] sm:$0xf]
    %v2586 = vld [vmem:[%s2583 + $0x8] sm:$0xf]
    %v2587 = vld [vmem:[%s2583 + $0xc] sm:$0xf]
    %s2588 = scalar_lea.vmem %s5, 1
    %v2589 = vld [vmem:[%s2588] sm:$0x1]
    %v2591 = vlaneseq
    %v2592 = vshrl.u32 %v2591, 7
    %v2593 = vsub.s32 0, %v2592
    %v2594 = vrot.slane %v2589, %v2593
    %v2600 = vunpack.c.l.b16 %v2584
    %v2601 = vunpack.c.l.b16 %v2585
    %v2602 = vunpack.c.l.b16 %v2586
    %v2603 = vunpack.c.l.b16 %v2587
    %v2604 = vpack.c.b16 %v2601, %v2600
    %v2605 = vpack.c.b16 %v2603, %v2602
    %v2609 = vsel %vm59, %v2582, 0
    %2611 = vmatprep.subr.bf16.mxu0 0
    %2612 = vmatpush1.bf16.msra.mxu0 %v2604
    %2613 = vmatprep.subr.bf16.mxu0 0
    %2614 = vmatpush1.bf16.msra.mxu0 %v2605
    %2615 = vmatprep.subr.bf16.mxu0 0
    %2616 = vmatpush1.bf16.msra.mxu0 0
    %2617 = vmatprep.subr.bf16.mxu0 0
    %2618 = vmatpush1.bf16.msra.mxu0 0
    %2619 = vmatprep.subr.bf16.mxu0 0
    %2620 = vmatpush1.bf16.msra.mxu0 0
    %2621 = vmatprep.subr.bf16.mxu0 0
    %2622 = vmatpush1.bf16.msra.mxu0 0
    %2623 = vmatprep.subr.bf16.mxu0 0
    %2624 = vmatpush1.bf16.msra.mxu0 0
    %2625 = vmatprep.subr.bf16.mxu0 0
    %2626 = vmatpush1.bf16.msra.mxu0 0
    %2627 = vmatprep.subr.bf16.mxu0 0
    %2628 = vmatpush1.bf16.msra.mxu0 0
    %2629 = vmatprep.subr.bf16.mxu0 0
    %2630 = vmatpush1.bf16.msra.mxu0 0
    %2631 = vmatprep.subr.bf16.mxu0 0
    %2632 = vmatpush1.bf16.msra.mxu0 0
    %2633 = vmatprep.subr.bf16.mxu0 0
    %2634 = vmatpush1.bf16.msra.mxu0 0
    %2635 = vmatprep.subr.bf16.mxu0 0
    %2636 = vmatpush1.bf16.msra.mxu0 0
    %2637 = vmatprep.subr.bf16.mxu0 0
    %2638 = vmatpush1.bf16.msra.mxu0 0
    %2639 = vmatprep.subr.bf16.mxu0 0
    %2640 = vmatpush1.bf16.msra.mxu0 0
    %2641 = vmatprep.subr.bf16.mxu0 0
    %2642 = vmatpush1.bf16.msra.mxu0 0
    %2643 = vmatprep.mubr.bf16.mxu0 0
    %2644 = vmatmul.mubr.bf16.gmra.mrb[0].mxu0 %v2609
    %v2645 = vpop.f32.mrb[0].mxu0
    %v2646 = vadd.f32 %v2594, %v2645
    %v2647 = vpop.f32.mrb[0].mxu0
    %v2648 = vpop.f32.mrb[0].mxu0
    %v2649 = vadd.f32 %v2594, %v2648
    %v2650 = vpop.f32.mrb[0].mxu0
    %2651 = vdwg.mxu0
    %2654 = vrot.lane.b32.xlu0 %v2646, 120
    %v2655 = vpop.permute.xlu0 %2654
    %2656 = vrot.lane.b32.xlu0 %v2649, 120
    %v2657 = vpop.permute.xlu0 %2656
    %2660 = vrot.lane.b32.xlu0 %v2646, 112
    %v2661 = vpop.permute.xlu0 %2660
    %2662 = vrot.lane.b32.xlu0 %v2649, 112
    %v2663 = vpop.permute.xlu0 %2662
    %2666 = vrot.lane.b32.xlu0 %v2646, 104
    %v2667 = vpop.permute.xlu0 %2666
    %2668 = vrot.lane.b32.xlu0 %v2649, 104
    %v2669 = vpop.permute.xlu0 %2668
    %2672 = vrot.lane.b32.xlu0 %v2646, 96
    %v2673 = vpop.permute.xlu0 %2672
    %2674 = vrot.lane.b32.xlu0 %v2649, 96
    %v2675 = vpop.permute.xlu0 %2674
    %2678 = vrot.lane.b32.xlu0 %v2646, 88
    %v2679 = vpop.permute.xlu0 %2678
    %2680 = vrot.lane.b32.xlu0 %v2649, 88
    %v2681 = vpop.permute.xlu0 %2680
    %2684 = vrot.lane.b32.xlu0 %v2646, 80
    %v2685 = vpop.permute.xlu0 %2684
    %2686 = vrot.lane.b32.xlu0 %v2649, 80
    %v2687 = vpop.permute.xlu0 %2686
    %2690 = vrot.lane.b32.xlu0 %v2646, 72
    %v2691 = vpop.permute.xlu0 %2690
    %2692 = vrot.lane.b32.xlu0 %v2649, 72
    %v2693 = vpop.permute.xlu0 %2692
    %2696 = vrot.lane.b32.xlu0 %v2646, 64
    %v2697 = vpop.permute.xlu0 %2696
    %2698 = vrot.lane.b32.xlu0 %v2649, 64
    %v2699 = vpop.permute.xlu0 %2698
    %2702 = vrot.lane.b32.xlu0 %v2646, 56
    %v2703 = vpop.permute.xlu0 %2702
    %2704 = vrot.lane.b32.xlu0 %v2649, 56
    %v2705 = vpop.permute.xlu0 %2704
    %2708 = vrot.lane.b32.xlu0 %v2646, 48
    %v2709 = vpop.permute.xlu0 %2708
    %2710 = vrot.lane.b32.xlu0 %v2649, 48
    %v2711 = vpop.permute.xlu0 %2710
    %2714 = vrot.lane.b32.xlu0 %v2646, 40
    %v2715 = vpop.permute.xlu0 %2714
    %2716 = vrot.lane.b32.xlu0 %v2649, 40
    %v2717 = vpop.permute.xlu0 %2716
    %v2720 = vcombine.low %v2646, %v2661
    %v2721 = vcombine.high %v2646, %v2661
    %v2723 = vunpack.c.l.s4 1983009808
    %v2724 = vunpack.c.0.s8 %v2723
    %v2725 = vlaneseq
    %v2726 = vshrl.u32 %v2725, 7
    %v2727 = vsub.s32 %v2724, %v2726
    %v2728 = vrot.slane %v2720, %v2727
    %v2730 = vunpack.c.l.s4 1983009808
    %v2731 = vunpack.c.0.s8 %v2730
    %v2732 = vlaneseq
    %v2733 = vshrl.u32 %v2732, 7
    %v2734 = vsub.s32 %v2731, %v2733
    %v2735 = vrot.slane %v2721, %v2734
    %v2736 = vcombine.low %v2655, %v2667
    %v2737 = vcombine.high %v2655, %v2667
    %v2739 = vunpack.c.l.s4 1983009808
    %v2740 = vunpack.c.0.s8 %v2739
    %v2741 = vlaneseq
    %v2742 = vshrl.u32 %v2741, 7
    %v2743 = vsub.s32 %v2740, %v2742
    %v2744 = vrot.slane %v2736, %v2743
    %v2746 = vunpack.c.l.s4 1983009808
    %v2747 = vunpack.c.0.s8 %v2746
    %v2748 = vlaneseq
    %v2749 = vshrl.u32 %v2748, 7
    %v2750 = vsub.s32 %v2747, %v2749
    %v2751 = vrot.slane %v2737, %v2750
    %v2752 = vcombine.low %v2673, %v2685
    %v2753 = vcombine.high %v2673, %v2685
    %v2755 = vunpack.c.l.s4 1983009808
    %v2756 = vunpack.c.0.s8 %v2755
    %v2757 = vlaneseq
    %v2758 = vshrl.u32 %v2757, 7
    %v2759 = vsub.s32 %v2756, %v2758
    %v2760 = vrot.slane %v2752, %v2759
    %v2762 = vunpack.c.l.s4 1983009808
    %v2763 = vunpack.c.0.s8 %v2762
    %v2764 = vlaneseq
    %v2765 = vshrl.u32 %v2764, 7
    %v2766 = vsub.s32 %v2763, %v2765
    %v2767 = vrot.slane %v2753, %v2766
    %v2768 = vcombine.low %v2679, %v2691
    %v2769 = vcombine.high %v2679, %v2691
    %v2771 = vunpack.c.l.s4 1983009808
    %v2772 = vunpack.c.0.s8 %v2771
    %v2773 = vlaneseq
    %v2774 = vshrl.u32 %v2773, 7
    %v2775 = vsub.s32 %v2772, %v2774
    %v2776 = vrot.slane %v2768, %v2775
    %v2778 = vunpack.c.l.s4 1983009808
    %v2779 = vunpack.c.0.s8 %v2778
    %v2780 = vlaneseq
    %v2781 = vshrl.u32 %v2780, 7
    %v2782 = vsub.s32 %v2779, %v2781
    %v2783 = vrot.slane %v2769, %v2782
    %v2784 = vcombine.low %v2728, %v2744
    %v2785 = vcombine.high %v2728, %v2744
    %v2787 = vunpack.c.l.s4 1934713408
    %v2788 = vunpack.c.0.s8 %v2787
    %v2789 = vlaneseq
    %v2790 = vshrl.u32 %v2789, 7
    %v2791 = vsub.s32 %v2788, %v2790
    %v2792 = vrot.slane %v2784, %v2791
    %v2794 = vunpack.c.l.s4 1934713408
    %v2795 = vunpack.c.0.s8 %v2794
    %v2796 = vlaneseq
    %v2797 = vshrl.u32 %v2796, 7
    %v2798 = vsub.s32 %v2795, %v2797
    %v2799 = vrot.slane %v2785, %v2798
    %v2800 = vcombine.low %v2735, %v2751
    %v2801 = vcombine.high %v2735, %v2751
    %v2803 = vunpack.c.l.s4 1934713408
    %v2804 = vunpack.c.0.s8 %v2803
    %v2805 = vlaneseq
    %v2806 = vshrl.u32 %v2805, 7
    %v2807 = vsub.s32 %v2804, %v2806
    %v2808 = vrot.slane %v2800, %v2807
    %v2810 = vunpack.c.l.s4 1934713408
    %v2811 = vunpack.c.0.s8 %v2810
    %v2812 = vlaneseq
    %v2813 = vshrl.u32 %v2812, 7
    %v2814 = vsub.s32 %v2811, %v2813
    %v2815 = vrot.slane %v2801, %v2814
    %v2816 = vcombine.low %v2760, %v2776
    %v2817 = vcombine.high %v2760, %v2776
    %v2819 = vunpack.c.l.s4 1934713408
    %v2820 = vunpack.c.0.s8 %v2819
    %v2821 = vlaneseq
    %v2822 = vshrl.u32 %v2821, 7
    %v2823 = vsub.s32 %v2820, %v2822
    %v2824 = vrot.slane %v2816, %v2823
    %v2826 = vunpack.c.l.s4 1934713408
    %v2827 = vunpack.c.0.s8 %v2826
    %v2828 = vlaneseq
    %v2829 = vshrl.u32 %v2828, 7
    %v2830 = vsub.s32 %v2827, %v2829
    %v2831 = vrot.slane %v2817, %v2830
    %v2832 = vcombine.low %v2767, %v2783
    %v2833 = vcombine.high %v2767, %v2783
    %v2835 = vunpack.c.l.s4 1934713408
    %v2836 = vunpack.c.0.s8 %v2835
    %v2837 = vlaneseq
    %v2838 = vshrl.u32 %v2837, 7
    %v2839 = vsub.s32 %v2836, %v2838
    %v2840 = vrot.slane %v2832, %v2839
    %v2842 = vunpack.c.l.s4 1934713408
    %v2843 = vunpack.c.0.s8 %v2842
    %v2844 = vlaneseq
    %v2845 = vshrl.u32 %v2844, 7
    %v2846 = vsub.s32 %v2843, %v2845
    %v2847 = vrot.slane %v2833, %v2846
    %v2848 = vcombine.low %v2792, %v2824
    %v2849 = vcombine.high %v2792, %v2824
    %v2850 = vcombine.low %v2799, %v2831
    %v2851 = vcombine.high %v2799, %v2831
    %v2852 = vcombine.low %v2808, %v2840
    %v2853 = vcombine.high %v2808, %v2840
    %v2854 = vcombine.low %v2815, %v2847
    %v2855 = vcombine.high %v2815, %v2847
    %v2856 = vcombine.low %v2697, %v2709
    %v2857 = vcombine.high %v2697, %v2709
    %v2859 = vunpack.c.l.s4 1983009808
    %v2860 = vunpack.c.0.s8 %v2859
    %v2861 = vlaneseq
    %v2862 = vshrl.u32 %v2861, 7
    %v2863 = vsub.s32 %v2860, %v2862
    %v2864 = vrot.slane %v2856, %v2863
    %v2866 = vunpack.c.l.s4 1983009808
    %v2867 = vunpack.c.0.s8 %v2866
    %v2868 = vlaneseq
    %v2869 = vshrl.u32 %v2868, 7
    %v2870 = vsub.s32 %v2867, %v2869
    %v2871 = vrot.slane %v2857, %v2870
    %v2872 = vcombine.low %v2703, %v2715
    %v2873 = vcombine.high %v2703, %v2715
    %v2875 = vunpack.c.l.s4 1983009808
    %v2876 = vunpack.c.0.s8 %v2875
    %v2877 = vlaneseq
    %v2878 = vshrl.u32 %v2877, 7
    %v2879 = vsub.s32 %v2876, %v2878
    %v2880 = vrot.slane %v2872, %v2879
    %v2882 = vunpack.c.l.s4 1983009808
    %v2883 = vunpack.c.0.s8 %v2882
    %v2884 = vlaneseq
    %v2885 = vshrl.u32 %v2884, 7
    %v2886 = vsub.s32 %v2883, %v2885
    %v2887 = vrot.slane %v2873, %v2886
    %v2888 = vcombine.low %v2864, %v2880
    %v2889 = vcombine.high %v2864, %v2880
    %v2891 = vunpack.c.l.s4 1934713408
    %v2892 = vunpack.c.0.s8 %v2891
    %v2893 = vlaneseq
    %v2894 = vshrl.u32 %v2893, 7
    %v2895 = vsub.s32 %v2892, %v2894
    %v2896 = vrot.slane %v2888, %v2895
    %v2898 = vunpack.c.l.s4 1934713408
    %v2899 = vunpack.c.0.s8 %v2898
    %v2900 = vlaneseq
    %v2901 = vshrl.u32 %v2900, 7
    %v2902 = vsub.s32 %v2899, %v2901
    %v2903 = vrot.slane %v2889, %v2902
    %v2904 = vcombine.low %v2871, %v2887
    %v2905 = vcombine.high %v2871, %v2887
    %v2907 = vunpack.c.l.s4 1934713408
    %v2908 = vunpack.c.0.s8 %v2907
    %v2909 = vlaneseq
    %v2910 = vshrl.u32 %v2909, 7
    %v2911 = vsub.s32 %v2908, %v2910
    %v2912 = vrot.slane %v2904, %v2911
    %v2914 = vunpack.c.l.s4 1934713408
    %v2915 = vunpack.c.0.s8 %v2914
    %v2916 = vlaneseq
    %v2917 = vshrl.u32 %v2916, 7
    %v2918 = vsub.s32 %v2915, %v2917
    %v2919 = vrot.slane %v2905, %v2918
    %v2920 = vcombine.high %v2896, 0.0
    %v2921 = vcombine.high %v2903, 0.0
    %v2922 = vcombine.high %v2912, 0.0
    %v2923 = vcombine.high %v2919, 0.0
    %v2924 = vcombine.low %v2649, %v2663
    %v2925 = vcombine.high %v2649, %v2663
    %v2927 = vunpack.c.l.s4 1983009808
    %v2928 = vunpack.c.0.s8 %v2927
    %v2929 = vlaneseq
    %v2930 = vshrl.u32 %v2929, 7
    %v2931 = vsub.s32 %v2928, %v2930
    %v2932 = vrot.slane %v2924, %v2931
    %v2934 = vunpack.c.l.s4 1983009808
    %v2935 = vunpack.c.0.s8 %v2934
    %v2936 = vlaneseq
    %v2937 = vshrl.u32 %v2936, 7
    %v2938 = vsub.s32 %v2935, %v2937
    %v2939 = vrot.slane %v2925, %v2938
    %v2940 = vcombine.low %v2657, %v2669
    %v2941 = vcombine.high %v2657, %v2669
    %v2943 = vunpack.c.l.s4 1983009808
    %v2944 = vunpack.c.0.s8 %v2943
    %v2945 = vlaneseq
    %v2946 = vshrl.u32 %v2945, 7
    %v2947 = vsub.s32 %v2944, %v2946
    %v2948 = vrot.slane %v2940, %v2947
    %v2950 = vunpack.c.l.s4 1983009808
    %v2951 = vunpack.c.0.s8 %v2950
    %v2952 = vlaneseq
    %v2953 = vshrl.u32 %v2952, 7
    %v2954 = vsub.s32 %v2951, %v2953
    %v2955 = vrot.slane %v2941, %v2954
    %v2956 = vcombine.low %v2675, %v2687
    %v2957 = vcombine.high %v2675, %v2687
    %v2959 = vunpack.c.l.s4 1983009808
    %v2960 = vunpack.c.0.s8 %v2959
    %v2961 = vlaneseq
    %v2962 = vshrl.u32 %v2961, 7
    %v2963 = vsub.s32 %v2960, %v2962
    %v2964 = vrot.slane %v2956, %v2963
    %v2966 = vunpack.c.l.s4 1983009808
    %v2967 = vunpack.c.0.s8 %v2966
    %v2968 = vlaneseq
    %v2969 = vshrl.u32 %v2968, 7
    %v2970 = vsub.s32 %v2967, %v2969
    %v2971 = vrot.slane %v2957, %v2970
    %v2972 = vcombine.low %v2681, %v2693
    %v2973 = vcombine.high %v2681, %v2693
    %v2975 = vunpack.c.l.s4 1983009808
    %v2976 = vunpack.c.0.s8 %v2975
    %v2977 = vlaneseq
    %v2978 = vshrl.u32 %v2977, 7
    %v2979 = vsub.s32 %v2976, %v2978
    %v2980 = vrot.slane %v2972, %v2979
    %v2982 = vunpack.c.l.s4 1983009808
    %v2983 = vunpack.c.0.s8 %v2982
    %v2984 = vlaneseq
    %v2985 = vshrl.u32 %v2984, 7
    %v2986 = vsub.s32 %v2983, %v2985
    %v2987 = vrot.slane %v2973, %v2986
    %v2988 = vcombine.low %v2932, %v2948
    %v2989 = vcombine.high %v2932, %v2948
    %v2991 = vunpack.c.l.s4 1934713408
    %v2992 = vunpack.c.0.s8 %v2991
    %v2993 = vlaneseq
    %v2994 = vshrl.u32 %v2993, 7
    %v2995 = vsub.s32 %v2992, %v2994
    %v2996 = vrot.slane %v2988, %v2995
    %v2998 = vunpack.c.l.s4 1934713408
    %v2999 = vunpack.c.0.s8 %v2998
    %v3000 = vlaneseq
    %v3001 = vshrl.u32 %v3000, 7
    %v3002 = vsub.s32 %v2999, %v3001
    %v3003 = vrot.slane %v2989, %v3002
    %v3004 = vcombine.low %v2939, %v2955
    %v3005 = vcombine.high %v2939, %v2955
    %v3007 = vunpack.c.l.s4 1934713408
    %v3008 = vunpack.c.0.s8 %v3007
    %v3009 = vlaneseq
    %v3010 = vshrl.u32 %v3009, 7
    %v3011 = vsub.s32 %v3008, %v3010
    %v3012 = vrot.slane %v3004, %v3011
    %v3014 = vunpack.c.l.s4 1934713408
    %v3015 = vunpack.c.0.s8 %v3014
    %v3016 = vlaneseq
    %v3017 = vshrl.u32 %v3016, 7
    %v3018 = vsub.s32 %v3015, %v3017
    %v3019 = vrot.slane %v3005, %v3018
    %v3020 = vcombine.low %v2964, %v2980
    %v3021 = vcombine.high %v2964, %v2980
    %v3023 = vunpack.c.l.s4 1934713408
    %v3024 = vunpack.c.0.s8 %v3023
    %v3025 = vlaneseq
    %v3026 = vshrl.u32 %v3025, 7
    %v3027 = vsub.s32 %v3024, %v3026
    %v3028 = vrot.slane %v3020, %v3027
    %v3030 = vunpack.c.l.s4 1934713408
    %v3031 = vunpack.c.0.s8 %v3030
    %v3032 = vlaneseq
    %v3033 = vshrl.u32 %v3032, 7
    %v3034 = vsub.s32 %v3031, %v3033
    %v3035 = vrot.slane %v3021, %v3034
    %v3036 = vcombine.low %v2971, %v2987
    %v3037 = vcombine.high %v2971, %v2987
    %v3039 = vunpack.c.l.s4 1934713408
    %v3040 = vunpack.c.0.s8 %v3039
    %v3041 = vlaneseq
    %v3042 = vshrl.u32 %v3041, 7
    %v3043 = vsub.s32 %v3040, %v3042
    %v3044 = vrot.slane %v3036, %v3043
    %v3046 = vunpack.c.l.s4 1934713408
    %v3047 = vunpack.c.0.s8 %v3046
    %v3048 = vlaneseq
    %v3049 = vshrl.u32 %v3048, 7
    %v3050 = vsub.s32 %v3047, %v3049
    %v3051 = vrot.slane %v3037, %v3050
    %v3052 = vcombine.low %v2996, %v3028
    %v3053 = vcombine.high %v2996, %v3028
    %v3054 = vcombine.low %v3003, %v3035
    %v3055 = vcombine.high %v3003, %v3035
    %v3056 = vcombine.low %v3012, %v3044
    %v3057 = vcombine.high %v3012, %v3044
    %v3058 = vcombine.low %v3019, %v3051
    %v3059 = vcombine.high %v3019, %v3051
    %v3060 = vcombine.low %v2699, %v2711
    %v3061 = vcombine.high %v2699, %v2711
    %v3063 = vunpack.c.l.s4 1983009808
    %v3064 = vunpack.c.0.s8 %v3063
    %v3065 = vlaneseq
    %v3066 = vshrl.u32 %v3065, 7
    %v3067 = vsub.s32 %v3064, %v3066
    %v3068 = vrot.slane %v3060, %v3067
    %v3070 = vunpack.c.l.s4 1983009808
    %v3071 = vunpack.c.0.s8 %v3070
    %v3072 = vlaneseq
    %v3073 = vshrl.u32 %v3072, 7
    %v3074 = vsub.s32 %v3071, %v3073
    %v3075 = vrot.slane %v3061, %v3074
    %v3076 = vcombine.low %v2705, %v2717
    %v3077 = vcombine.high %v2705, %v2717
    %v3079 = vunpack.c.l.s4 1983009808
    %v3080 = vunpack.c.0.s8 %v3079
    %v3081 = vlaneseq
    %v3082 = vshrl.u32 %v3081, 7
    %v3083 = vsub.s32 %v3080, %v3082
    %v3084 = vrot.slane %v3076, %v3083
    %v3086 = vunpack.c.l.s4 1983009808
    %v3087 = vunpack.c.0.s8 %v3086
    %v3088 = vlaneseq
    %v3089 = vshrl.u32 %v3088, 7
    %v3090 = vsub.s32 %v3087, %v3089
    %v3091 = vrot.slane %v3077, %v3090
    %v3092 = vcombine.low %v3068, %v3084
    %v3093 = vcombine.high %v3068, %v3084
    %v3095 = vunpack.c.l.s4 1934713408
    %v3096 = vunpack.c.0.s8 %v3095
    %v3097 = vlaneseq
    %v3098 = vshrl.u32 %v3097, 7
    %v3099 = vsub.s32 %v3096, %v3098
    %v3100 = vrot.slane %v3092, %v3099
    %v3102 = vunpack.c.l.s4 1934713408
    %v3103 = vunpack.c.0.s8 %v3102
    %v3104 = vlaneseq
    %v3105 = vshrl.u32 %v3104, 7
    %v3106 = vsub.s32 %v3103, %v3105
    %v3107 = vrot.slane %v3093, %v3106
    %v3108 = vcombine.low %v3075, %v3091
    %v3109 = vcombine.high %v3075, %v3091
    %v3111 = vunpack.c.l.s4 1934713408
    %v3112 = vunpack.c.0.s8 %v3111
    %v3113 = vlaneseq
    %v3114 = vshrl.u32 %v3113, 7
    %v3115 = vsub.s32 %v3112, %v3114
    %v3116 = vrot.slane %v3108, %v3115
    %v3118 = vunpack.c.l.s4 1934713408
    %v3119 = vunpack.c.0.s8 %v3118
    %v3120 = vlaneseq
    %v3121 = vshrl.u32 %v3120, 7
    %v3122 = vsub.s32 %v3119, %v3121
    %v3123 = vrot.slane %v3109, %v3122
    %v3124 = vcombine.high %v3100, 0.0
    %v3125 = vcombine.high %v3107, 0.0
    %v3126 = vcombine.high %v3116, 0.0
    %v3127 = vcombine.high %v3123, 0.0
    %v3128 = vcombine.low %v2848, %v2850
    %v3129 = vcombine.high %v2848, %v2850
    %v3131 = vunpack.c.l.s4 1983009808
    %v3132 = vunpack.c.0.s8 %v3131
    %v3133 = vlaneseq
    %v3134 = vshrl.u32 %v3133, 7
    %v3135 = vsub.s32 %v3132, %v3134
    %v3136 = vrot.slane %v3128, %v3135
    %v3138 = vunpack.c.l.s4 1983009808
    %v3139 = vunpack.c.0.s8 %v3138
    %v3140 = vlaneseq
    %v3141 = vshrl.u32 %v3140, 7
    %v3142 = vsub.s32 %v3139, %v3141
    %v3143 = vrot.slane %v3129, %v3142
    %v3144 = vcombine.low %v2849, %v2851
    %v3145 = vcombine.high %v2849, %v2851
    %v3147 = vunpack.c.l.s4 1983009808
    %v3148 = vunpack.c.0.s8 %v3147
    %v3149 = vlaneseq
    %v3150 = vshrl.u32 %v3149, 7
    %v3151 = vsub.s32 %v3148, %v3150
    %v3152 = vrot.slane %v3144, %v3151
    %v3154 = vunpack.c.l.s4 1983009808
    %v3155 = vunpack.c.0.s8 %v3154
    %v3156 = vlaneseq
    %v3157 = vshrl.u32 %v3156, 7
    %v3158 = vsub.s32 %v3155, %v3157
    %v3159 = vrot.slane %v3145, %v3158
    %v3160 = vcombine.low %v2852, %v2854
    %v3161 = vcombine.high %v2852, %v2854
    %v3163 = vunpack.c.l.s4 1983009808
    %v3164 = vunpack.c.0.s8 %v3163
    %v3165 = vlaneseq
    %v3166 = vshrl.u32 %v3165, 7
    %v3167 = vsub.s32 %v3164, %v3166
    %v3168 = vrot.slane %v3160, %v3167
    %v3170 = vunpack.c.l.s4 1983009808
    %v3171 = vunpack.c.0.s8 %v3170
    %v3172 = vlaneseq
    %v3173 = vshrl.u32 %v3172, 7
    %v3174 = vsub.s32 %v3171, %v3173
    %v3175 = vrot.slane %v3161, %v3174
    %v3176 = vcombine.low %v2853, %v2855
    %v3177 = vcombine.high %v2853, %v2855
    %v3179 = vunpack.c.l.s4 1983009808
    %v3180 = vunpack.c.0.s8 %v3179
    %v3181 = vlaneseq
    %v3182 = vshrl.u32 %v3181, 7
    %v3183 = vsub.s32 %v3180, %v3182
    %v3184 = vrot.slane %v3176, %v3183
    %v3186 = vunpack.c.l.s4 1983009808
    %v3187 = vunpack.c.0.s8 %v3186
    %v3188 = vlaneseq
    %v3189 = vshrl.u32 %v3188, 7
    %v3190 = vsub.s32 %v3187, %v3189
    %v3191 = vrot.slane %v3177, %v3190
    %v3192 = vcombine.low %v3136, %v3152
    %v3193 = vcombine.high %v3136, %v3152
    %v3195 = vunpack.c.l.s4 1934713408
    %v3196 = vunpack.c.0.s8 %v3195
    %v3197 = vlaneseq
    %v3198 = vshrl.u32 %v3197, 7
    %v3199 = vsub.s32 %v3196, %v3198
    %v3200 = vrot.slane %v3192, %v3199
    %v3202 = vunpack.c.l.s4 1934713408
    %v3203 = vunpack.c.0.s8 %v3202
    %v3204 = vlaneseq
    %v3205 = vshrl.u32 %v3204, 7
    %v3206 = vsub.s32 %v3203, %v3205
    %v3207 = vrot.slane %v3193, %v3206
    %v3208 = vcombine.low %v3143, %v3159
    %v3209 = vcombine.high %v3143, %v3159
    %v3211 = vunpack.c.l.s4 1934713408
    %v3212 = vunpack.c.0.s8 %v3211
    %v3213 = vlaneseq
    %v3214 = vshrl.u32 %v3213, 7
    %v3215 = vsub.s32 %v3212, %v3214
    %v3216 = vrot.slane %v3208, %v3215
    %v3218 = vunpack.c.l.s4 1934713408
    %v3219 = vunpack.c.0.s8 %v3218
    %v3220 = vlaneseq
    %v3221 = vshrl.u32 %v3220, 7
    %v3222 = vsub.s32 %v3219, %v3221
    %v3223 = vrot.slane %v3209, %v3222
    %v3224 = vcombine.low %v3168, %v3184
    %v3225 = vcombine.high %v3168, %v3184
    %v3227 = vunpack.c.l.s4 1934713408
    %v3228 = vunpack.c.0.s8 %v3227
    %v3229 = vlaneseq
    %v3230 = vshrl.u32 %v3229, 7
    %v3231 = vsub.s32 %v3228, %v3230
    %v3232 = vrot.slane %v3224, %v3231
    %v3234 = vunpack.c.l.s4 1934713408
    %v3235 = vunpack.c.0.s8 %v3234
    %v3236 = vlaneseq
    %v3237 = vshrl.u32 %v3236, 7
    %v3238 = vsub.s32 %v3235, %v3237
    %v3239 = vrot.slane %v3225, %v3238
    %v3240 = vcombine.low %v3175, %v3191
    %v3241 = vcombine.high %v3175, %v3191
    %v3243 = vunpack.c.l.s4 1934713408
    %v3244 = vunpack.c.0.s8 %v3243
    %v3245 = vlaneseq
    %v3246 = vshrl.u32 %v3245, 7
    %v3247 = vsub.s32 %v3244, %v3246
    %v3248 = vrot.slane %v3240, %v3247
    %v3250 = vunpack.c.l.s4 1934713408
    %v3251 = vunpack.c.0.s8 %v3250
    %v3252 = vlaneseq
    %v3253 = vshrl.u32 %v3252, 7
    %v3254 = vsub.s32 %v3251, %v3253
    %v3255 = vrot.slane %v3241, %v3254
    %v3256 = vcombine.low %v3200, %v3232
    %v3257 = vcombine.high %v3200, %v3232
    %v3258 = vcombine.low %v3207, %v3239
    %v3259 = vcombine.high %v3207, %v3239
    %v3260 = vcombine.low %v3216, %v3248
    %v3261 = vcombine.high %v3216, %v3248
    %v3262 = vcombine.low %v3223, %v3255
    %v3263 = vcombine.high %v3223, %v3255
    %v3264 = vcombine.low %v2896, %v2903
    %v3266 = vunpack.c.l.s4 1983009808
    %v3267 = vunpack.c.0.s8 %v3266
    %v3268 = vlaneseq
    %v3269 = vshrl.u32 %v3268, 7
    %v3270 = vsub.s32 %v3267, %v3269
    %v3271 = vrot.slane %v3264, %v3270
    %v3272 = vcombine.low %v2920, %v2921
    %v3274 = vunpack.c.l.s4 1983009808
    %v3275 = vunpack.c.0.s8 %v3274
    %v3276 = vlaneseq
    %v3277 = vshrl.u32 %v3276, 7
    %v3278 = vsub.s32 %v3275, %v3277
    %v3279 = vrot.slane %v3272, %v3278
    %v3280 = vcombine.low %v2912, %v2919
    %v3282 = vunpack.c.l.s4 1983009808
    %v3283 = vunpack.c.0.s8 %v3282
    %v3284 = vlaneseq
    %v3285 = vshrl.u32 %v3284, 7
    %v3286 = vsub.s32 %v3283, %v3285
    %v3287 = vrot.slane %v3280, %v3286
    %v3288 = vcombine.low %v2922, %v2923
    %v3290 = vunpack.c.l.s4 1983009808
    %v3291 = vunpack.c.0.s8 %v3290
    %v3292 = vlaneseq
    %v3293 = vshrl.u32 %v3292, 7
    %v3294 = vsub.s32 %v3291, %v3293
    %v3295 = vrot.slane %v3288, %v3294
    %v3296 = vcombine.low %v3271, %v3279
    %v3297 = vcombine.high %v3271, %v3279
    %v3299 = vunpack.c.l.s4 1934713408
    %v3300 = vunpack.c.0.s8 %v3299
    %v3301 = vlaneseq
    %v3302 = vshrl.u32 %v3301, 7
    %v3303 = vsub.s32 %v3300, %v3302
    %v3304 = vrot.slane %v3296, %v3303
    %v3306 = vunpack.c.l.s4 1934713408
    %v3307 = vunpack.c.0.s8 %v3306
    %v3308 = vlaneseq
    %v3309 = vshrl.u32 %v3308, 7
    %v3310 = vsub.s32 %v3307, %v3309
    %v3311 = vrot.slane %v3297, %v3310
    %v3312 = vcombine.low %v3287, %v3295
    %v3313 = vcombine.high %v3287, %v3295
    %v3315 = vunpack.c.l.s4 1934713408
    %v3316 = vunpack.c.0.s8 %v3315
    %v3317 = vlaneseq
    %v3318 = vshrl.u32 %v3317, 7
    %v3319 = vsub.s32 %v3316, %v3318
    %v3320 = vrot.slane %v3312, %v3319
    %v3322 = vunpack.c.l.s4 1934713408
    %v3323 = vunpack.c.0.s8 %v3322
    %v3324 = vlaneseq
    %v3325 = vshrl.u32 %v3324, 7
    %v3326 = vsub.s32 %v3323, %v3325
    %v3327 = vrot.slane %v3313, %v3326
    %v3328 = vcombine.low %v3304, %v3320
    %v3329 = vcombine.high %v3304, %v3320
    %v3330 = vcombine.low %v3311, %v3327
    %v3331 = vcombine.high %v3311, %v3327
    %v3332 = vcombine.low %v3052, %v3054
    %v3333 = vcombine.high %v3052, %v3054
    %v3335 = vunpack.c.l.s4 1983009808
    %v3336 = vunpack.c.0.s8 %v3335
    %v3337 = vlaneseq
    %v3338 = vshrl.u32 %v3337, 7
    %v3339 = vsub.s32 %v3336, %v3338
    %v3340 = vrot.slane %v3332, %v3339
    %v3342 = vunpack.c.l.s4 1983009808
    %v3343 = vunpack.c.0.s8 %v3342
    %v3344 = vlaneseq
    %v3345 = vshrl.u32 %v3344, 7
    %v3346 = vsub.s32 %v3343, %v3345
    %v3347 = vrot.slane %v3333, %v3346
    %v3348 = vcombine.low %v3053, %v3055
    %v3349 = vcombine.high %v3053, %v3055
    %v3351 = vunpack.c.l.s4 1983009808
    %v3352 = vunpack.c.0.s8 %v3351
    %v3353 = vlaneseq
    %v3354 = vshrl.u32 %v3353, 7
    %v3355 = vsub.s32 %v3352, %v3354
    %v3356 = vrot.slane %v3348, %v3355
    %v3358 = vunpack.c.l.s4 1983009808
    %v3359 = vunpack.c.0.s8 %v3358
    %v3360 = vlaneseq
    %v3361 = vshrl.u32 %v3360, 7
    %v3362 = vsub.s32 %v3359, %v3361
    %v3363 = vrot.slane %v3349, %v3362
    %v3364 = vcombine.low %v3056, %v3058
    %v3365 = vcombine.high %v3056, %v3058
    %v3367 = vunpack.c.l.s4 1983009808
    %v3368 = vunpack.c.0.s8 %v3367
    %v3369 = vlaneseq
    %v3370 = vshrl.u32 %v3369, 7
    %v3371 = vsub.s32 %v3368, %v3370
    %v3372 = vrot.slane %v3364, %v3371
    %v3374 = vunpack.c.l.s4 1983009808
    %v3375 = vunpack.c.0.s8 %v3374
    %v3376 = vlaneseq
    %v3377 = vshrl.u32 %v3376, 7
    %v3378 = vsub.s32 %v3375, %v3377
    %v3379 = vrot.slane %v3365, %v3378
    %v3380 = vcombine.low %v3057, %v3059
    %v3381 = vcombine.high %v3057, %v3059
    %v3383 = vunpack.c.l.s4 1983009808
    %v3384 = vunpack.c.0.s8 %v3383
    %v3385 = vlaneseq
    %v3386 = vshrl.u32 %v3385, 7
    %v3387 = vsub.s32 %v3384, %v3386
    %v3388 = vrot.slane %v3380, %v3387
    %v3390 = vunpack.c.l.s4 1983009808
    %v3391 = vunpack.c.0.s8 %v3390
    %v3392 = vlaneseq
    %v3393 = vshrl.u32 %v3392, 7
    %v3394 = vsub.s32 %v3391, %v3393
    %v3395 = vrot.slane %v3381, %v3394
    %v3396 = vcombine.low %v3340, %v3356
    %v3397 = vcombine.high %v3340, %v3356
    %v3399 = vunpack.c.l.s4 1934713408
    %v3400 = vunpack.c.0.s8 %v3399
    %v3401 = vlaneseq
    %v3402 = vshrl.u32 %v3401, 7
    %v3403 = vsub.s32 %v3400, %v3402
    %v3404 = vrot.slane %v3396, %v3403
    %v3406 = vunpack.c.l.s4 1934713408
    %v3407 = vunpack.c.0.s8 %v3406
    %v3408 = vlaneseq
    %v3409 = vshrl.u32 %v3408, 7
    %v3410 = vsub.s32 %v3407, %v3409
    %v3411 = vrot.slane %v3397, %v3410
    %v3412 = vcombine.low %v3347, %v3363
    %v3413 = vcombine.high %v3347, %v3363
    %v3415 = vunpack.c.l.s4 1934713408
    %v3416 = vunpack.c.0.s8 %v3415
    %v3417 = vlaneseq
    %v3418 = vshrl.u32 %v3417, 7
    %v3419 = vsub.s32 %v3416, %v3418
    %v3420 = vrot.slane %v3412, %v3419
    %v3422 = vunpack.c.l.s4 1934713408
    %v3423 = vunpack.c.0.s8 %v3422
    %v3424 = vlaneseq
    %v3425 = vshrl.u32 %v3424, 7
    %v3426 = vsub.s32 %v3423, %v3425
    %v3427 = vrot.slane %v3413, %v3426
    %v3428 = vcombine.low %v3372, %v3388
    %v3429 = vcombine.high %v3372, %v3388
    %v3431 = vunpack.c.l.s4 1934713408
    %v3432 = vunpack.c.0.s8 %v3431
    %v3433 = vlaneseq
    %v3434 = vshrl.u32 %v3433, 7
    %v3435 = vsub.s32 %v3432, %v3434
    %v3436 = vrot.slane %v3428, %v3435
    %v3438 = vunpack.c.l.s4 1934713408
    %v3439 = vunpack.c.0.s8 %v3438
    %v3440 = vlaneseq
    %v3441 = vshrl.u32 %v3440, 7
    %v3442 = vsub.s32 %v3439, %v3441
    %v3443 = vrot.slane %v3429, %v3442
    %v3444 = vcombine.low %v3379, %v3395
    %v3445 = vcombine.high %v3379, %v3395
    %v3447 = vunpack.c.l.s4 1934713408
    %v3448 = vunpack.c.0.s8 %v3447
    %v3449 = vlaneseq
    %v3450 = vshrl.u32 %v3449, 7
    %v3451 = vsub.s32 %v3448, %v3450
    %v3452 = vrot.slane %v3444, %v3451
    %v3454 = vunpack.c.l.s4 1934713408
    %v3455 = vunpack.c.0.s8 %v3454
    %v3456 = vlaneseq
    %v3457 = vshrl.u32 %v3456, 7
    %v3458 = vsub.s32 %v3455, %v3457
    %v3459 = vrot.slane %v3445, %v3458
    %v3460 = vcombine.low %v3404, %v3436
    %v3461 = vcombine.high %v3404, %v3436
    %v3462 = vcombine.low %v3411, %v3443
    %v3463 = vcombine.high %v3411, %v3443
    %v3464 = vcombine.low %v3420, %v3452
    %v3465 = vcombine.high %v3420, %v3452
    %v3466 = vcombine.low %v3427, %v3459
    %v3467 = vcombine.high %v3427, %v3459
    %v3468 = vcombine.low %v3100, %v3107
    %v3470 = vunpack.c.l.s4 1983009808
    %v3471 = vunpack.c.0.s8 %v3470
    %v3472 = vlaneseq
    %v3473 = vshrl.u32 %v3472, 7
    %v3474 = vsub.s32 %v3471, %v3473
    %v3475 = vrot.slane %v3468, %v3474
    %v3476 = vcombine.low %v3124, %v3125
    %v3478 = vunpack.c.l.s4 1983009808
    %v3479 = vunpack.c.0.s8 %v3478
    %v3480 = vlaneseq
    %v3481 = vshrl.u32 %v3480, 7
    %v3482 = vsub.s32 %v3479, %v3481
    %v3483 = vrot.slane %v3476, %v3482
    %v3484 = vcombine.low %v3116, %v3123
    %v3486 = vunpack.c.l.s4 1983009808
    %v3487 = vunpack.c.0.s8 %v3486
    %v3488 = vlaneseq
    %v3489 = vshrl.u32 %v3488, 7
    %v3490 = vsub.s32 %v3487, %v3489
    %v3491 = vrot.slane %v3484, %v3490
    %v3492 = vcombine.low %v3126, %v3127
    %v3494 = vunpack.c.l.s4 1983009808
    %v3495 = vunpack.c.0.s8 %v3494
    %v3496 = vlaneseq
    %v3497 = vshrl.u32 %v3496, 7
    %v3498 = vsub.s32 %v3495, %v3497
    %v3499 = vrot.slane %v3492, %v3498
    %v3500 = vcombine.low %v3475, %v3483
    %v3501 = vcombine.high %v3475, %v3483
    %v3503 = vunpack.c.l.s4 1934713408
    %v3504 = vunpack.c.0.s8 %v3503
    %v3505 = vlaneseq
    %v3506 = vshrl.u32 %v3505, 7
    %v3507 = vsub.s32 %v3504, %v3506
    %v3508 = vrot.slane %v3500, %v3507
    %v3510 = vunpack.c.l.s4 1934713408
    %v3511 = vunpack.c.0.s8 %v3510
    %v3512 = vlaneseq
    %v3513 = vshrl.u32 %v3512, 7
    %v3514 = vsub.s32 %v3511, %v3513
    %v3515 = vrot.slane %v3501, %v3514
    %v3516 = vcombine.low %v3491, %v3499
    %v3517 = vcombine.high %v3491, %v3499
    %v3519 = vunpack.c.l.s4 1934713408
    %v3520 = vunpack.c.0.s8 %v3519
    %v3521 = vlaneseq
    %v3522 = vshrl.u32 %v3521, 7
    %v3523 = vsub.s32 %v3520, %v3522
    %v3524 = vrot.slane %v3516, %v3523
    %v3526 = vunpack.c.l.s4 1934713408
    %v3527 = vunpack.c.0.s8 %v3526
    %v3528 = vlaneseq
    %v3529 = vshrl.u32 %v3528, 7
    %v3530 = vsub.s32 %v3527, %v3529
    %v3531 = vrot.slane %v3517, %v3530
    %v3532 = vcombine.low %v3508, %v3524
    %v3533 = vcombine.high %v3508, %v3524
    %v3534 = vcombine.low %v3515, %v3531
    %v3535 = vcombine.high %v3515, %v3531
    %v3536 = vpack.c.bf16 %v3256, %v3256
    %v3537 = vpack.c.bf16 %v3257, %v3257
    %v3538 = vpack.c.bf16 %v3258, %v3258
    %v3539 = vpack.c.bf16 %v3259, %v3259
    %v3540 = vpack.c.bf16 %v3460, %v3460
    %v3541 = vpack.c.bf16 %v3461, %v3461
    %v3542 = vpack.c.bf16 %v3462, %v3462
    %v3543 = vpack.c.bf16 %v3463, %v3463
    %v3544 = vpack.c.bf16 %v3260, %v3260
    %v3545 = vpack.c.bf16 %v3261, %v3261
    %v3546 = vpack.c.bf16 %v3262, %v3262
    %v3547 = vpack.c.bf16 %v3263, %v3263
    %v3548 = vpack.c.bf16 %v3464, %v3464
    %v3549 = vpack.c.bf16 %v3465, %v3465
    %v3550 = vpack.c.bf16 %v3466, %v3466
    %v3551 = vpack.c.bf16 %v3467, %v3467
    %v3553 = vsel %vm1105, %v3536, 0
    %v3556 = vsel %vm1105, %v3544, 0
    %3558 = vmatprep.subr.bf16.mxu0 0
    %3559 = vmatpush1.bf16.xpose.msra.mxu0 %v3556
    %3560 = vmatprep.subr.bf16.mxu0 0
    %3561 = vmatpush1.bf16.xpose.msra.mxu0 0
    %3562 = vmatprep.subr.bf16.mxu0 0
    %3563 = vmatpush1.bf16.xpose.msra.mxu0 0
    %3564 = vmatprep.subr.bf16.mxu0 0
    %3565 = vmatpush1.bf16.xpose.msra.mxu0 0
    %3566 = vmatprep.subr.bf16.mxu0 0
    %3567 = vmatpush1.bf16.xpose.msra.mxu0 0
    %3568 = vmatprep.subr.bf16.mxu0 0
    %3569 = vmatpush1.bf16.xpose.msra.mxu0 0
    %3570 = vmatprep.subr.bf16.mxu0 0
    %3571 = vmatpush1.bf16.xpose.msra.mxu0 0
    %3572 = vmatprep.subr.bf16.mxu0 0
    %3573 = vmatpush1.bf16.xpose.msra.mxu0 0
    %3574 = vmatprep.subr.bf16.mxu0 0
    %3575 = vmatpush1.bf16.xpose.msra.mxu0 0
    %3576 = vmatprep.subr.bf16.mxu0 0
    %3577 = vmatpush1.bf16.xpose.msra.mxu0 0
    %3578 = vmatprep.subr.bf16.mxu0 0
    %3579 = vmatpush1.bf16.xpose.msra.mxu0 0
    %3580 = vmatprep.subr.bf16.mxu0 0
    %3581 = vmatpush1.bf16.xpose.msra.mxu0 0
    %3582 = vmatprep.subr.bf16.mxu0 0
    %3583 = vmatpush1.bf16.xpose.msra.mxu0 0
    %3584 = vmatprep.subr.bf16.mxu0 0
    %3585 = vmatpush1.bf16.xpose.msra.mxu0 0
    %3586 = vmatprep.subr.bf16.mxu0 0
    %3587 = vmatpush1.bf16.xpose.msra.mxu0 0
    %3588 = vmatprep.subr.bf16.mxu0 0
    %3589 = vmatpush1.bf16.xpose.msra.mxu0 0
    %3590 = vmatprep.mubr.bf16.mxu0 0
    %3591 = vmatmul.mubr.bf16.gmra.mrb[0].mxu0 %v3553
    %v3592 = vpop.f32.mrb[0].mxu0
    %v3593 = vadd.f32 %v1098, %v3592
    %v3594 = vpop.f32.mrb[0].mxu0
    %v3595 = vpop.f32.mrb[0].mxu0
    %v3596 = vpop.f32.mrb[0].mxu0
    %3597 = vdwg.mxu0
    %v3599 = vsel %vm1105, %v3537, 0
    %v3602 = vsel %vm1105, %v3545, 0
    %3604 = vmatprep.subr.bf16.mxu0 0
    %3605 = vmatpush1.bf16.xpose.msra.mxu0 %v3602
    %3606 = vmatprep.subr.bf16.mxu0 0
    %3607 = vmatpush1.bf16.xpose.msra.mxu0 0
    %3608 = vmatprep.subr.bf16.mxu0 0
    %3609 = vmatpush1.bf16.xpose.msra.mxu0 0
    %3610 = vmatprep.subr.bf16.mxu0 0
    %3611 = vmatpush1.bf16.xpose.msra.mxu0 0
    %3612 = vmatprep.subr.bf16.mxu0 0
    %3613 = vmatpush1.bf16.xpose.msra.mxu0 0
    %3614 = vmatprep.subr.bf16.mxu0 0
    %3615 = vmatpush1.bf16.xpose.msra.mxu0 0
    %3616 = vmatprep.subr.bf16.mxu0 0
    %3617 = vmatpush1.bf16.xpose.msra.mxu0 0
    %3618 = vmatprep.subr.bf16.mxu0 0
    %3619 = vmatpush1.bf16.xpose.msra.mxu0 0
    %3620 = vmatprep.subr.bf16.mxu0 0
    %3621 = vmatpush1.bf16.xpose.msra.mxu0 0
    %3622 = vmatprep.subr.bf16.mxu0 0
    %3623 = vmatpush1.bf16.xpose.msra.mxu0 0
    %3624 = vmatprep.subr.bf16.mxu0 0
    %3625 = vmatpush1.bf16.xpose.msra.mxu0 0
    %3626 = vmatprep.subr.bf16.mxu0 0
    %3627 = vmatpush1.bf16.xpose.msra.mxu0 0
    %3628 = vmatprep.subr.bf16.mxu0 0
    %3629 = vmatpush1.bf16.xpose.msra.mxu0 0
    %3630 = vmatprep.subr.bf16.mxu0 0
    %3631 = vmatpush1.bf16.xpose.msra.mxu0 0
    %3632 = vmatprep.subr.bf16.mxu0 0
    %3633 = vmatpush1.bf16.xpose.msra.mxu0 0
    %3634 = vmatprep.subr.bf16.mxu0 0
    %3635 = vmatpush1.bf16.xpose.msra.mxu0 0
    %3636 = vmatprep.mubr.bf16.mxu0 0
    %3637 = vmatmul.mubr.bf16.gmra.mrb[0].mxu0 %v3599
    %v3638 = vpop.f32.mrb[0].mxu0
    %v3639 = vadd.f32 %v1098, %v3638
    %v3640 = vpop.f32.mrb[0].mxu0
    %v3641 = vpop.f32.mrb[0].mxu0
    %v3642 = vpop.f32.mrb[0].mxu0
    %3643 = vdwg.mxu0
    %v3645 = vsel %vm1105, %v3538, 0
    %v3648 = vsel %vm1105, %v3546, 0
    %3650 = vmatprep.subr.bf16.mxu0 0
    %3651 = vmatpush1.bf16.xpose.msra.mxu0 %v3648
    %3652 = vmatprep.subr.bf16.mxu0 0
    %3653 = vmatpush1.bf16.xpose.msra.mxu0 0
    %3654 = vmatprep.subr.bf16.mxu0 0
    %3655 = vmatpush1.bf16.xpose.msra.mxu0 0
    %3656 = vmatprep.subr.bf16.mxu0 0
    %3657 = vmatpush1.bf16.xpose.msra.mxu0 0
    %3658 = vmatprep.subr.bf16.mxu0 0
    %3659 = vmatpush1.bf16.xpose.msra.mxu0 0
    %3660 = vmatprep.subr.bf16.mxu0 0
    %3661 = vmatpush1.bf16.xpose.msra.mxu0 0
    %3662 = vmatprep.subr.bf16.mxu0 0
    %3663 = vmatpush1.bf16.xpose.msra.mxu0 0
    %3664 = vmatprep.subr.bf16.mxu0 0
    %3665 = vmatpush1.bf16.xpose.msra.mxu0 0
    %3666 = vmatprep.subr.bf16.mxu0 0
    %3667 = vmatpush1.bf16.xpose.msra.mxu0 0
    %3668 = vmatprep.subr.bf16.mxu0 0
    %3669 = vmatpush1.bf16.xpose.msra.mxu0 0
    %3670 = vmatprep.subr.bf16.mxu0 0
    %3671 = vmatpush1.bf16.xpose.msra.mxu0 0
    %3672 = vmatprep.subr.bf16.mxu0 0
    %3673 = vmatpush1.bf16.xpose.msra.mxu0 0
    %3674 = vmatprep.subr.bf16.mxu0 0
    %3675 = vmatpush1.bf16.xpose.msra.mxu0 0
    %3676 = vmatprep.subr.bf16.mxu0 0
    %3677 = vmatpush1.bf16.xpose.msra.mxu0 0
    %3678 = vmatprep.subr.bf16.mxu0 0
    %3679 = vmatpush1.bf16.xpose.msra.mxu0 0
    %3680 = vmatprep.subr.bf16.mxu0 0
    %3681 = vmatpush1.bf16.xpose.msra.mxu0 0
    %3682 = vmatprep.mubr.bf16.mxu0 0
    %3683 = vmatmul.mubr.bf16.gmra.mrb[0].mxu0 %v3645
    %v3684 = vpop.f32.mrb[0].mxu0
    %v3685 = vadd.f32 %v1098, %v3684
    %v3686 = vpop.f32.mrb[0].mxu0
    %v3687 = vpop.f32.mrb[0].mxu0
    %v3688 = vpop.f32.mrb[0].mxu0
    %3689 = vdwg.mxu0
    %v3691 = vsel %vm1105, %v3539, 0
    %v3694 = vsel %vm1105, %v3547, 0
    %3696 = vmatprep.subr.bf16.mxu0 0
    %3697 = vmatpush1.bf16.xpose.msra.mxu0 %v3694
    %3698 = vmatprep.subr.bf16.mxu0 0
    %3699 = vmatpush1.bf16.xpose.msra.mxu0 0
    %3700 = vmatprep.subr.bf16.mxu0 0
    %3701 = vmatpush1.bf16.xpose.msra.mxu0 0
    %3702 = vmatprep.subr.bf16.mxu0 0
    %3703 = vmatpush1.bf16.xpose.msra.mxu0 0
    %3704 = vmatprep.subr.bf16.mxu0 0
    %3705 = vmatpush1.bf16.xpose.msra.mxu0 0
    %3706 = vmatprep.subr.bf16.mxu0 0
    %3707 = vmatpush1.bf16.xpose.msra.mxu0 0
    %3708 = vmatprep.subr.bf16.mxu0 0
    %3709 = vmatpush1.bf16.xpose.msra.mxu0 0
    %3710 = vmatprep.subr.bf16.mxu0 0
    %3711 = vmatpush1.bf16.xpose.msra.mxu0 0
    %3712 = vmatprep.subr.bf16.mxu0 0
    %3713 = vmatpush1.bf16.xpose.msra.mxu0 0
    %3714 = vmatprep.subr.bf16.mxu0 0
    %3715 = vmatpush1.bf16.xpose.msra.mxu0 0
    %3716 = vmatprep.subr.bf16.mxu0 0
    %3717 = vmatpush1.bf16.xpose.msra.mxu0 0
    %3718 = vmatprep.subr.bf16.mxu0 0
    %3719 = vmatpush1.bf16.xpose.msra.mxu0 0
    %3720 = vmatprep.subr.bf16.mxu0 0
    %3721 = vmatpush1.bf16.xpose.msra.mxu0 0
    %3722 = vmatprep.subr.bf16.mxu0 0
    %3723 = vmatpush1.bf16.xpose.msra.mxu0 0
    %3724 = vmatprep.subr.bf16.mxu0 0
    %3725 = vmatpush1.bf16.xpose.msra.mxu0 0
    %3726 = vmatprep.subr.bf16.mxu0 0
    %3727 = vmatpush1.bf16.xpose.msra.mxu0 0
    %3728 = vmatprep.mubr.bf16.mxu0 0
    %3729 = vmatmul.mubr.bf16.gmra.mrb[0].mxu0 %v3691
    %v3730 = vpop.f32.mrb[0].mxu0
    %v3731 = vadd.f32 %v1098, %v3730
    %v3732 = vpop.f32.mrb[0].mxu0
    %v3733 = vpop.f32.mrb[0].mxu0
    %v3734 = vpop.f32.mrb[0].mxu0
    %3735 = vdwg.mxu0
    %v3737 = vsel %vm1105, %v3540, 0
    %v3740 = vsel %vm1105, %v3548, 0
    %3742 = vmatprep.subr.bf16.mxu0 0
    %3743 = vmatpush1.bf16.xpose.msra.mxu0 %v3740
    %3744 = vmatprep.subr.bf16.mxu0 0
    %3745 = vmatpush1.bf16.xpose.msra.mxu0 0
    %3746 = vmatprep.subr.bf16.mxu0 0
    %3747 = vmatpush1.bf16.xpose.msra.mxu0 0
    %3748 = vmatprep.subr.bf16.mxu0 0
    %3749 = vmatpush1.bf16.xpose.msra.mxu0 0
    %3750 = vmatprep.subr.bf16.mxu0 0
    %3751 = vmatpush1.bf16.xpose.msra.mxu0 0
    %3752 = vmatprep.subr.bf16.mxu0 0
    %3753 = vmatpush1.bf16.xpose.msra.mxu0 0
    %3754 = vmatprep.subr.bf16.mxu0 0
    %3755 = vmatpush1.bf16.xpose.msra.mxu0 0
    %3756 = vmatprep.subr.bf16.mxu0 0
    %3757 = vmatpush1.bf16.xpose.msra.mxu0 0
    %3758 = vmatprep.subr.bf16.mxu0 0
    %3759 = vmatpush1.bf16.xpose.msra.mxu0 0
    %3760 = vmatprep.subr.bf16.mxu0 0
    %3761 = vmatpush1.bf16.xpose.msra.mxu0 0
    %3762 = vmatprep.subr.bf16.mxu0 0
    %3763 = vmatpush1.bf16.xpose.msra.mxu0 0
    %3764 = vmatprep.subr.bf16.mxu0 0
    %3765 = vmatpush1.bf16.xpose.msra.mxu0 0
    %3766 = vmatprep.subr.bf16.mxu0 0
    %3767 = vmatpush1.bf16.xpose.msra.mxu0 0
    %3768 = vmatprep.subr.bf16.mxu0 0
    %3769 = vmatpush1.bf16.xpose.msra.mxu0 0
    %3770 = vmatprep.subr.bf16.mxu0 0
    %3771 = vmatpush1.bf16.xpose.msra.mxu0 0
    %3772 = vmatprep.subr.bf16.mxu0 0
    %3773 = vmatpush1.bf16.xpose.msra.mxu0 0
    %3774 = vmatprep.mubr.bf16.mxu0 0
    %3775 = vmatmul.mubr.bf16.gmra.mrb[0].mxu0 %v3737
    %v3776 = vpop.f32.mrb[0].mxu0
    %v3777 = vadd.f32 %v1102, %v3776
    %v3778 = vpop.f32.mrb[0].mxu0
    %v3779 = vpop.f32.mrb[0].mxu0
    %v3780 = vpop.f32.mrb[0].mxu0
    %3781 = vdwg.mxu0
    %v3783 = vsel %vm1105, %v3541, 0
    %v3786 = vsel %vm1105, %v3549, 0
    %3788 = vmatprep.subr.bf16.mxu0 0
    %3789 = vmatpush1.bf16.xpose.msra.mxu0 %v3786
    %3790 = vmatprep.subr.bf16.mxu0 0
    %3791 = vmatpush1.bf16.xpose.msra.mxu0 0
    %3792 = vmatprep.subr.bf16.mxu0 0
    %3793 = vmatpush1.bf16.xpose.msra.mxu0 0
    %3794 = vmatprep.subr.bf16.mxu0 0
    %3795 = vmatpush1.bf16.xpose.msra.mxu0 0
    %3796 = vmatprep.subr.bf16.mxu0 0
    %3797 = vmatpush1.bf16.xpose.msra.mxu0 0
    %3798 = vmatprep.subr.bf16.mxu0 0
    %3799 = vmatpush1.bf16.xpose.msra.mxu0 0
    %3800 = vmatprep.subr.bf16.mxu0 0
    %3801 = vmatpush1.bf16.xpose.msra.mxu0 0
    %3802 = vmatprep.subr.bf16.mxu0 0
    %3803 = vmatpush1.bf16.xpose.msra.mxu0 0
    %3804 = vmatprep.subr.bf16.mxu0 0
    %3805 = vmatpush1.bf16.xpose.msra.mxu0 0
    %3806 = vmatprep.subr.bf16.mxu0 0
    %3807 = vmatpush1.bf16.xpose.msra.mxu0 0
    %3808 = vmatprep.subr.bf16.mxu0 0
    %3809 = vmatpush1.bf16.xpose.msra.mxu0 0
    %3810 = vmatprep.subr.bf16.mxu0 0
    %3811 = vmatpush1.bf16.xpose.msra.mxu0 0
    %3812 = vmatprep.subr.bf16.mxu0 0
    %3813 = vmatpush1.bf16.xpose.msra.mxu0 0
    %3814 = vmatprep.subr.bf16.mxu0 0
    %3815 = vmatpush1.bf16.xpose.msra.mxu0 0
    %3816 = vmatprep.subr.bf16.mxu0 0
    %3817 = vmatpush1.bf16.xpose.msra.mxu0 0
    %3818 = vmatprep.subr.bf16.mxu0 0
    %3819 = vmatpush1.bf16.xpose.msra.mxu0 0
    %3820 = vmatprep.mubr.bf16.mxu0 0
    %3821 = vmatmul.mubr.bf16.gmra.mrb[0].mxu0 %v3783
    %v3822 = vpop.f32.mrb[0].mxu0
    %v3823 = vadd.f32 %v1102, %v3822
    %v3824 = vpop.f32.mrb[0].mxu0
    %v3825 = vpop.f32.mrb[0].mxu0
    %v3826 = vpop.f32.mrb[0].mxu0
    %3827 = vdwg.mxu0
    %v3829 = vsel %vm1105, %v3542, 0
    %v3832 = vsel %vm1105, %v3550, 0
    %3834 = vmatprep.subr.bf16.mxu0 0
    %3835 = vmatpush1.bf16.xpose.msra.mxu0 %v3832
    %3836 = vmatprep.subr.bf16.mxu0 0
    %3837 = vmatpush1.bf16.xpose.msra.mxu0 0
    %3838 = vmatprep.subr.bf16.mxu0 0
    %3839 = vmatpush1.bf16.xpose.msra.mxu0 0
    %3840 = vmatprep.subr.bf16.mxu0 0
    %3841 = vmatpush1.bf16.xpose.msra.mxu0 0
    %3842 = vmatprep.subr.bf16.mxu0 0
    %3843 = vmatpush1.bf16.xpose.msra.mxu0 0
    %3844 = vmatprep.subr.bf16.mxu0 0
    %3845 = vmatpush1.bf16.xpose.msra.mxu0 0
    %3846 = vmatprep.subr.bf16.mxu0 0
    %3847 = vmatpush1.bf16.xpose.msra.mxu0 0
    %3848 = vmatprep.subr.bf16.mxu0 0
    %3849 = vmatpush1.bf16.xpose.msra.mxu0 0
    %3850 = vmatprep.subr.bf16.mxu0 0
    %3851 = vmatpush1.bf16.xpose.msra.mxu0 0
    %3852 = vmatprep.subr.bf16.mxu0 0
    %3853 = vmatpush1.bf16.xpose.msra.mxu0 0
    %3854 = vmatprep.subr.bf16.mxu0 0
    %3855 = vmatpush1.bf16.xpose.msra.mxu0 0
    %3856 = vmatprep.subr.bf16.mxu0 0
    %3857 = vmatpush1.bf16.xpose.msra.mxu0 0
    %3858 = vmatprep.subr.bf16.mxu0 0
    %3859 = vmatpush1.bf16.xpose.msra.mxu0 0
    %3860 = vmatprep.subr.bf16.mxu0 0
    %3861 = vmatpush1.bf16.xpose.msra.mxu0 0
    %3862 = vmatprep.subr.bf16.mxu0 0
    %3863 = vmatpush1.bf16.xpose.msra.mxu0 0
    %3864 = vmatprep.subr.bf16.mxu0 0
    %3865 = vmatpush1.bf16.xpose.msra.mxu0 0
    %3866 = vmatprep.mubr.bf16.mxu0 0
    %3867 = vmatmul.mubr.bf16.gmra.mrb[0].mxu0 %v3829
    %v3868 = vpop.f32.mrb[0].mxu0
    %v3869 = vadd.f32 %v1102, %v3868
    %v3870 = vpop.f32.mrb[0].mxu0
    %v3871 = vpop.f32.mrb[0].mxu0
    %v3872 = vpop.f32.mrb[0].mxu0
    %3873 = vdwg.mxu0
    %v3875 = vsel %vm1105, %v3543, 0
    %v3878 = vsel %vm1105, %v3551, 0
    %3880 = vmatprep.subr.bf16.mxu0 0
    %3881 = vmatpush1.bf16.xpose.msra.mxu0 %v3878
    %3882 = vmatprep.subr.bf16.mxu0 0
    %3883 = vmatpush1.bf16.xpose.msra.mxu0 0
    %3884 = vmatprep.subr.bf16.mxu0 0
    %3885 = vmatpush1.bf16.xpose.msra.mxu0 0
    %3886 = vmatprep.subr.bf16.mxu0 0
    %3887 = vmatpush1.bf16.xpose.msra.mxu0 0
    %3888 = vmatprep.subr.bf16.mxu0 0
    %3889 = vmatpush1.bf16.xpose.msra.mxu0 0
    %3890 = vmatprep.subr.bf16.mxu0 0
    %3891 = vmatpush1.bf16.xpose.msra.mxu0 0
    %3892 = vmatprep.subr.bf16.mxu0 0
    %3893 = vmatpush1.bf16.xpose.msra.mxu0 0
    %3894 = vmatprep.subr.bf16.mxu0 0
    %3895 = vmatpush1.bf16.xpose.msra.mxu0 0
    %3896 = vmatprep.subr.bf16.mxu0 0
    %3897 = vmatpush1.bf16.xpose.msra.mxu0 0
    %3898 = vmatprep.subr.bf16.mxu0 0
    %3899 = vmatpush1.bf16.xpose.msra.mxu0 0
    %3900 = vmatprep.subr.bf16.mxu0 0
    %3901 = vmatpush1.bf16.xpose.msra.mxu0 0
    %3902 = vmatprep.subr.bf16.mxu0 0
    %3903 = vmatpush1.bf16.xpose.msra.mxu0 0
    %3904 = vmatprep.subr.bf16.mxu0 0
    %3905 = vmatpush1.bf16.xpose.msra.mxu0 0
    %3906 = vmatprep.subr.bf16.mxu0 0
    %3907 = vmatpush1.bf16.xpose.msra.mxu0 0
    %3908 = vmatprep.subr.bf16.mxu0 0
    %3909 = vmatpush1.bf16.xpose.msra.mxu0 0
    %3910 = vmatprep.subr.bf16.mxu0 0
    %3911 = vmatpush1.bf16.xpose.msra.mxu0 0
    %3912 = vmatprep.mubr.bf16.mxu0 0
    %3913 = vmatmul.mubr.bf16.gmra.mrb[0].mxu0 %v3875
    %v3914 = vpop.f32.mrb[0].mxu0
    %v3915 = vadd.f32 %v1102, %v3914
    %v3916 = vpop.f32.mrb[0].mxu0
    %v3917 = vpop.f32.mrb[0].mxu0
    %v3918 = vpop.f32.mrb[0].mxu0
    %3919 = vdwg.mxu0
    %v3920 = vsel %vm1105, %v3593, -inf
    %3921 = vmax.xlane.f32.xlu0 %v3920
    %v3922 = vpop.xlane.xlu0 %3921
    %v3923 = vsel %vm1105, %v3639, -inf
    %3924 = vmax.xlane.f32.xlu0 %v3923
    %v3925 = vpop.xlane.xlu0 %3924
    %v3926 = vsel %vm1105, %v3685, -inf
    %3927 = vmax.xlane.f32.xlu0 %v3926
    %v3928 = vpop.xlane.xlu0 %3927
    %v3929 = vsel %vm1105, %v3731, -inf
    %3930 = vmax.xlane.f32.xlu0 %v3929
    %v3931 = vpop.xlane.xlu0 %3930
    %v3932 = vsel %vm1105, %v3777, -inf
    %3933 = vmax.xlane.f32.xlu0 %v3932
    %v3934 = vpop.xlane.xlu0 %3933
    %v3935 = vsel %vm1105, %v3823, -inf
    %3936 = vmax.xlane.f32.xlu0 %v3935
    %v3937 = vpop.xlane.xlu0 %3936
    %v3938 = vsel %vm1105, %v3869, -inf
    %3939 = vmax.xlane.f32.xlu0 %v3938
    %v3940 = vpop.xlane.xlu0 %3939
    %v3941 = vsel %vm1105, %v3915, -inf
    %3942 = vmax.xlane.f32.xlu0 %v3941
    %v3943 = vpop.xlane.xlu0 %3942
    %v3944 = vsub.f32 %v3593, %v3922
    %v3945 = vsub.f32 %v3639, %v3925
    %v3946 = vsub.f32 %v3685, %v3928
    %v3947 = vsub.f32 %v3731, %v3931
    %v3948 = vsub.f32 %v3777, %v3934
    %v3949 = vsub.f32 %v3823, %v3937
    %v3950 = vsub.f32 %v3869, %v3940
    %v3951 = vsub.f32 %v3915, %v3943
    %v3952 = vmul.f32 %v3944, 1.442695
    %v3953 = vpow.pop %v3952
    %v3954 = vmul.f32 %v3945, 1.442695
    %v3955 = vpow.pop %v3954
    %v3956 = vmul.f32 %v3946, 1.442695
    %v3957 = vpow.pop %v3956
    %v3958 = vmul.f32 %v3947, 1.442695
    %v3959 = vpow.pop %v3958
    %v3960 = vmul.f32 %v3948, 1.442695
    %v3961 = vpow.pop %v3960
    %v3962 = vmul.f32 %v3949, 1.442695
    %v3963 = vpow.pop %v3962
    %v3964 = vmul.f32 %v3950, 1.442695
    %v3965 = vpow.pop %v3964
    %v3966 = vmul.f32 %v3951, 1.442695
    %v3967 = vpow.pop %v3966
    %v3968 = vsel %vm1105, %v3953, 0.0
    %3969 = vadd.xlane.f32.xlu0 %v3968
    %v3970 = vpop.xlane.xlu0 %3969
    %v3971 = vsel %vm1105, %v3955, 0.0
    %3972 = vadd.xlane.f32.xlu0 %v3971
    %v3973 = vpop.xlane.xlu0 %3972
    %v3974 = vsel %vm1105, %v3957, 0.0
    %3975 = vadd.xlane.f32.xlu0 %v3974
    %v3976 = vpop.xlane.xlu0 %3975
    %v3977 = vsel %vm1105, %v3959, 0.0
    %3978 = vadd.xlane.f32.xlu0 %v3977
    %v3979 = vpop.xlane.xlu0 %3978
    %v3980 = vsel %vm1105, %v3961, 0.0
    %3981 = vadd.xlane.f32.xlu0 %v3980
    %v3982 = vpop.xlane.xlu0 %3981
    %v3983 = vsel %vm1105, %v3963, 0.0
    %3984 = vadd.xlane.f32.xlu0 %v3983
    %v3985 = vpop.xlane.xlu0 %3984
    %v3986 = vsel %vm1105, %v3965, 0.0
    %3987 = vadd.xlane.f32.xlu0 %v3986
    %v3988 = vpop.xlane.xlu0 %3987
    %v3989 = vsel %vm1105, %v3967, 0.0
    %3990 = vadd.xlane.f32.xlu0 %v3989
    %v3991 = vpop.xlane.xlu0 %3990
    %v3992 = vpack.c.bf16 %v3953, %v3953
    %v3993 = vpack.c.bf16 %v3955, %v3955
    %v3994 = vpack.c.bf16 %v3957, %v3957
    %v3995 = vpack.c.bf16 %v3959, %v3959
    %v3996 = vpack.c.bf16 %v3961, %v3961
    %v3997 = vpack.c.bf16 %v3963, %v3963
    %v3998 = vpack.c.bf16 %v3965, %v3965
    %v3999 = vpack.c.bf16 %v3967, %v3967
    %v4000 = vpack.c.bf16 %v3328, %v3328
    %v4001 = vpack.c.bf16 %v3329, %v3329
    %v4002 = vpack.c.bf16 %v3330, %v3330
    %v4003 = vpack.c.bf16 %v3331, %v3331
    %v4004 = vpack.c.bf16 %v3532, %v3532
    %v4005 = vpack.c.bf16 %v3533, %v3533
    %v4006 = vpack.c.bf16 %v3534, %v3534
    %v4007 = vpack.c.bf16 %v3535, %v3535
    %v4009 = vsel %vm1105, %v3992, 0
    %v4012 = vsel %vm1565, %v4000, 0
    %4014 = vmatprep.subr.bf16.mxu0 0
    %4015 = vmatpush1.bf16.msra.mxu0 %v4012
    %4016 = vmatprep.subr.bf16.mxu0 0
    %4017 = vmatpush1.bf16.msra.mxu0 0
    %4018 = vmatprep.subr.bf16.mxu0 0
    %4019 = vmatpush1.bf16.msra.mxu0 0
    %4020 = vmatprep.subr.bf16.mxu0 0
    %4021 = vmatpush1.bf16.msra.mxu0 0
    %4022 = vmatprep.subr.bf16.mxu0 0
    %4023 = vmatpush1.bf16.msra.mxu0 0
    %4024 = vmatprep.subr.bf16.mxu0 0
    %4025 = vmatpush1.bf16.msra.mxu0 0
    %4026 = vmatprep.subr.bf16.mxu0 0
    %4027 = vmatpush1.bf16.msra.mxu0 0
    %4028 = vmatprep.subr.bf16.mxu0 0
    %4029 = vmatpush1.bf16.msra.mxu0 0
    %4030 = vmatprep.subr.bf16.mxu0 0
    %4031 = vmatpush1.bf16.msra.mxu0 0
    %4032 = vmatprep.subr.bf16.mxu0 0
    %4033 = vmatpush1.bf16.msra.mxu0 0
    %4034 = vmatprep.subr.bf16.mxu0 0
    %4035 = vmatpush1.bf16.msra.mxu0 0
    %4036 = vmatprep.subr.bf16.mxu0 0
    %4037 = vmatpush1.bf16.msra.mxu0 0
    %4038 = vmatprep.subr.bf16.mxu0 0
    %4039 = vmatpush1.bf16.msra.mxu0 0
    %4040 = vmatprep.subr.bf16.mxu0 0
    %4041 = vmatpush1.bf16.msra.mxu0 0
    %4042 = vmatprep.subr.bf16.mxu0 0
    %4043 = vmatpush1.bf16.msra.mxu0 0
    %4044 = vmatprep.subr.bf16.mxu0 0
    %4045 = vmatpush1.bf16.msra.mxu0 0
    %4046 = vmatprep.mubr.bf16.mxu0 0
    %4047 = vmatmul.mubr.bf16.gmra.mrb[0].mxu0 %v4009
    %v4048 = vpop.f32.mrb[0].mxu0
    %v4049 = vadd.f32 0.0, %v4048
    %v4050 = vpop.f32.mrb[0].mxu0
    %v4051 = vpop.f32.mrb[0].mxu0
    %v4052 = vpop.f32.mrb[0].mxu0
    %4053 = vdwg.mxu0
    %v4055 = vsel %vm1105, %v3993, 0
    %v4058 = vsel %vm1565, %v4001, 0
    %4060 = vmatprep.subr.bf16.mxu0 0
    %4061 = vmatpush1.bf16.msra.mxu0 %v4058
    %4062 = vmatprep.subr.bf16.mxu0 0
    %4063 = vmatpush1.bf16.msra.mxu0 0
    %4064 = vmatprep.subr.bf16.mxu0 0
    %4065 = vmatpush1.bf16.msra.mxu0 0
    %4066 = vmatprep.subr.bf16.mxu0 0
    %4067 = vmatpush1.bf16.msra.mxu0 0
    %4068 = vmatprep.subr.bf16.mxu0 0
    %4069 = vmatpush1.bf16.msra.mxu0 0
    %4070 = vmatprep.subr.bf16.mxu0 0
    %4071 = vmatpush1.bf16.msra.mxu0 0
    %4072 = vmatprep.subr.bf16.mxu0 0
    %4073 = vmatpush1.bf16.msra.mxu0 0
    %4074 = vmatprep.subr.bf16.mxu0 0
    %4075 = vmatpush1.bf16.msra.mxu0 0
    %4076 = vmatprep.subr.bf16.mxu0 0
    %4077 = vmatpush1.bf16.msra.mxu0 0
    %4078 = vmatprep.subr.bf16.mxu0 0
    %4079 = vmatpush1.bf16.msra.mxu0 0
    %4080 = vmatprep.subr.bf16.mxu0 0
    %4081 = vmatpush1.bf16.msra.mxu0 0
    %4082 = vmatprep.subr.bf16.mxu0 0
    %4083 = vmatpush1.bf16.msra.mxu0 0
    %4084 = vmatprep.subr.bf16.mxu0 0
    %4085 = vmatpush1.bf16.msra.mxu0 0
    %4086 = vmatprep.subr.bf16.mxu0 0
    %4087 = vmatpush1.bf16.msra.mxu0 0
    %4088 = vmatprep.subr.bf16.mxu0 0
    %4089 = vmatpush1.bf16.msra.mxu0 0
    %4090 = vmatprep.subr.bf16.mxu0 0
    %4091 = vmatpush1.bf16.msra.mxu0 0
    %4092 = vmatprep.mubr.bf16.mxu0 0
    %4093 = vmatmul.mubr.bf16.gmra.mrb[0].mxu0 %v4055
    %v4094 = vpop.f32.mrb[0].mxu0
    %v4095 = vadd.f32 0.0, %v4094
    %v4096 = vpop.f32.mrb[0].mxu0
    %v4097 = vpop.f32.mrb[0].mxu0
    %v4098 = vpop.f32.mrb[0].mxu0
    %4099 = vdwg.mxu0
    %v4101 = vsel %vm1105, %v3994, 0
    %v4104 = vsel %vm1565, %v4002, 0
    %4106 = vmatprep.subr.bf16.mxu0 0
    %4107 = vmatpush1.bf16.msra.mxu0 %v4104
    %4108 = vmatprep.subr.bf16.mxu0 0
    %4109 = vmatpush1.bf16.msra.mxu0 0
    %4110 = vmatprep.subr.bf16.mxu0 0
    %4111 = vmatpush1.bf16.msra.mxu0 0
    %4112 = vmatprep.subr.bf16.mxu0 0
    %4113 = vmatpush1.bf16.msra.mxu0 0
    %4114 = vmatprep.subr.bf16.mxu0 0
    %4115 = vmatpush1.bf16.msra.mxu0 0
    %4116 = vmatprep.subr.bf16.mxu0 0
    %4117 = vmatpush1.bf16.msra.mxu0 0
    %4118 = vmatprep.subr.bf16.mxu0 0
    %4119 = vmatpush1.bf16.msra.mxu0 0
    %4120 = vmatprep.subr.bf16.mxu0 0
    %4121 = vmatpush1.bf16.msra.mxu0 0
    %4122 = vmatprep.subr.bf16.mxu0 0
    %4123 = vmatpush1.bf16.msra.mxu0 0
    %4124 = vmatprep.subr.bf16.mxu0 0
    %4125 = vmatpush1.bf16.msra.mxu0 0
    %4126 = vmatprep.subr.bf16.mxu0 0
    %4127 = vmatpush1.bf16.msra.mxu0 0
    %4128 = vmatprep.subr.bf16.mxu0 0
    %4129 = vmatpush1.bf16.msra.mxu0 0
    %4130 = vmatprep.subr.bf16.mxu0 0
    %4131 = vmatpush1.bf16.msra.mxu0 0
    %4132 = vmatprep.subr.bf16.mxu0 0
    %4133 = vmatpush1.bf16.msra.mxu0 0
    %4134 = vmatprep.subr.bf16.mxu0 0
    %4135 = vmatpush1.bf16.msra.mxu0 0
    %4136 = vmatprep.subr.bf16.mxu0 0
    %4137 = vmatpush1.bf16.msra.mxu0 0
    %4138 = vmatprep.mubr.bf16.mxu0 0
    %4139 = vmatmul.mubr.bf16.gmra.mrb[0].mxu0 %v4101
    %v4140 = vpop.f32.mrb[0].mxu0
    %v4141 = vadd.f32 0.0, %v4140
    %v4142 = vpop.f32.mrb[0].mxu0
    %v4143 = vpop.f32.mrb[0].mxu0
    %v4144 = vpop.f32.mrb[0].mxu0
    %4145 = vdwg.mxu0
    %v4147 = vsel %vm1105, %v3995, 0
    %v4150 = vsel %vm1565, %v4003, 0
    %4152 = vmatprep.subr.bf16.mxu0 0
    %4153 = vmatpush1.bf16.msra.mxu0 %v4150
    %4154 = vmatprep.subr.bf16.mxu0 0
    %4155 = vmatpush1.bf16.msra.mxu0 0
    %4156 = vmatprep.subr.bf16.mxu0 0
    %4157 = vmatpush1.bf16.msra.mxu0 0
    %4158 = vmatprep.subr.bf16.mxu0 0
    %4159 = vmatpush1.bf16.msra.mxu0 0
    %4160 = vmatprep.subr.bf16.mxu0 0
    %4161 = vmatpush1.bf16.msra.mxu0 0
    %4162 = vmatprep.subr.bf16.mxu0 0
    %4163 = vmatpush1.bf16.msra.mxu0 0
    %4164 = vmatprep.subr.bf16.mxu0 0
    %4165 = vmatpush1.bf16.msra.mxu0 0
    %4166 = vmatprep.subr.bf16.mxu0 0
    %4167 = vmatpush1.bf16.msra.mxu0 0
    %4168 = vmatprep.subr.bf16.mxu0 0
    %4169 = vmatpush1.bf16.msra.mxu0 0
    %4170 = vmatprep.subr.bf16.mxu0 0
    %4171 = vmatpush1.bf16.msra.mxu0 0
    %4172 = vmatprep.subr.bf16.mxu0 0
    %4173 = vmatpush1.bf16.msra.mxu0 0
    %4174 = vmatprep.subr.bf16.mxu0 0
    %4175 = vmatpush1.bf16.msra.mxu0 0
    %4176 = vmatprep.subr.bf16.mxu0 0
    %4177 = vmatpush1.bf16.msra.mxu0 0
    %4178 = vmatprep.subr.bf16.mxu0 0
    %4179 = vmatpush1.bf16.msra.mxu0 0
    %4180 = vmatprep.subr.bf16.mxu0 0
    %4181 = vmatpush1.bf16.msra.mxu0 0
    %4182 = vmatprep.subr.bf16.mxu0 0
    %4183 = vmatpush1.bf16.msra.mxu0 0
    %4184 = vmatprep.mubr.bf16.mxu0 0
    %4185 = vmatmul.mubr.bf16.gmra.mrb[0].mxu0 %v4147
    %v4186 = vpop.f32.mrb[0].mxu0
    %v4187 = vadd.f32 0.0, %v4186
    %v4188 = vpop.f32.mrb[0].mxu0
    %v4189 = vpop.f32.mrb[0].mxu0
    %v4190 = vpop.f32.mrb[0].mxu0
    %4191 = vdwg.mxu0
    %v4193 = vsel %vm1105, %v3996, 0
    %v4196 = vsel %vm1565, %v4004, 0
    %4198 = vmatprep.subr.bf16.mxu0 0
    %4199 = vmatpush1.bf16.msra.mxu0 %v4196
    %4200 = vmatprep.subr.bf16.mxu0 0
    %4201 = vmatpush1.bf16.msra.mxu0 0
    %4202 = vmatprep.subr.bf16.mxu0 0
    %4203 = vmatpush1.bf16.msra.mxu0 0
    %4204 = vmatprep.subr.bf16.mxu0 0
    %4205 = vmatpush1.bf16.msra.mxu0 0
    %4206 = vmatprep.subr.bf16.mxu0 0
    %4207 = vmatpush1.bf16.msra.mxu0 0
    %4208 = vmatprep.subr.bf16.mxu0 0
    %4209 = vmatpush1.bf16.msra.mxu0 0
    %4210 = vmatprep.subr.bf16.mxu0 0
    %4211 = vmatpush1.bf16.msra.mxu0 0
    %4212 = vmatprep.subr.bf16.mxu0 0
    %4213 = vmatpush1.bf16.msra.mxu0 0
    %4214 = vmatprep.subr.bf16.mxu0 0
    %4215 = vmatpush1.bf16.msra.mxu0 0
    %4216 = vmatprep.subr.bf16.mxu0 0
    %4217 = vmatpush1.bf16.msra.mxu0 0
    %4218 = vmatprep.subr.bf16.mxu0 0
    %4219 = vmatpush1.bf16.msra.mxu0 0
    %4220 = vmatprep.subr.bf16.mxu0 0
    %4221 = vmatpush1.bf16.msra.mxu0 0
    %4222 = vmatprep.subr.bf16.mxu0 0
    %4223 = vmatpush1.bf16.msra.mxu0 0
    %4224 = vmatprep.subr.bf16.mxu0 0
    %4225 = vmatpush1.bf16.msra.mxu0 0
    %4226 = vmatprep.subr.bf16.mxu0 0
    %4227 = vmatpush1.bf16.msra.mxu0 0
    %4228 = vmatprep.subr.bf16.mxu0 0
    %4229 = vmatpush1.bf16.msra.mxu0 0
    %4230 = vmatprep.mubr.bf16.mxu0 0
    %4231 = vmatmul.mubr.bf16.gmra.mrb[0].mxu0 %v4193
    %v4232 = vpop.f32.mrb[0].mxu0
    %v4233 = vadd.f32 0.0, %v4232
    %v4234 = vpop.f32.mrb[0].mxu0
    %v4235 = vpop.f32.mrb[0].mxu0
    %v4236 = vpop.f32.mrb[0].mxu0
    %4237 = vdwg.mxu0
    %v4239 = vsel %vm1105, %v3997, 0
    %v4242 = vsel %vm1565, %v4005, 0
    %4244 = vmatprep.subr.bf16.mxu0 0
    %4245 = vmatpush1.bf16.msra.mxu0 %v4242
    %4246 = vmatprep.subr.bf16.mxu0 0
    %4247 = vmatpush1.bf16.msra.mxu0 0
    %4248 = vmatprep.subr.bf16.mxu0 0
    %4249 = vmatpush1.bf16.msra.mxu0 0
    %4250 = vmatprep.subr.bf16.mxu0 0
    %4251 = vmatpush1.bf16.msra.mxu0 0
    %4252 = vmatprep.subr.bf16.mxu0 0
    %4253 = vmatpush1.bf16.msra.mxu0 0
    %4254 = vmatprep.subr.bf16.mxu0 0
    %4255 = vmatpush1.bf16.msra.mxu0 0
    %4256 = vmatprep.subr.bf16.mxu0 0
    %4257 = vmatpush1.bf16.msra.mxu0 0
    %4258 = vmatprep.subr.bf16.mxu0 0
    %4259 = vmatpush1.bf16.msra.mxu0 0
    %4260 = vmatprep.subr.bf16.mxu0 0
    %4261 = vmatpush1.bf16.msra.mxu0 0
    %4262 = vmatprep.subr.bf16.mxu0 0
    %4263 = vmatpush1.bf16.msra.mxu0 0
    %4264 = vmatprep.subr.bf16.mxu0 0
    %4265 = vmatpush1.bf16.msra.mxu0 0
    %4266 = vmatprep.subr.bf16.mxu0 0
    %4267 = vmatpush1.bf16.msra.mxu0 0
    %4268 = vmatprep.subr.bf16.mxu0 0
    %4269 = vmatpush1.bf16.msra.mxu0 0
    %4270 = vmatprep.subr.bf16.mxu0 0
    %4271 = vmatpush1.bf16.msra.mxu0 0
    %4272 = vmatprep.subr.bf16.mxu0 0
    %4273 = vmatpush1.bf16.msra.mxu0 0
    %4274 = vmatprep.subr.bf16.mxu0 0
    %4275 = vmatpush1.bf16.msra.mxu0 0
    %4276 = vmatprep.mubr.bf16.mxu0 0
    %4277 = vmatmul.mubr.bf16.gmra.mrb[0].mxu0 %v4239
    %v4278 = vpop.f32.mrb[0].mxu0
    %v4279 = vadd.f32 0.0, %v4278
    %v4280 = vpop.f32.mrb[0].mxu0
    %v4281 = vpop.f32.mrb[0].mxu0
    %v4282 = vpop.f32.mrb[0].mxu0
    %4283 = vdwg.mxu0
    %v4285 = vsel %vm1105, %v3998, 0
    %v4288 = vsel %vm1565, %v4006, 0
    %4290 = vmatprep.subr.bf16.mxu0 0
    %4291 = vmatpush1.bf16.msra.mxu0 %v4288
    %4292 = vmatprep.subr.bf16.mxu0 0
    %4293 = vmatpush1.bf16.msra.mxu0 0
    %4294 = vmatprep.subr.bf16.mxu0 0
    %4295 = vmatpush1.bf16.msra.mxu0 0
    %4296 = vmatprep.subr.bf16.mxu0 0
    %4297 = vmatpush1.bf16.msra.mxu0 0
    %4298 = vmatprep.subr.bf16.mxu0 0
    %4299 = vmatpush1.bf16.msra.mxu0 0
    %4300 = vmatprep.subr.bf16.mxu0 0
    %4301 = vmatpush1.bf16.msra.mxu0 0
    %4302 = vmatprep.subr.bf16.mxu0 0
    %4303 = vmatpush1.bf16.msra.mxu0 0
    %4304 = vmatprep.subr.bf16.mxu0 0
    %4305 = vmatpush1.bf16.msra.mxu0 0
    %4306 = vmatprep.subr.bf16.mxu0 0
    %4307 = vmatpush1.bf16.msra.mxu0 0
    %4308 = vmatprep.subr.bf16.mxu0 0
    %4309 = vmatpush1.bf16.msra.mxu0 0
    %4310 = vmatprep.subr.bf16.mxu0 0
    %4311 = vmatpush1.bf16.msra.mxu0 0
    %4312 = vmatprep.subr.bf16.mxu0 0
    %4313 = vmatpush1.bf16.msra.mxu0 0
    %4314 = vmatprep.subr.bf16.mxu0 0
    %4315 = vmatpush1.bf16.msra.mxu0 0
    %4316 = vmatprep.subr.bf16.mxu0 0
    %4317 = vmatpush1.bf16.msra.mxu0 0
    %4318 = vmatprep.subr.bf16.mxu0 0
    %4319 = vmatpush1.bf16.msra.mxu0 0
    %4320 = vmatprep.subr.bf16.mxu0 0
    %4321 = vmatpush1.bf16.msra.mxu0 0
    %4322 = vmatprep.mubr.bf16.mxu0 0
    %4323 = vmatmul.mubr.bf16.gmra.mrb[0].mxu0 %v4285
    %v4324 = vpop.f32.mrb[0].mxu0
    %v4325 = vadd.f32 0.0, %v4324
    %v4326 = vpop.f32.mrb[0].mxu0
    %v4327 = vpop.f32.mrb[0].mxu0
    %v4328 = vpop.f32.mrb[0].mxu0
    %4329 = vdwg.mxu0
    %v4331 = vsel %vm1105, %v3999, 0
    %v4334 = vsel %vm1565, %v4007, 0
    %4336 = vmatprep.subr.bf16.mxu0 0
    %4337 = vmatpush1.bf16.msra.mxu0 %v4334
    %4338 = vmatprep.subr.bf16.mxu0 0
    %4339 = vmatpush1.bf16.msra.mxu0 0
    %4340 = vmatprep.subr.bf16.mxu0 0
    %4341 = vmatpush1.bf16.msra.mxu0 0
    %4342 = vmatprep.subr.bf16.mxu0 0
    %4343 = vmatpush1.bf16.msra.mxu0 0
    %4344 = vmatprep.subr.bf16.mxu0 0
    %4345 = vmatpush1.bf16.msra.mxu0 0
    %4346 = vmatprep.subr.bf16.mxu0 0
    %4347 = vmatpush1.bf16.msra.mxu0 0
    %4348 = vmatprep.subr.bf16.mxu0 0
    %4349 = vmatpush1.bf16.msra.mxu0 0
    %4350 = vmatprep.subr.bf16.mxu0 0
    %4351 = vmatpush1.bf16.msra.mxu0 0
    %4352 = vmatprep.subr.bf16.mxu0 0
    %4353 = vmatpush1.bf16.msra.mxu0 0
    %4354 = vmatprep.subr.bf16.mxu0 0
    %4355 = vmatpush1.bf16.msra.mxu0 0
    %4356 = vmatprep.subr.bf16.mxu0 0
    %4357 = vmatpush1.bf16.msra.mxu0 0
    %4358 = vmatprep.subr.bf16.mxu0 0
    %4359 = vmatpush1.bf16.msra.mxu0 0
    %4360 = vmatprep.subr.bf16.mxu0 0
    %4361 = vmatpush1.bf16.msra.mxu0 0
    %4362 = vmatprep.subr.bf16.mxu0 0
    %4363 = vmatpush1.bf16.msra.mxu0 0
    %4364 = vmatprep.subr.bf16.mxu0 0
    %4365 = vmatpush1.bf16.msra.mxu0 0
    %4366 = vmatprep.subr.bf16.mxu0 0
    %4367 = vmatpush1.bf16.msra.mxu0 0
    %4368 = vmatprep.mubr.bf16.mxu0 0
    %4369 = vmatmul.mubr.bf16.gmra.mrb[0].mxu0 %v4331
    %v4370 = vpop.f32.mrb[0].mxu0
    %v4371 = vadd.f32 0.0, %v4370
    %v4372 = vpop.f32.mrb[0].mxu0
    %v4373 = vpop.f32.mrb[0].mxu0
    %v4374 = vpop.f32.mrb[0].mxu0
    %4375 = vdwg.mxu0
    %v4376 = vrcp.pop %v3970
    %v4377 = vrcp.pop %v3973
    %v4378 = vrcp.pop %v3976
    %v4379 = vrcp.pop %v3979
    %v4380 = vrcp.pop %v3982
    %v4381 = vrcp.pop %v3985
    %v4382 = vrcp.pop %v3988
    %v4383 = vrcp.pop %v3991
    %v4384 = vmul.f32 %v4049, %v4376
    %v4385 = vmul.f32 %v4095, %v4377
    %v4386 = vmul.f32 %v4141, %v4378
    %v4387 = vmul.f32 %v4187, %v4379
    %v4388 = vmul.f32 %v4233, %v4380
    %v4389 = vmul.f32 %v4279, %v4381
    %v4390 = vmul.f32 %v4325, %v4382
    %v4391 = vmul.f32 %v4371, %v4383
    %v4392 = vcombine.low %v4384, %v4386
    %v4393 = vcombine.high %v4384, %v4386
    %v4395 = vunpack.c.l.s4 1983009808
    %v4396 = vunpack.c.0.s8 %v4395
    %v4397 = vlaneseq
    %v4398 = vshrl.u32 %v4397, 7
    %v4399 = vsub.s32 %v4396, %v4398
    %v4400 = vrot.slane %v4392, %v4399
    %v4402 = vunpack.c.l.s4 1983009808
    %v4403 = vunpack.c.0.s8 %v4402
    %v4404 = vlaneseq
    %v4405 = vshrl.u32 %v4404, 7
    %v4406 = vsub.s32 %v4403, %v4405
    %v4407 = vrot.slane %v4393, %v4406
    %v4408 = vcombine.low %v4385, %v4387
    %v4409 = vcombine.high %v4385, %v4387
    %v4411 = vunpack.c.l.s4 1983009808
    %v4412 = vunpack.c.0.s8 %v4411
    %v4413 = vlaneseq
    %v4414 = vshrl.u32 %v4413, 7
    %v4415 = vsub.s32 %v4412, %v4414
    %v4416 = vrot.slane %v4408, %v4415
    %v4418 = vunpack.c.l.s4 1983009808
    %v4419 = vunpack.c.0.s8 %v4418
    %v4420 = vlaneseq
    %v4421 = vshrl.u32 %v4420, 7
    %v4422 = vsub.s32 %v4419, %v4421
    %v4423 = vrot.slane %v4409, %v4422
    %v4424 = vcombine.low %v4400, %v4416
    %v4425 = vcombine.high %v4400, %v4416
    %v4427 = vunpack.c.l.s4 1934713408
    %v4428 = vunpack.c.0.s8 %v4427
    %v4429 = vlaneseq
    %v4430 = vshrl.u32 %v4429, 7
    %v4431 = vsub.s32 %v4428, %v4430
    %v4432 = vrot.slane %v4424, %v4431
    %v4434 = vunpack.c.l.s4 1934713408
    %v4435 = vunpack.c.0.s8 %v4434
    %v4436 = vlaneseq
    %v4437 = vshrl.u32 %v4436, 7
    %v4438 = vsub.s32 %v4435, %v4437
    %v4439 = vrot.slane %v4425, %v4438
    %v4440 = vcombine.low %v4407, %v4423
    %v4441 = vcombine.high %v4407, %v4423
    %v4443 = vunpack.c.l.s4 1934713408
    %v4444 = vunpack.c.0.s8 %v4443
    %v4445 = vlaneseq
    %v4446 = vshrl.u32 %v4445, 7
    %v4447 = vsub.s32 %v4444, %v4446
    %v4448 = vrot.slane %v4440, %v4447
    %v4450 = vunpack.c.l.s4 1934713408
    %v4451 = vunpack.c.0.s8 %v4450
    %v4452 = vlaneseq
    %v4453 = vshrl.u32 %v4452, 7
    %v4454 = vsub.s32 %v4451, %v4453
    %v4455 = vrot.slane %v4441, %v4454
    %v4456 = vcombine.high %v4432, 0.0
    %v4457 = vcombine.high %v4439, 0.0
    %v4458 = vcombine.high %v4448, 0.0
    %v4459 = vcombine.high %v4455, 0.0
    %v4460 = vcombine.low %v4388, %v4390
    %v4461 = vcombine.high %v4388, %v4390
    %v4463 = vunpack.c.l.s4 1983009808
    %v4464 = vunpack.c.0.s8 %v4463
    %v4465 = vlaneseq
    %v4466 = vshrl.u32 %v4465, 7
    %v4467 = vsub.s32 %v4464, %v4466
    %v4468 = vrot.slane %v4460, %v4467
    %v4470 = vunpack.c.l.s4 1983009808
    %v4471 = vunpack.c.0.s8 %v4470
    %v4472 = vlaneseq
    %v4473 = vshrl.u32 %v4472, 7
    %v4474 = vsub.s32 %v4471, %v4473
    %v4475 = vrot.slane %v4461, %v4474
    %v4476 = vcombine.low %v4389, %v4391
    %v4477 = vcombine.high %v4389, %v4391
    %v4479 = vunpack.c.l.s4 1983009808
    %v4480 = vunpack.c.0.s8 %v4479
    %v4481 = vlaneseq
    %v4482 = vshrl.u32 %v4481, 7
    %v4483 = vsub.s32 %v4480, %v4482
    %v4484 = vrot.slane %v4476, %v4483
    %v4486 = vunpack.c.l.s4 1983009808
    %v4487 = vunpack.c.0.s8 %v4486
    %v4488 = vlaneseq
    %v4489 = vshrl.u32 %v4488, 7
    %v4490 = vsub.s32 %v4487, %v4489
    %v4491 = vrot.slane %v4477, %v4490
    %v4492 = vcombine.low %v4468, %v4484
    %v4493 = vcombine.high %v4468, %v4484
    %v4495 = vunpack.c.l.s4 1934713408
    %v4496 = vunpack.c.0.s8 %v4495
    %v4497 = vlaneseq
    %v4498 = vshrl.u32 %v4497, 7
    %v4499 = vsub.s32 %v4496, %v4498
    %v4500 = vrot.slane %v4492, %v4499
    %v4502 = vunpack.c.l.s4 1934713408
    %v4503 = vunpack.c.0.s8 %v4502
    %v4504 = vlaneseq
    %v4505 = vshrl.u32 %v4504, 7
    %v4506 = vsub.s32 %v4503, %v4505
    %v4507 = vrot.slane %v4493, %v4506
    %v4508 = vcombine.low %v4475, %v4491
    %v4509 = vcombine.high %v4475, %v4491
    %v4511 = vunpack.c.l.s4 1934713408
    %v4512 = vunpack.c.0.s8 %v4511
    %v4513 = vlaneseq
    %v4514 = vshrl.u32 %v4513, 7
    %v4515 = vsub.s32 %v4512, %v4514
    %v4516 = vrot.slane %v4508, %v4515
    %v4518 = vunpack.c.l.s4 1934713408
    %v4519 = vunpack.c.0.s8 %v4518
    %v4520 = vlaneseq
    %v4521 = vshrl.u32 %v4520, 7
    %v4522 = vsub.s32 %v4519, %v4521
    %v4523 = vrot.slane %v4509, %v4522
    %v4524 = vcombine.high %v4500, 0.0
    %v4525 = vcombine.high %v4507, 0.0
    %v4526 = vcombine.high %v4516, 0.0
    %v4527 = vcombine.high %v4523, 0.0
    %v4528 = vcombine.low %v4432, %v4439
    %v4530 = vunpack.c.l.s4 1983009808
    %v4531 = vunpack.c.0.s8 %v4530
    %v4532 = vlaneseq
    %v4533 = vshrl.u32 %v4532, 7
    %v4534 = vsub.s32 %v4531, %v4533
    %v4535 = vrot.slane %v4528, %v4534
    %v4536 = vcombine.low %v4456, %v4457
    %v4538 = vunpack.c.l.s4 1983009808
    %v4539 = vunpack.c.0.s8 %v4538
    %v4540 = vlaneseq
    %v4541 = vshrl.u32 %v4540, 7
    %v4542 = vsub.s32 %v4539, %v4541
    %v4543 = vrot.slane %v4536, %v4542
    %v4544 = vcombine.low %v4448, %v4455
    %v4546 = vunpack.c.l.s4 1983009808
    %v4547 = vunpack.c.0.s8 %v4546
    %v4548 = vlaneseq
    %v4549 = vshrl.u32 %v4548, 7
    %v4550 = vsub.s32 %v4547, %v4549
    %v4551 = vrot.slane %v4544, %v4550
    %v4552 = vcombine.low %v4458, %v4459
    %v4554 = vunpack.c.l.s4 1983009808
    %v4555 = vunpack.c.0.s8 %v4554
    %v4556 = vlaneseq
    %v4557 = vshrl.u32 %v4556, 7
    %v4558 = vsub.s32 %v4555, %v4557
    %v4559 = vrot.slane %v4552, %v4558
    %v4560 = vcombine.low %v4535, %v4543
    %v4561 = vcombine.high %v4535, %v4543
    %v4563 = vunpack.c.l.s4 1934713408
    %v4564 = vunpack.c.0.s8 %v4563
    %v4565 = vlaneseq
    %v4566 = vshrl.u32 %v4565, 7
    %v4567 = vsub.s32 %v4564, %v4566
    %v4568 = vrot.slane %v4560, %v4567
    %v4570 = vunpack.c.l.s4 1934713408
    %v4571 = vunpack.c.0.s8 %v4570
    %v4572 = vlaneseq
    %v4573 = vshrl.u32 %v4572, 7
    %v4574 = vsub.s32 %v4571, %v4573
    %v4575 = vrot.slane %v4561, %v4574
    %v4576 = vcombine.low %v4551, %v4559
    %v4577 = vcombine.high %v4551, %v4559
    %v4579 = vunpack.c.l.s4 1934713408
    %v4580 = vunpack.c.0.s8 %v4579
    %v4581 = vlaneseq
    %v4582 = vshrl.u32 %v4581, 7
    %v4583 = vsub.s32 %v4580, %v4582
    %v4584 = vrot.slane %v4576, %v4583
    %v4586 = vunpack.c.l.s4 1934713408
    %v4587 = vunpack.c.0.s8 %v4586
    %v4588 = vlaneseq
    %v4589 = vshrl.u32 %v4588, 7
    %v4590 = vsub.s32 %v4587, %v4589
    %v4591 = vrot.slane %v4577, %v4590
    %v4592 = vcombine.low %v4568, %v4584
    %v4593 = vcombine.high %v4568, %v4584
    %v4594 = vcombine.low %v4575, %v4591
    %v4595 = vcombine.high %v4575, %v4591
    %v4596 = vcombine.low %v4500, %v4507
    %v4598 = vunpack.c.l.s4 1983009808
    %v4599 = vunpack.c.0.s8 %v4598
    %v4600 = vlaneseq
    %v4601 = vshrl.u32 %v4600, 7
    %v4602 = vsub.s32 %v4599, %v4601
    %v4603 = vrot.slane %v4596, %v4602
    %v4604 = vcombine.low %v4524, %v4525
    %v4606 = vunpack.c.l.s4 1983009808
    %v4607 = vunpack.c.0.s8 %v4606
    %v4608 = vlaneseq
    %v4609 = vshrl.u32 %v4608, 7
    %v4610 = vsub.s32 %v4607, %v4609
    %v4611 = vrot.slane %v4604, %v4610
    %v4612 = vcombine.low %v4516, %v4523
    %v4614 = vunpack.c.l.s4 1983009808
    %v4615 = vunpack.c.0.s8 %v4614
    %v4616 = vlaneseq
    %v4617 = vshrl.u32 %v4616, 7
    %v4618 = vsub.s32 %v4615, %v4617
    %v4619 = vrot.slane %v4612, %v4618
    %v4620 = vcombine.low %v4526, %v4527
    %v4622 = vunpack.c.l.s4 1983009808
    %v4623 = vunpack.c.0.s8 %v4622
    %v4624 = vlaneseq
    %v4625 = vshrl.u32 %v4624, 7
    %v4626 = vsub.s32 %v4623, %v4625
    %v4627 = vrot.slane %v4620, %v4626
    %v4628 = vcombine.low %v4603, %v4611
    %v4629 = vcombine.high %v4603, %v4611
    %v4631 = vunpack.c.l.s4 1934713408
    %v4632 = vunpack.c.0.s8 %v4631
    %v4633 = vlaneseq
    %v4634 = vshrl.u32 %v4633, 7
    %v4635 = vsub.s32 %v4632, %v4634
    %v4636 = vrot.slane %v4628, %v4635
    %v4638 = vunpack.c.l.s4 1934713408
    %v4639 = vunpack.c.0.s8 %v4638
    %v4640 = vlaneseq
    %v4641 = vshrl.u32 %v4640, 7
    %v4642 = vsub.s32 %v4639, %v4641
    %v4643 = vrot.slane %v4629, %v4642
    %v4644 = vcombine.low %v4619, %v4627
    %v4645 = vcombine.high %v4619, %v4627
    %v4647 = vunpack.c.l.s4 1934713408
    %v4648 = vunpack.c.0.s8 %v4647
    %v4649 = vlaneseq
    %v4650 = vshrl.u32 %v4649, 7
    %v4651 = vsub.s32 %v4648, %v4650
    %v4652 = vrot.slane %v4644, %v4651
    %v4654 = vunpack.c.l.s4 1934713408
    %v4655 = vunpack.c.0.s8 %v4654
    %v4656 = vlaneseq
    %v4657 = vshrl.u32 %v4656, 7
    %v4658 = vsub.s32 %v4655, %v4657
    %v4659 = vrot.slane %v4645, %v4658
    %v4660 = vcombine.low %v4636, %v4652
    %v4661 = vcombine.high %v4636, %v4652
    %v4662 = vcombine.low %v4643, %v4659
    %v4663 = vcombine.high %v4643, %v4659
    %4666 = vrot.lane.b32.xlu0 %v4593, 8
    %v4667 = vpop.permute.xlu0 %4666
    %4668 = vrot.lane.b32.xlu0 %v4661, 8
    %v4669 = vpop.permute.xlu0 %4668
    %4674 = vrot.lane.b32.xlu0 %v4594, 16
    %v4675 = vpop.permute.xlu0 %4674
    %4676 = vrot.lane.b32.xlu0 %v4662, 16
    %v4677 = vpop.permute.xlu0 %4676
    %4682 = vrot.lane.b32.xlu0 %v4595, 24
    %v4683 = vpop.permute.xlu0 %4682
    %4684 = vrot.lane.b32.xlu0 %v4663, 24
    %v4685 = vpop.permute.xlu0 %4684
    %v4688 = vsel %vm1105, %v4592, %v4667
    %v4689 = vsel %vm1105, %v4660, %v4669
    %v4690 = vsel %vm2245, %v4688, %v4675
    %v4691 = vsel %vm2245, %v4689, %v4677
    %v4692 = vsel %vm2248, %v4690, %v4683
    %v4693 = vsel %vm2248, %v4691, %v4685
    %v4694 = vpack.c.bf16 %v4693, %v4692
    %s4695 = scalar_lea.vmem %s6, 16
    %v4696 = vld [vmem:[%s4695] sm:$0xf]
    %v4697 = vld [vmem:[%s4695 + $0x4] sm:$0xf]
    %v4698 = vld [vmem:[%s4695 + $0x8] sm:$0xf]
    %v4699 = vld [vmem:[%s4695 + $0xc] sm:$0xf]
    %s4700 = scalar_lea.vmem %s7, 1
    %v4701 = vld [vmem:[%s4700] sm:$0x1]
    %v4703 = vlaneseq
    %v4704 = vshrl.u32 %v4703, 7
    %v4705 = vsub.s32 0, %v4704
    %v4706 = vrot.slane %v4701, %v4705
    %v4712 = vunpack.c.l.b16 %v4696
    %v4713 = vunpack.c.l.b16 %v4697
    %v4714 = vunpack.c.l.b16 %v4698
    %v4715 = vunpack.c.l.b16 %v4699
    %v4716 = vpack.c.b16 %v4713, %v4712
    %v4717 = vpack.c.b16 %v4715, %v4714
    %v4721 = vsel %vm59, %v4694, 0
    %4723 = vmatprep.subr.bf16.mxu0 0
    %4724 = vmatpush1.bf16.msra.mxu0 %v4716
    %4725 = vmatprep.subr.bf16.mxu0 0
    %4726 = vmatpush1.bf16.msra.mxu0 %v4717
    %4727 = vmatprep.subr.bf16.mxu0 0
    %4728 = vmatpush1.bf16.msra.mxu0 0
    %4729 = vmatprep.subr.bf16.mxu0 0
    %4730 = vmatpush1.bf16.msra.mxu0 0
    %4731 = vmatprep.subr.bf16.mxu0 0
    %4732 = vmatpush1.bf16.msra.mxu0 0
    %4733 = vmatprep.subr.bf16.mxu0 0
    %4734 = vmatpush1.bf16.msra.mxu0 0
    %4735 = vmatprep.subr.bf16.mxu0 0
    %4736 = vmatpush1.bf16.msra.mxu0 0
    %4737 = vmatprep.subr.bf16.mxu0 0
    %4738 = vmatpush1.bf16.msra.mxu0 0
    %4739 = vmatprep.subr.bf16.mxu0 0
    %4740 = vmatpush1.bf16.msra.mxu0 0
    %4741 = vmatprep.subr.bf16.mxu0 0
    %4742 = vmatpush1.bf16.msra.mxu0 0
    %4743 = vmatprep.subr.bf16.mxu0 0
    %4744 = vmatpush1.bf16.msra.mxu0 0
    %4745 = vmatprep.subr.bf16.mxu0 0
    %4746 = vmatpush1.bf16.msra.mxu0 0
    %4747 = vmatprep.subr.bf16.mxu0 0
    %4748 = vmatpush1.bf16.msra.mxu0 0
    %4749 = vmatprep.subr.bf16.mxu0 0
    %4750 = vmatpush1.bf16.msra.mxu0 0
    %4751 = vmatprep.subr.bf16.mxu0 0
    %4752 = vmatpush1.bf16.msra.mxu0 0
    %4753 = vmatprep.subr.bf16.mxu0 0
    %4754 = vmatpush1.bf16.msra.mxu0 0
    %4755 = vmatprep.mubr.bf16.mxu0 0
    %4756 = vmatmul.mubr.bf16.gmra.mrb[0].mxu0 %v4721
    %v4757 = vpop.f32.mrb[0].mxu0
    %v4758 = vadd.f32 %v4706, %v4757
    %v4759 = vpop.f32.mrb[0].mxu0
    %v4760 = vpop.f32.mrb[0].mxu0
    %v4761 = vadd.f32 %v4706, %v4760
    %v4762 = vpop.f32.mrb[0].mxu0
    %4763 = vdwg.mxu0
    %v4764 = vadd.f32 %v4758, %v2580
    %v4765 = vadd.f32 %v4761, %v2581
    %s4766 = scalar_lea.vmem %s8, 1
    %v4767 = vld [vmem:[%s4766] sm:$0x1]
    %s4768 = scalar_lea.vmem %s9, 1
    %v4769 = vld [vmem:[%s4768] sm:$0x1]
    %v4770 = vsel %vm59, %v4764, 0.0
    %4771 = vadd.xlane.f32.xlu0 %v4770
    %v4772 = vpop.xlane.xlu0 %4771
    %v4773 = vsel %vm59, %v4765, 0.0
    %4774 = vadd.xlane.f32.xlu0 %v4773
    %v4775 = vpop.xlane.xlu0 %4774
    %v4776 = vmul.f32 %v4772, %v66
    %v4777 = vmul.f32 %v4775, %v66
    %v4778 = vsub.f32 %v4764, %v4776
    %v4779 = vsub.f32 %v4765, %v4777
    %v4780 = vmul.f32 %v4778, %v4778
    %v4781 = vmul.f32 %v4779, %v4779
    %v4782 = vsel %vm59, %v4780, 0.0
    %4783 = vadd.xlane.f32.xlu0 %v4782
    %v4784 = vpop.xlane.xlu0 %4783
    %v4785 = vsel %vm59, %v4781, 0.0
    %4786 = vadd.xlane.f32.xlu0 %v4785
    %v4787 = vpop.xlane.xlu0 %4786
    %v4788 = vmul.f32 %v4784, %v66
    %v4789 = vmul.f32 %v4787, %v66
    %v4790 = vadd.f32 %v4788, 1e-12
    %v4791 = vadd.f32 %v4789, 1e-12
    %v4792 = vrsqrt.pop %v4790
    %v4793 = vrsqrt.pop %v4791
    %v4794 = vmul.f32 %v4778, %v4792
    %v4795 = vmul.f32 %v4779, %v4793
    %v4797 = vlaneseq
    %v4798 = vshrl.u32 %v4797, 7
    %v4799 = vsub.s32 0, %v4798
    %v4800 = vrot.slane %v4767, %v4799
    %v4802 = vmul.f32 %v4794, %v4800
    %v4803 = vmul.f32 %v4795, %v4800
    %v4805 = vlaneseq
    %v4806 = vshrl.u32 %v4805, 7
    %v4807 = vsub.s32 0, %v4806
    %v4808 = vrot.slane %v4769, %v4807
    %v4810 = vadd.f32 %v4802, %v4808
    %v4811 = vadd.f32 %v4803, %v4808
    %v4812 = vpack.c.bf16 %v4811, %v4810
    %s4813 = scalar_lea.vmem %s10, 16
    %v4814 = vld [vmem:[%s4813] sm:$0xf]
    %v4815 = vld [vmem:[%s4813 + $0x4] sm:$0xf]
    %v4816 = vld [vmem:[%s4813 + $0x8] sm:$0xf]
    %v4817 = vld [vmem:[%s4813 + $0xc] sm:$0xf]
    %s4818 = scalar_lea.vmem %s11, 1
    %v4819 = vld [vmem:[%s4818] sm:$0x1]
    %v4821 = vlaneseq
    %v4822 = vshrl.u32 %v4821, 7
    %v4823 = vsub.s32 0, %v4822
    %v4824 = vrot.slane %v4819, %v4823
    %v4830 = vunpack.c.l.b16 %v4814
    %v4831 = vunpack.c.l.b16 %v4815
    %v4832 = vunpack.c.l.b16 %v4816
    %v4833 = vunpack.c.l.b16 %v4817
    %v4834 = vpack.c.b16 %v4831, %v4830
    %v4835 = vpack.c.b16 %v4833, %v4832
    %v4839 = vsel %vm59, %v4812, 0
    %4841 = vmatprep.subr.bf16.mxu0 0
    %4842 = vmatpush1.bf16.msra.mxu0 %v4834
    %4843 = vmatprep.subr.bf16.mxu0 0
    %4844 = vmatpush1.bf16.msra.mxu0 %v4835
    %4845 = vmatprep.subr.bf16.mxu0 0
    %4846 = vmatpush1.bf16.msra.mxu0 0
    %4847 = vmatprep.subr.bf16.mxu0 0
    %4848 = vmatpush1.bf16.msra.mxu0 0
    %4849 = vmatprep.subr.bf16.mxu0 0
    %4850 = vmatpush1.bf16.msra.mxu0 0
    %4851 = vmatprep.subr.bf16.mxu0 0
    %4852 = vmatpush1.bf16.msra.mxu0 0
    %4853 = vmatprep.subr.bf16.mxu0 0
    %4854 = vmatpush1.bf16.msra.mxu0 0
    %4855 = vmatprep.subr.bf16.mxu0 0
    %4856 = vmatpush1.bf16.msra.mxu0 0
    %4857 = vmatprep.subr.bf16.mxu0 0
    %4858 = vmatpush1.bf16.msra.mxu0 0
    %4859 = vmatprep.subr.bf16.mxu0 0
    %4860 = vmatpush1.bf16.msra.mxu0 0
    %4861 = vmatprep.subr.bf16.mxu0 0
    %4862 = vmatpush1.bf16.msra.mxu0 0
    %4863 = vmatprep.subr.bf16.mxu0 0
    %4864 = vmatpush1.bf16.msra.mxu0 0
    %4865 = vmatprep.subr.bf16.mxu0 0
    %4866 = vmatpush1.bf16.msra.mxu0 0
    %4867 = vmatprep.subr.bf16.mxu0 0
    %4868 = vmatpush1.bf16.msra.mxu0 0
    %4869 = vmatprep.subr.bf16.mxu0 0
    %4870 = vmatpush1.bf16.msra.mxu0 0
    %4871 = vmatprep.subr.bf16.mxu0 0
    %4872 = vmatpush1.bf16.msra.mxu0 0
    %4873 = vmatprep.mubr.bf16.mxu0 0
    %4874 = vmatmul.mubr.bf16.gmra.mrb[0].mxu0 %v4839
    %v4875 = vpop.f32.mrb[0].mxu0
    %v4876 = vadd.f32 %v4824, %v4875
    %v4877 = vpop.f32.mrb[0].mxu0
    %v4878 = vpop.f32.mrb[0].mxu0
    %v4879 = vadd.f32 %v4824, %v4878
    %v4880 = vpop.f32.mrb[0].mxu0
    %4881 = vdwg.mxu0
    %v4882 = vmul.f32 %v4876, 0.5
    %v4883 = vmul.f32 %v4879, 0.5
    %v4884 = vmul.f32 %v4876, 0.044715
    %v4885 = vmul.f32 %v4879, 0.044715
    %v4886 = vmul.f32 %v4884, %v4876
    %v4887 = vmul.f32 %v4885, %v4879
    %v4888 = vmul.f32 %v4886, %v4876
    %v4889 = vmul.f32 %v4887, %v4879
    %v4890 = vadd.f32 %v4876, %v4888
    %v4891 = vadd.f32 %v4879, %v4889
    %v4892 = vmul.f32 %v4890, 0.7978846
    %v4893 = vmul.f32 %v4891, 0.7978846
    %v4894 = vtanh.pop %v4892
    %v4895 = vtanh.pop %v4893
    %v4896 = vadd.f32 %v4894, 1.0
    %v4897 = vadd.f32 %v4895, 1.0
    %v4898 = vmul.f32 %v4882, %v4896
    %v4899 = vmul.f32 %v4883, %v4897
    %v4900 = vpack.c.bf16 %v4899, %v4898
    %s4901 = scalar_lea.vmem %s12, 32
    %v4902 = vld [vmem:[%s4901] sm:$0xf]
    %v4903 = vld [vmem:[%s4901 + $0x4] sm:$0xf]
    %v4904 = vld [vmem:[%s4901 + $0x8] sm:$0xf]
    %v4905 = vld [vmem:[%s4901 + $0xc] sm:$0xf]
    %v4906 = vld [vmem:[%s4901 + $0x10] sm:$0xf]
    %v4907 = vld [vmem:[%s4901 + $0x14] sm:$0xf]
    %v4908 = vld [vmem:[%s4901 + $0x18] sm:$0xf]
    %v4909 = vld [vmem:[%s4901 + $0x1c] sm:$0xf]
    %s4910 = scalar_lea.vmem %s13, 1
    %v4911 = vld [vmem:[%s4910] sm:$0x1]
    %v4913 = vlaneseq
    %v4914 = vshrl.u32 %v4913, 7
    %v4915 = vsub.s32 0, %v4914
    %v4916 = vrot.slane %v4911, %v4915
    %v4926 = vunpack.c.l.b16 %v4902
    %v4927 = vunpack.c.l.b16 %v4903
    %v4928 = vunpack.c.l.b16 %v4904
    %v4929 = vunpack.c.l.b16 %v4905
    %v4930 = vunpack.c.l.b16 %v4906
    %v4931 = vunpack.c.l.b16 %v4907
    %v4932 = vunpack.c.l.b16 %v4908
    %v4933 = vunpack.c.l.b16 %v4909
    %v4934 = vpack.c.b16 %v4927, %v4926
    %v4935 = vpack.c.b16 %v4929, %v4928
    %v4936 = vpack.c.b16 %v4931, %v4930
    %v4937 = vpack.c.b16 %v4933, %v4932
    %v4943 = vsel %vm2491, %v4900, 0
    %4945 = vmatprep.subr.bf16.mxu0 0
    %4946 = vmatpush1.bf16.msra.mxu0 %v4934
    %4947 = vmatprep.subr.bf16.mxu0 0
    %4948 = vmatpush1.bf16.msra.mxu0 %v4935
    %4949 = vmatprep.subr.bf16.mxu0 0
    %4950 = vmatpush1.bf16.msra.mxu0 %v4936
    %4951 = vmatprep.subr.bf16.mxu0 0
    %4952 = vmatpush1.bf16.msra.mxu0 %v4937
    %4953 = vmatprep.subr.bf16.mxu0 0
    %4954 = vmatpush1.bf16.msra.mxu0 0
    %4955 = vmatprep.subr.bf16.mxu0 0
    %4956 = vmatpush1.bf16.msra.mxu0 0
    %4957 = vmatprep.subr.bf16.mxu0 0
    %4958 = vmatpush1.bf16.msra.mxu0 0
    %4959 = vmatprep.subr.bf16.mxu0 0
    %4960 = vmatpush1.bf16.msra.mxu0 0
    %4961 = vmatprep.subr.bf16.mxu0 0
    %4962 = vmatpush1.bf16.msra.mxu0 0
    %4963 = vmatprep.subr.bf16.mxu0 0
    %4964 = vmatpush1.bf16.msra.mxu0 0
    %4965 = vmatprep.subr.bf16.mxu0 0
    %4966 = vmatpush1.bf16.msra.mxu0 0
    %4967 = vmatprep.subr.bf16.mxu0 0
    %4968 = vmatpush1.bf16.msra.mxu0 0
    %4969 = vmatprep.subr.bf16.mxu0 0
    %4970 = vmatpush1.bf16.msra.mxu0 0
    %4971 = vmatprep.subr.bf16.mxu0 0
    %4972 = vmatpush1.bf16.msra.mxu0 0
    %4973 = vmatprep.subr.bf16.mxu0 0
    %4974 = vmatpush1.bf16.msra.mxu0 0
    %4975 = vmatprep.subr.bf16.mxu0 0
    %4976 = vmatpush1.bf16.msra.mxu0 0
    %4977 = vmatprep.mubr.bf16.mxu0 0
    %4978 = vmatmul.mubr.bf16.gmra.mrb[0].mxu0 %v4943
    %v4979 = vpop.f32.mrb[0].mxu0
    %v4980 = vadd.f32 %v4916, %v4979
    %v4981 = vpop.f32.mrb[0].mxu0
    %v4982 = vpop.f32.mrb[0].mxu0
    %v4983 = vadd.f32 %v4916, %v4982
    %v4984 = vpop.f32.mrb[0].mxu0
    %4985 = vdwg.mxu0
    %v4986 = vadd.f32 %v4980, %v4810
    %v4987 = vadd.f32 %v4983, %v4811
    %s4988 = scalar_lea.vmem %s14, 1
    %v4989 = vld [vmem:[%s4988] sm:$0x1]
    %s4990 = scalar_lea.vmem %s15, 1
    %v4991 = vld [vmem:[%s4990] sm:$0x1]
    %v4992 = vsel %vm59, %v4986, 0.0
    %4993 = vadd.xlane.f32.xlu0 %v4992
    %v4994 = vpop.xlane.xlu0 %4993
    %v4995 = vsel %vm59, %v4987, 0.0
    %4996 = vadd.xlane.f32.xlu0 %v4995
    %v4997 = vpop.xlane.xlu0 %4996
    %v4998 = vmul.f32 %v4994, %v66
    %v4999 = vmul.f32 %v4997, %v66
    %v5000 = vsub.f32 %v4986, %v4998
    %v5001 = vsub.f32 %v4987, %v4999
    %v5002 = vmul.f32 %v5000, %v5000
    %v5003 = vmul.f32 %v5001, %v5001
    %v5004 = vsel %vm59, %v5002, 0.0
    %5005 = vadd.xlane.f32.xlu0 %v5004
    %v5006 = vpop.xlane.xlu0 %5005
    %v5007 = vsel %vm59, %v5003, 0.0
    %5008 = vadd.xlane.f32.xlu0 %v5007
    %v5009 = vpop.xlane.xlu0 %5008
    %v5010 = vmul.f32 %v5006, %v66
    %v5011 = vmul.f32 %v5009, %v66
    %v5012 = vadd.f32 %v5010, 1e-12
    %v5013 = vadd.f32 %v5011, 1e-12
    %v5014 = vrsqrt.pop %v5012
    %v5015 = vrsqrt.pop %v5013
    %v5016 = vmul.f32 %v5000, %v5014
    %v5017 = vmul.f32 %v5001, %v5015
    %v5019 = vlaneseq
    %v5020 = vshrl.u32 %v5019, 7
    %v5021 = vsub.s32 0, %v5020
    %v5022 = vrot.slane %v4989, %v5021
    %v5024 = vmul.f32 %v5016, %v5022
    %v5025 = vmul.f32 %v5017, %v5022
    %v5027 = vlaneseq
    %v5028 = vshrl.u32 %v5027, 7
    %v5029 = vsub.s32 0, %v5028
    %v5030 = vrot.slane %v4991, %v5029
    %v5032 = vadd.f32 %v5024, %v5030
    %v5033 = vadd.f32 %v5025, %v5030
    %5034 = vst.msk [vmem:[#allocation2] sm:$0xff] %vm59, %v5032
    %5035 = vst.msk [vmem:[#allocation2 + $0x8] sm:$0xff] %vm59, %v5033
    // Predicated region
    $region66: #{wrapped_bert_forward.1} parent=1 // pred_check
      _
    $region67: #{wrapped_bert_forward.1} parent=1 // pred_check_branch
      %5037 = sbr.rel (0) target = $region69
    $region68: #{wrapped_bert_forward.1} parent=1 // pred_region
      %s5039 = ssub.s32 256, 256
      %5040 = vsyncadd [#allocation3], %s5039
      %s5041 = sshll.u32 [#allocation2], 4
      %s5042 = int_to_ptr.vmem [resolvable:$true] %s5041
      %5047 = dma.vmem_to_hbm [thread:$0]  %s5042, 256, %s16, [#allocation3], 128, 128, 8
    $region69: #{wrapped_bert_forward.1} parent=1 // pred_fallthru
      _
    // Predicated region
    $region70: #{wrapped_bert_forward.1} parent=1 // pred_check
      _
    $region71: #{wrapped_bert_forward.1} parent=1 // pred_check_branch
      %5049 = sbr.rel (0) target = $region73
    $region72: #{wrapped_bert_forward.1} parent=1 // pred_region
      %5050 = dma.done [#allocation3], 256
    $region73: #{wrapped_bert_forward.1} parent=1 // pred_fallthru
      _
    %5051 = vsyncpa [#allocation3], 1

</llo_original>
